<compile_context>
chip_gen: v5e
topology: v5e:2x2
jax: 0.10.0
libtpu: 0.0.40
codegen_flags: <defaults>
</compile_context>

<pallas_src>
import jax
import jax.numpy as jnp
from jax.experimental import pallas as pl
from jax.experimental.pallas import tpu as pltpu

NEG_SLOPE = 0.01  # PyTorch F.leaky_relu / nn.LeakyReLU default


def _lrelu(v):
    # Exact for 0 < slope < 1; mul+max (2 VALU ops) instead of cmp+mul+select.
    return jnp.maximum(v, NEG_SLOPE * v)


def _round_up(n, m):
    return ((n + m - 1) // m) * m


# ---------------------------------------------------------------------------
# Kernel (batch-on-lanes: every activation is [features, TB])
# ---------------------------------------------------------------------------

def _nvn_kernel(
    x_ref,                 # [5, TB]     f32
    w1, b1,                # [64, 5]     bf16, [64, 1]  f32  (block-diag encoders, layer 1)
    w2, b2,                # [256, 64]   bf16, [256, 1] f32  (block-diag encoders, layer 2)
    rw, rb,                # [4,256,256] bf16, [4,256,1] f32 (4x ResBlock256 inner Linear)
    pw1, pb1,              # [64, 256]   bf16, [64, 1]  f32  (post Linear(256,64))
    wo, bo,                # [64, 1]     f32,  [1, 1]   f32  (post Linear(64,1) as a column)
    out_ref,               # [1, TB]     f32  (lane-dense output)
):
    f32, bf16 = jnp.float32, jnp.bfloat16

    x = x_ref[...].astype(bf16)                                               # [5, TB]

    # Fused encoders: block-diagonal weights reproduce the two independent
    # branches exactly (no cross terms, no concatenate needed).
    h = _lrelu(jnp.dot(w1[...], x, preferred_element_type=f32) + b1[...])     # [64, TB]
    out1 = _lrelu(jnp.dot(w2[...], h.astype(bf16),
                          preferred_element_type=f32) + b2[...])              # [256, TB]

    # res_block: 4x ResBlock256 -> leaky_relu(x + Linear(x)).  Static unroll.
    r = out1
    for k in range(4):
        inner = jnp.dot(rw[k], r.astype(bf16), preferred_element_type=f32) + rb[k]
        r = _lrelu(r + inner)

    # post_block on (out1 + out2)
    s = out1 + r                                                              # [256, TB]
    p = _lrelu(jnp.dot(pw1[...], s.astype(bf16),
                       preferred_element_type=f32) + pb1[...])                # [64, TB]

    # Final Linear(64, 1): VPU multiply + sublane (XLU) reduction instead of a
    # wasted MXU pass with a single useful output row.
    y = jnp.sum(p * wo[...], axis=0, keepdims=True) + bo[...]                 # [1, TB]
    out_ref[...] = _lrelu(y)


def neural_vis_forward(x, packed_params, *, tb=2048):
    """x: [B, 5] float32.  packed_params: output of pack_params().

    tb: batch tile (lane-dense).  2048 is a good default on v6e/v7x; start at
    1024 on v5e.  For v7x prefer a tb that gives num_tiles >= 2 so the
    'parallel' grid axis can shard across both TensorCores.
    """
    B = x.shape[0]
    # Cap the tile for tiny batches (must stay a multiple of 128 for lanes).
    tb = min(tb, _round_up(max(B, 1), 128))
    num_tiles = pl.cdiv(B, tb)
    b_pad = num_tiles * tb

    # Batch-on-lanes layout: [5, b_pad] f32 (lane-dense input DMA).
    xt = jnp.zeros((5, b_pad), x.dtype).at[:, :B].set(x.T)

    x_spec = pl.BlockSpec((5, tb), lambda i: (0, i))

    # Constant index_maps -> weights DMA'd once, stay VMEM-resident.
    def _const_spec(p):
        return pl.BlockSpec(p.shape, lambda i, n=p.ndim: (0,) * n)

    w_specs = [_const_spec(p) for p in packed_params]
    out_spec = pl.BlockSpec((1, tb), lambda i: (0, i))

    # Advisory cost estimate for XLA scheduling.
    macs_per_row = 5 * 64 + 64 * 256 + 4 * 256 * 256 + 256 * 64 + 64
    flops = 2 * b_pad * macs_per_row
    bytes_accessed = (
        sum(int(p.size) * p.dtype.itemsize for p in packed_params)
        + b_pad * 5 * 4 + b_pad * 4
    )

    out = pl.pallas_call(
        _nvn_kernel,
        out_shape=jax.ShapeDtypeStruct((1, b_pad), jnp.float32),
        grid=(num_tiles,),
        in_specs=[x_spec] + w_specs,
        out_specs=out_spec,
        compiler_params=pltpu.CompilerParams(
            dimension_semantics=("parallel",),
            vmem_limit_bytes=48 * 1024 * 1024,
        ),
        cost_estimate=pl.CostEstimate(
            flops=flops, transcendentals=0, bytes_accessed=bytes_accessed),
    )(xt, *packed_params)

    return out[0, :B].reshape(B, 1)


# ---------------------------------------------------------------------------
# Parameter construction / packing
# ---------------------------------------------------------------------------

# (in_features, out_features) for every Linear, in forward order.
_LAYER_DIMS = [
    (3, 32), (32, 128),        # encoding3to64
    (2, 32), (32, 128),        # encoding2to64
    (256, 256), (256, 256),    # res_block: 4x ResBlock256 inner Linear
    (256, 256), (256, 256),
    (256, 64), (64, 1),        # post_block
]


def init_params(key):
    """PyTorch-style init: U(-1/sqrt(fan_in), 1/sqrt(fan_in)); W stored as [in, out]."""
    params = []
    for fan_in, fan_out in _LAYER_DIMS:
        key, kw, kb = jax.random.split(key, 3)
        bound = 1.0 / jnp.sqrt(jnp.float32(fan_in))
        w = jax.random.uniform(kw, (fan_in, fan_out), jnp.float32, -bound, bound)
        b = jax.random.uniform(kb, (1, fan_out), jnp.float32, -bound, bound)
        params.extend([w, b])
    return params


def pack_params(params):
    """Pack raw [in,out] params into the kernel layout.

    Batch-on-lanes kernel wants [out,in] weights (y = W @ x), block-diagonal
    encoders, bf16 matmul weights, column-vector biases, and the 4 ResBlock
    weights stacked into one array.
    """
    (e3w1, e3b1, e3w2, e3b2,
     e2w1, e2b1, e2w2, e2b2,
     rw1, rb1, rw2, rb2, rw3, rb3, rw4, rb4,
     pw1, pb1, pw2, pb2) = params
    bf16 = jnp.bfloat16

    w1 = jnp.zeros((64, 5), jnp.float32)
    w1 = w1.at[0:32, 0:3].set(e3w1.T).at[32:64, 3:5].set(e2w1.T)
    b1 = jnp.concatenate([e3b1, e2b1], axis=1).T                   # [64, 1]

    w2 = jnp.zeros((256, 64), jnp.float32)
    w2 = w2.at[0:128, 0:32].set(e3w2.T).at[128:256, 32:64].set(e2w2.T)
    b2 = jnp.concatenate([e3b2, e2b2], axis=1).T                   # [256, 1]

    rw = jnp.stack([rw1.T, rw2.T, rw3.T, rw4.T]).astype(bf16)      # [4, 256, 256]
    rb = jnp.stack([rb1.T, rb2.T, rb3.T, rb4.T])                   # [4, 256, 1]

    return [
        w1.astype(bf16), b1,
        w2.astype(bf16), b2,
        rw, rb,
        pw1.T.astype(bf16), pb1.T,                                 # [64,256], [64,1]
        pw2.astype(jnp.float32),                                   # [64, 1] column, f32 (VPU path)
        pb2.astype(jnp.float32),                                   # [1, 1]
    ]


# ---------------------------------------------------------------------------
# Plain-JAX reference (mirrors the kernel's bf16-matmul / f32-accumulate math)
# ---------------------------------------------------------------------------

def reference_forward(x, params):
    (e3w1, e3b1, e3w2, e3b2,
     e2w1, e2b1, e2w2, e2b2,
     rw1, rb1, rw2, rb2, rw3, rb3, rw4, rb4,
     pw1, pb1, pw2, pb2) = params
    bf16, f32 = jnp.bfloat16, jnp.float32

    def lin(a, w, b):
        return jnp.dot(a.astype(bf16), w.astype(bf16),
                       preferred_element_type=f32) + b

    origin, direction = x[:, 0:3], x[:, 3:5]
    o1 = _lrelu(lin(_lrelu(lin(origin, e3w1, e3b1)), e3w2, e3b2))
    o2 = _lrelu(lin(_lrelu(lin(direction, e2w1, e2b1)), e2w2, e2b2))
    out1 = jnp.concatenate([o1, o2], axis=1)
    r = out1
    for w, b in ((rw1, rb1), (rw2, rb2), (rw3, rb3), (rw4, rb4)):
        r = _lrelu(r + lin(r, w, b))
    s = out1 + r
    p = _lrelu(lin(s, pw1, pb1))
    y = jnp.dot(p, pw2, preferred_element_type=f32) + pb2          # final layer in f32
    return _lrelu(y)


if __name__ == "__main__":
    key = jax.random.PRNGKey(0)
    key, kx = jax.random.split(key)

    # Small demo shapes: B is not a multiple of the batch tile so padding and
    # multiple grid steps are exercised (tb=256 -> 2 tiles for B=300).
    B = 300
    x = jax.random.normal(kx, (B, 5), jnp.float32)

    raw_params = init_params(key)
    packed = pack_params(raw_params)

    y = neural_vis_forward(x, packed, tb=256)
    y = jax.block_until_ready(y)

    y_ref = reference_forward(x, raw_params)
    assert y.shape == (B, 1)
    max_err = float(jnp.max(jnp.abs(y - y_ref)))
    assert jnp.allclose(y, y_ref, atol=1e-2, rtol=1e-2), \
        f"kernel mismatch vs reference (max err {max_err})"

    print("KERNEL_OK")
</pallas_src>

<mosaic_0001>
module attributes {stable_mosaic.version = 11 : i64} {
  func.func @_nvn_kernel(%arg0: i32, %arg1: memref<5x256xf32, #tpu.memory_space<vmem>>, %arg2: memref<64x5xbf16, #tpu.memory_space<vmem>>, %arg3: memref<64x1xf32, #tpu.memory_space<vmem>>, %arg4: memref<256x64xbf16, #tpu.memory_space<vmem>>, %arg5: memref<256x1xf32, #tpu.memory_space<vmem>>, %arg6: memref<4x256x256xbf16, #tpu.memory_space<vmem>>, %arg7: memref<4x256x1xf32, #tpu.memory_space<vmem>>, %arg8: memref<64x256xbf16, #tpu.memory_space<vmem>>, %arg9: memref<64x1xf32, #tpu.memory_space<vmem>>, %arg10: memref<64x1xf32, #tpu.memory_space<vmem>>, %arg11: memref<1x1xf32, #tpu.memory_space<vmem>>, %arg12: memref<1x256xf32, #tpu.memory_space<vmem>>) attributes {dimension_semantics = [#tpu.dimension_semantics<parallel>], iteration_bounds = array<i64: 2>, scalar_prefetch = 0 : i64, scratch_operands = 0 : i64, tpu.core_type = #tpu.core_type<tc>, window_params = [{transform_indices = @transform_0, window_bounds = array<i64: 5, 256>}, {pipeline_mode = #tpu.pipeline_mode<synchronous>, transform_indices = @transform_1, window_bounds = array<i64: 64, 5>}, {pipeline_mode = #tpu.pipeline_mode<synchronous>, transform_indices = @transform_2, window_bounds = array<i64: 64, 1>}, {pipeline_mode = #tpu.pipeline_mode<synchronous>, transform_indices = @transform_3, window_bounds = array<i64: 256, 64>}, {pipeline_mode = #tpu.pipeline_mode<synchronous>, transform_indices = @transform_4, window_bounds = array<i64: 256, 1>}, {pipeline_mode = #tpu.pipeline_mode<synchronous>, transform_indices = @transform_5, window_bounds = array<i64: 4, 256, 256>}, {pipeline_mode = #tpu.pipeline_mode<synchronous>, transform_indices = @transform_6, window_bounds = array<i64: 4, 256, 1>}, {pipeline_mode = #tpu.pipeline_mode<synchronous>, transform_indices = @transform_7, window_bounds = array<i64: 64, 256>}, {pipeline_mode = #tpu.pipeline_mode<synchronous>, transform_indices = @transform_8, window_bounds = array<i64: 64, 1>}, {pipeline_mode = #tpu.pipeline_mode<synchronous>, transform_indices = @transform_9, window_bounds = array<i64: 64, 1>}, {pipeline_mode = #tpu.pipeline_mode<synchronous>, transform_indices = @transform_10, window_bounds = array<i64: 1, 1>}, {transform_indices = @transform_11, window_bounds = array<i64: 1, 256>}]} {
    %c0 = arith.constant 0 : index
    %c0_0 = arith.constant 0 : index
    %0 = vector.load %arg1[%c0, %c0_0] : memref<5x256xf32, #tpu.memory_space<vmem>>, vector<5x256xf32>
    %1 = arith.truncf %0 : vector<5x256xf32> to vector<5x256xbf16>
    %c0_1 = arith.constant 0 : index
    %c0_2 = arith.constant 0 : index
    %2 = vector.load %arg2[%c0_1, %c0_2] : memref<64x5xbf16, #tpu.memory_space<vmem>>, vector<64x5xbf16>
    %cst = arith.constant dense<0.000000e+00> : vector<64x256xf32>
    %3 = tpu.matmul %2, %1, %cst {dimension_numbers = #tpu.dot_dimension_numbers<[1], [0], [0], [1], [0, 0, 1, 1], [], []>} : vector<64x5xbf16>, vector<5x256xbf16>, vector<64x256xf32> -> vector<64x256xf32>
    %c0_3 = arith.constant 0 : index
    %c0_4 = arith.constant 0 : index
    %4 = vector.load %arg3[%c0_3, %c0_4] : memref<64x1xf32, #tpu.memory_space<vmem>>, vector<64x1xf32>
    %5 = vector.broadcast %4 : vector<64x1xf32> to vector<64x256xf32>
    %6 = arith.addf %3, %5 : vector<64x256xf32>
    %cst_5 = arith.constant 0.00999999977 : f32
    %7 = vector.broadcast %cst_5 : f32 to vector<64x256xf32>
    %8 = arith.mulf %7, %6 : vector<64x256xf32>
    %9 = arith.maximumf %6, %8 : vector<64x256xf32>
    %c0_6 = arith.constant 0 : index
    %c0_7 = arith.constant 0 : index
    %10 = vector.load %arg4[%c0_6, %c0_7] : memref<256x64xbf16, #tpu.memory_space<vmem>>, vector<256x64xbf16>
    %11 = arith.truncf %9 : vector<64x256xf32> to vector<64x256xbf16>
    %cst_8 = arith.constant dense<0.000000e+00> : vector<256x256xf32>
    %12 = tpu.matmul %10, %11, %cst_8 {dimension_numbers = #tpu.dot_dimension_numbers<[1], [0], [0], [1], [0, 0, 1, 1], [], []>} : vector<256x64xbf16>, vector<64x256xbf16>, vector<256x256xf32> -> vector<256x256xf32>
    %c0_9 = arith.constant 0 : index
    %c0_10 = arith.constant 0 : index
    %13 = vector.load %arg5[%c0_9, %c0_10] : memref<256x1xf32, #tpu.memory_space<vmem>>, vector<256x1xf32>
    %14 = vector.broadcast %13 : vector<256x1xf32> to vector<256x256xf32>
    %15 = arith.addf %12, %14 : vector<256x256xf32>
    %cst_11 = arith.constant 0.00999999977 : f32
    %16 = vector.broadcast %cst_11 : f32 to vector<256x256xf32>
    %17 = arith.mulf %16, %15 : vector<256x256xf32>
    %18 = arith.maximumf %15, %17 : vector<256x256xf32>
    %c0_12 = arith.constant 0 : index
    %c0_13 = arith.constant 0 : index
    %c0_14 = arith.constant 0 : index
    %19 = vector.load %arg6[%c0_12, %c0_13, %c0_14] : memref<4x256x256xbf16, #tpu.memory_space<vmem>>, vector<1x256x256xbf16>
    %20 = vector.shape_cast %19 : vector<1x256x256xbf16> to vector<256x256xbf16>
    %21 = arith.truncf %18 : vector<256x256xf32> to vector<256x256xbf16>
    %cst_15 = arith.constant dense<0.000000e+00> : vector<256x256xf32>
    %22 = tpu.matmul %20, %21, %cst_15 {dimension_numbers = #tpu.dot_dimension_numbers<[1], [0], [0], [1], [0, 0, 1, 1], [], []>} : vector<256x256xbf16>, vector<256x256xbf16>, vector<256x256xf32> -> vector<256x256xf32>
    %c0_16 = arith.constant 0 : index
    %c0_17 = arith.constant 0 : index
    %c0_18 = arith.constant 0 : index
    %23 = vector.load %arg7[%c0_16, %c0_17, %c0_18] : memref<4x256x1xf32, #tpu.memory_space<vmem>>, vector<1x256x1xf32>
    %24 = vector.shape_cast %23 : vector<1x256x1xf32> to vector<256x1xf32>
    %25 = vector.broadcast %24 : vector<256x1xf32> to vector<256x256xf32>
    %26 = arith.addf %22, %25 : vector<256x256xf32>
    %27 = arith.addf %18, %26 : vector<256x256xf32>
    %cst_19 = arith.constant 0.00999999977 : f32
    %28 = vector.broadcast %cst_19 : f32 to vector<256x256xf32>
    %29 = arith.mulf %28, %27 : vector<256x256xf32>
    %30 = arith.maximumf %27, %29 : vector<256x256xf32>
    %c1 = arith.constant 1 : index
    %c0_20 = arith.constant 0 : index
    %c0_21 = arith.constant 0 : index
    %31 = vector.load %arg6[%c1, %c0_20, %c0_21] : memref<4x256x256xbf16, #tpu.memory_space<vmem>>, vector<1x256x256xbf16>
    %32 = vector.shape_cast %31 : vector<1x256x256xbf16> to vector<256x256xbf16>
    %33 = arith.truncf %30 : vector<256x256xf32> to vector<256x256xbf16>
    %cst_22 = arith.constant dense<0.000000e+00> : vector<256x256xf32>
    %34 = tpu.matmul %32, %33, %cst_22 {dimension_numbers = #tpu.dot_dimension_numbers<[1], [0], [0], [1], [0, 0, 1, 1], [], []>} : vector<256x256xbf16>, vector<256x256xbf16>, vector<256x256xf32> -> vector<256x256xf32>
    %c1_23 = arith.constant 1 : index
    %c0_24 = arith.constant 0 : index
    %c0_25 = arith.constant 0 : index
    %35 = vector.load %arg7[%c1_23, %c0_24, %c0_25] : memref<4x256x1xf32, #tpu.memory_space<vmem>>, vector<1x256x1xf32>
    %36 = vector.shape_cast %35 : vector<1x256x1xf32> to vector<256x1xf32>
    %37 = vector.broadcast %36 : vector<256x1xf32> to vector<256x256xf32>
    %38 = arith.addf %34, %37 : vector<256x256xf32>
    %39 = arith.addf %30, %38 : vector<256x256xf32>
    %cst_26 = arith.constant 0.00999999977 : f32
    %40 = vector.broadcast %cst_26 : f32 to vector<256x256xf32>
    %41 = arith.mulf %40, %39 : vector<256x256xf32>
    %42 = arith.maximumf %39, %41 : vector<256x256xf32>
    %c2 = arith.constant 2 : index
    %c0_27 = arith.constant 0 : index
    %c0_28 = arith.constant 0 : index
    %43 = vector.load %arg6[%c2, %c0_27, %c0_28] : memref<4x256x256xbf16, #tpu.memory_space<vmem>>, vector<1x256x256xbf16>
    %44 = vector.shape_cast %43 : vector<1x256x256xbf16> to vector<256x256xbf16>
    %45 = arith.truncf %42 : vector<256x256xf32> to vector<256x256xbf16>
    %cst_29 = arith.constant dense<0.000000e+00> : vector<256x256xf32>
    %46 = tpu.matmul %44, %45, %cst_29 {dimension_numbers = #tpu.dot_dimension_numbers<[1], [0], [0], [1], [0, 0, 1, 1], [], []>} : vector<256x256xbf16>, vector<256x256xbf16>, vector<256x256xf32> -> vector<256x256xf32>
    %c2_30 = arith.constant 2 : index
    %c0_31 = arith.constant 0 : index
    %c0_32 = arith.constant 0 : index
    %47 = vector.load %arg7[%c2_30, %c0_31, %c0_32] : memref<4x256x1xf32, #tpu.memory_space<vmem>>, vector<1x256x1xf32>
    %48 = vector.shape_cast %47 : vector<1x256x1xf32> to vector<256x1xf32>
    %49 = vector.broadcast %48 : vector<256x1xf32> to vector<256x256xf32>
    %50 = arith.addf %46, %49 : vector<256x256xf32>
    %51 = arith.addf %42, %50 : vector<256x256xf32>
    %cst_33 = arith.constant 0.00999999977 : f32
    %52 = vector.broadcast %cst_33 : f32 to vector<256x256xf32>
    %53 = arith.mulf %52, %51 : vector<256x256xf32>
    %54 = arith.maximumf %51, %53 : vector<256x256xf32>
    %c3 = arith.constant 3 : index
    %c0_34 = arith.constant 0 : index
    %c0_35 = arith.constant 0 : index
    %55 = vector.load %arg6[%c3, %c0_34, %c0_35] : memref<4x256x256xbf16, #tpu.memory_space<vmem>>, vector<1x256x256xbf16>
    %56 = vector.shape_cast %55 : vector<1x256x256xbf16> to vector<256x256xbf16>
    %57 = arith.truncf %54 : vector<256x256xf32> to vector<256x256xbf16>
    %cst_36 = arith.constant dense<0.000000e+00> : vector<256x256xf32>
    %58 = tpu.matmul %56, %57, %cst_36 {dimension_numbers = #tpu.dot_dimension_numbers<[1], [0], [0], [1], [0, 0, 1, 1], [], []>} : vector<256x256xbf16>, vector<256x256xbf16>, vector<256x256xf32> -> vector<256x256xf32>
    %c3_37 = arith.constant 3 : index
    %c0_38 = arith.constant 0 : index
    %c0_39 = arith.constant 0 : index
    %59 = vector.load %arg7[%c3_37, %c0_38, %c0_39] : memref<4x256x1xf32, #tpu.memory_space<vmem>>, vector<1x256x1xf32>
    %60 = vector.shape_cast %59 : vector<1x256x1xf32> to vector<256x1xf32>
    %61 = vector.broadcast %60 : vector<256x1xf32> to vector<256x256xf32>
    %62 = arith.addf %58, %61 : vector<256x256xf32>
    %63 = arith.addf %54, %62 : vector<256x256xf32>
    %cst_40 = arith.constant 0.00999999977 : f32
    %64 = vector.broadcast %cst_40 : f32 to vector<256x256xf32>
    %65 = arith.mulf %64, %63 : vector<256x256xf32>
    %66 = arith.maximumf %63, %65 : vector<256x256xf32>
    %67 = arith.addf %18, %66 : vector<256x256xf32>
    %c0_41 = arith.constant 0 : index
    %c0_42 = arith.constant 0 : index
    %68 = vector.load %arg8[%c0_41, %c0_42] : memref<64x256xbf16, #tpu.memory_space<vmem>>, vector<64x256xbf16>
    %69 = arith.truncf %67 : vector<256x256xf32> to vector<256x256xbf16>
    %cst_43 = arith.constant dense<0.000000e+00> : vector<64x256xf32>
    %70 = tpu.matmul %68, %69, %cst_43 {dimension_numbers = #tpu.dot_dimension_numbers<[1], [0], [0], [1], [0, 0, 1, 1], [], []>} : vector<64x256xbf16>, vector<256x256xbf16>, vector<64x256xf32> -> vector<64x256xf32>
    %c0_44 = arith.constant 0 : index
    %c0_45 = arith.constant 0 : index
    %71 = vector.load %arg9[%c0_44, %c0_45] : memref<64x1xf32, #tpu.memory_space<vmem>>, vector<64x1xf32>
    %72 = vector.broadcast %71 : vector<64x1xf32> to vector<64x256xf32>
    %73 = arith.addf %70, %72 : vector<64x256xf32>
    %cst_46 = arith.constant 0.00999999977 : f32
    %74 = vector.broadcast %cst_46 : f32 to vector<64x256xf32>
    %75 = arith.mulf %74, %73 : vector<64x256xf32>
    %76 = arith.maximumf %73, %75 : vector<64x256xf32>
    %c0_47 = arith.constant 0 : index
    %c0_48 = arith.constant 0 : index
    %77 = vector.load %arg10[%c0_47, %c0_48] : memref<64x1xf32, #tpu.memory_space<vmem>>, vector<64x1xf32>
    %78 = vector.broadcast %77 : vector<64x1xf32> to vector<64x256xf32>
    %79 = arith.mulf %76, %78 : vector<64x256xf32>
    %cst_49 = arith.constant dense<0.000000e+00> : vector<256xf32>
    %80 = vector.multi_reduction <add>, %79, %cst_49 [0] : vector<64x256xf32> to vector<256xf32>
    %81 = vector.shape_cast %80 : vector<256xf32> to vector<1x256xf32>
    %c0_50 = arith.constant 0 : index
    %c0_51 = arith.constant 0 : index
    %82 = vector.load %arg11[%c0_50, %c0_51] : memref<1x1xf32, #tpu.memory_space<vmem>>, vector<1x1xf32>
    %83 = vector.broadcast %82 : vector<1x1xf32> to vector<1x256xf32>
    %84 = arith.addf %81, %83 : vector<1x256xf32>
    %cst_52 = arith.constant 0.00999999977 : f32
    %85 = vector.broadcast %cst_52 : f32 to vector<1x256xf32>
    %86 = arith.mulf %85, %84 : vector<1x256xf32>
    %87 = arith.maximumf %84, %86 : vector<1x256xf32>
    %c0_53 = arith.constant 0 : index
    %c0_54 = arith.constant 0 : index
    %88 = vector.load %arg12[%c0_53, %c0_54] : memref<1x256xf32, #tpu.memory_space<vmem>>, vector<1x256xf32>
    tpu.vector_store %arg12[%c0_53, %c0_54], %87 {strides = array<i32>} : memref<1x256xf32, #tpu.memory_space<vmem>>, vector<1x256xf32>,
    return
  }
  func.func @transform_0(%arg0: i32) -> (i32, i32) {
    %c0_i32 = arith.constant 0 : i32
    %c0_i32_0 = arith.constant 0 : i32
    return %c0_i32, %arg0 : i32, i32
  }
  func.func @transform_1(%arg0: i32) -> (i32, i32) {
    %c0_i32 = arith.constant 0 : i32
    %c0_i32_0 = arith.constant 0 : i32
    %c0_i32_1 = arith.constant 0 : i32
    return %c0_i32, %c0_i32_0 : i32, i32
  }
  func.func @transform_2(%arg0: i32) -> (i32, i32) {
    %c0_i32 = arith.constant 0 : i32
    %c0_i32_0 = arith.constant 0 : i32
    %c0_i32_1 = arith.constant 0 : i32
    return %c0_i32, %c0_i32_0 : i32, i32
  }
  func.func @transform_3(%arg0: i32) -> (i32, i32) {
    %c0_i32 = arith.constant 0 : i32
    %c0_i32_0 = arith.constant 0 : i32
    %c0_i32_1 = arith.constant 0 : i32
    return %c0_i32, %c0_i32_0 : i32, i32
  }
  func.func @transform_4(%arg0: i32) -> (i32, i32) {
    %c0_i32 = arith.constant 0 : i32
    %c0_i32_0 = arith.constant 0 : i32
    %c0_i32_1 = arith.constant 0 : i32
    return %c0_i32, %c0_i32_0 : i32, i32
  }
  func.func @transform_5(%arg0: i32) -> (i32, i32, i32) {
    %c0_i32 = arith.constant 0 : i32
    %c0_i32_0 = arith.constant 0 : i32
    %c0_i32_1 = arith.constant 0 : i32
    %c0_i32_2 = arith.constant 0 : i32
    return %c0_i32, %c0_i32_0, %c0_i32_1 : i32, i32, i32
  }
  func.func @transform_6(%arg0: i32) -> (i32, i32, i32) {
    %c0_i32 = arith.constant 0 : i32
    %c0_i32_0 = arith.constant 0 : i32
    %c0_i32_1 = arith.constant 0 : i32
    %c0_i32_2 = arith.constant 0 : i32
    return %c0_i32, %c0_i32_0, %c0_i32_1 : i32, i32, i32
  }
  func.func @transform_7(%arg0: i32) -> (i32, i32) {
    %c0_i32 = arith.constant 0 : i32
    %c0_i32_0 = arith.constant 0 : i32
    %c0_i32_1 = arith.constant 0 : i32
    return %c0_i32, %c0_i32_0 : i32, i32
  }
  func.func @transform_8(%arg0: i32) -> (i32, i32) {
    %c0_i32 = arith.constant 0 : i32
    %c0_i32_0 = arith.constant 0 : i32
    %c0_i32_1 = arith.constant 0 : i32
    return %c0_i32, %c0_i32_0 : i32, i32
  }
  func.func @transform_9(%arg0: i32) -> (i32, i32) {
    %c0_i32 = arith.constant 0 : i32
    %c0_i32_0 = arith.constant 0 : i32
    %c0_i32_1 = arith.constant 0 : i32
    return %c0_i32, %c0_i32_0 : i32, i32
  }
  func.func @transform_10(%arg0: i32) -> (i32, i32) {
    %c0_i32 = arith.constant 0 : i32
    %c0_i32_0 = arith.constant 0 : i32
    %c0_i32_1 = arith.constant 0 : i32
    return %c0_i32, %c0_i32_0 : i32, i32
  }
  func.func @transform_11(%arg0: i32) -> (i32, i32) {
    %c0_i32 = arith.constant 0 : i32
    %c0_i32_0 = arith.constant 0 : i32
    return %c0_i32, %arg0 : i32, i32
  }
}

</mosaic_0001>

<llo_original>
// kernel: tpu_custom_call.1
$region0: #{tpu_custom_call.1}
  #allocation0 [shape = 'u32[]', space=smem, size = 0x4, offset = 0x4, fixed_abs, tag = 'smem constant byte address 0x4 - core index']
  #allocation1 [shape = 'u32[72,128]{1,0:T(1,128)}', space=vmem, size = 0x9000, scoped, tag = 'internal scratch']
  #allocation2 [shape = 'f32[1,1]{1,0:T(1,128)S(1)}', space=vmem, size = 0x200, scoped, tag = 'scoped memory for tpu_custom_call.1']
  %s0 = inlined_call_operand.vmem [shape: f32[5,512], index: 0, kind: input, shape index: {}]
  %s1 = inlined_call_operand.vmem [shape: bf16[64,5], index: 1, kind: input, shape index: {}]
  %s2 = inlined_call_operand.vmem [shape: f32[64,1], index: 2, kind: input, shape index: {}]
  %s3 = inlined_call_operand.vmem [shape: bf16[256,64], index: 3, kind: input, shape index: {}]
  %s4 = inlined_call_operand.vmem [shape: f32[256,1], index: 4, kind: input, shape index: {}]
  %s5 = inlined_call_operand.vmem [shape: bf16[4,256,256], index: 5, kind: input, shape index: {}]
  %s6 = inlined_call_operand.vmem [shape: f32[4,256,1], index: 6, kind: input, shape index: {}]
  %s7 = inlined_call_operand.vmem [shape: bf16[64,256], index: 7, kind: input, shape index: {}]
  %s8 = inlined_call_operand.vmem [shape: f32[64,1], index: 8, kind: input, shape index: {}]
  %s9 = inlined_call_operand.vmem [shape: f32[64,1], index: 9, kind: input, shape index: {}]
  %s10 = inlined_call_operand.<no memory space> [shape: f32[1,1], index: 10, kind: input, shape index: {}]
  %s11 = inlined_call_operand.hbm [shape: f32[1,512], index: 11, kind: output, shape index: {}]
  %s12 = sld [smem:[#allocation0]]
  $region77: #{tpu_custom_call.1} parent=0
    _
  %s14 = ssub.s32 1, %s12
  %s15 = scalar_select 0, %s14, %s12
  %v16 = vstv %s10
  %17 = vst [vmem:[#allocation2] sm:$0x1] %v16
  $region1: #{tpu_custom_call.1} parent=0
    #allocation3 [shape = 'u8[2048]{0}', space=vmem, size = 0x800, scoped, tag = 'output window, operand 0']
    #allocation4 [shape = 's32[2]{0}', space=sflag, size = 0x8, scoped, tag = 'scoped memory for tpu_custom_call.1']
    %18 = vsyncpa [#allocation4], 0
    %s19 = scalar_lea.sflag [#allocation4], 1
    %20 = vsyncpa %s19, 0
    loop: start=0, step=1, limit=4
    $region2: #{tpu_custom_call.1} parent=1 // loop_pre_header
      _
    $region3: #{tpu_custom_call.1} parent=1 // loop_header
      %s22 = sphi 0, %s26
      %p23 = scmp.ge.s32.totalorder %s22, 4
      %s32 = sphi 0, %s34
      %s35 = sphi 0, %s32
      %s36 = sphi 0, %s35
      %s52 = sphi 0, %s36
      %s56 = sphi 0, %s56
      %s58 = sphi 0, %s56
      %s59 = sphi 0, %s58
      %s73 = sphi 0, %s59
      %s77 = sphi 0, %s77
      %s79 = sphi 0, %s77
      %s80 = sphi 0, %s79
      %s94 = sphi 0, %s80
      %s98 = sphi 0, %s98
      %s100 = sphi 0, %s98
      %s101 = sphi 0, %s100
      %s115 = sphi 0, %s101
      %s119 = sphi 0, %s119
      %s121 = sphi 0, %s119
      %s122 = sphi 0, %s121
      %s136 = sphi 0, %s122
      %s140 = sphi 0, %s140
      %s142 = sphi 0, %s140
      %s143 = sphi 0, %s142
      %s157 = sphi 0, %s143
      %s161 = sphi 0, %s161
      %s163 = sphi 0, %s161
      %s164 = sphi 0, %s163
      %s178 = sphi 0, %s164
      %s182 = sphi 0, %s182
      %s184 = sphi 0, %s182
      %s185 = sphi 0, %s184
      %s199 = sphi 0, %s185
      %s203 = sphi 0, %s203
      %s205 = sphi 0, %s203
      %s206 = sphi 0, %s205
      %s220 = sphi 0, %s206
      %s224 = sphi 0, %s224
      %s226 = sphi 0, %s224
      %s227 = sphi 0, %s226
      %s241 = sphi 0, %s227
      %s245 = sphi 0, %s245
      %s247 = sphi 0, %s245
      %s248 = sphi 0, %s247
      %s262 = sphi 0, %s248
      %s268 = sphi 0, %s270
      %s271 = sphi 0, %s268
      %s272 = sphi 0, %s271
      %s288 = sphi 0, %s272
    $region4: #{tpu_custom_call.1} parent=1 // loop_header_branch
      %25 = sbr.rel (%p23) target = $region8
    $region5: #{tpu_custom_call.1} parent=1 // loop_body
      %s27 = ssub.s32 %s22, 1
      %s28 = ssub.s32 %s22, 2
      %s29 = sadd.s32 %s22, 1
      %s30 = ssub.s32 %s22, %s29
      %p31 = scmp.eq.s32.totalorder %s30, 0
      %s33 = sadd.s32 %s32, 1
      %s34 = scalar_select %p31, %s32, %s33
      %p37 = pneg %p31
      %p38 = scmp.eq.s32.totalorder %s22, 1
      %p39 = por %p37, %p38
      %p40 = scmp.ne.s32.totalorder %s32, %s35
      %p41 = scmp.eq.s32.totalorder %s22, 0
      %p42 = por %p40, %p41
      %p43 = scmp.ne.s32.totalorder %s32, %s35
      %p44 = scmp.eq.s32.totalorder %s27, 1
      %p45 = por %p43, %p44
      %p46 = scmp.ne.s32.totalorder %s35, %s36
      %p47 = scmp.eq.s32.totalorder %s27, 0
      %p48 = por %p46, %p47
      %p49 = scmp.ne.s32.totalorder %s35, %s36
      %p50 = scmp.eq.s32.totalorder %s28, 1
      %p51 = por %p49, %p50
      %p53 = scmp.ne.s32.totalorder %s36, %s52
      %p54 = scmp.eq.s32.totalorder %s28, 0
      %p55 = por %p53, %p54
      %s57 = sadd.s32 %s56, 1
      %p60 = scmp.eq.s32.totalorder %s22, 1
      %p61 = scmp.ne.s32.totalorder %s56, %s58
      %p62 = scmp.eq.s32.totalorder %s22, 0
      %p63 = por %p61, %p62
      %p64 = scmp.ne.s32.totalorder %s56, %s58
      %p65 = scmp.eq.s32.totalorder %s27, 1
      %p66 = por %p64, %p65
      %p67 = scmp.ne.s32.totalorder %s58, %s59
      %p68 = scmp.eq.s32.totalorder %s27, 0
      %p69 = por %p67, %p68
      %p70 = scmp.ne.s32.totalorder %s58, %s59
      %p71 = scmp.eq.s32.totalorder %s28, 1
      %p72 = por %p70, %p71
      %p74 = scmp.ne.s32.totalorder %s59, %s73
      %p75 = scmp.eq.s32.totalorder %s28, 0
      %p76 = por %p74, %p75
      %s78 = sadd.s32 %s77, 1
      %p81 = scmp.eq.s32.totalorder %s22, 1
      %p82 = scmp.ne.s32.totalorder %s77, %s79
      %p83 = scmp.eq.s32.totalorder %s22, 0
      %p84 = por %p82, %p83
      %p85 = scmp.ne.s32.totalorder %s77, %s79
      %p86 = scmp.eq.s32.totalorder %s27, 1
      %p87 = por %p85, %p86
      %p88 = scmp.ne.s32.totalorder %s79, %s80
      %p89 = scmp.eq.s32.totalorder %s27, 0
      %p90 = por %p88, %p89
      %p91 = scmp.ne.s32.totalorder %s79, %s80
      %p92 = scmp.eq.s32.totalorder %s28, 1
      %p93 = por %p91, %p92
      %p95 = scmp.ne.s32.totalorder %s80, %s94
      %p96 = scmp.eq.s32.totalorder %s28, 0
      %p97 = por %p95, %p96
      %s99 = sadd.s32 %s98, 1
      %p102 = scmp.eq.s32.totalorder %s22, 1
      %p103 = scmp.ne.s32.totalorder %s98, %s100
      %p104 = scmp.eq.s32.totalorder %s22, 0
      %p105 = por %p103, %p104
      %p106 = scmp.ne.s32.totalorder %s98, %s100
      %p107 = scmp.eq.s32.totalorder %s27, 1
      %p108 = por %p106, %p107
      %p109 = scmp.ne.s32.totalorder %s100, %s101
      %p110 = scmp.eq.s32.totalorder %s27, 0
      %p111 = por %p109, %p110
      %p112 = scmp.ne.s32.totalorder %s100, %s101
      %p113 = scmp.eq.s32.totalorder %s28, 1
      %p114 = por %p112, %p113
      %p116 = scmp.ne.s32.totalorder %s101, %s115
      %p117 = scmp.eq.s32.totalorder %s28, 0
      %p118 = por %p116, %p117
      %s120 = sadd.s32 %s119, 1
      %p123 = scmp.eq.s32.totalorder %s22, 1
      %p124 = scmp.ne.s32.totalorder %s119, %s121
      %p125 = scmp.eq.s32.totalorder %s22, 0
      %p126 = por %p124, %p125
      %p127 = scmp.ne.s32.totalorder %s119, %s121
      %p128 = scmp.eq.s32.totalorder %s27, 1
      %p129 = por %p127, %p128
      %p130 = scmp.ne.s32.totalorder %s121, %s122
      %p131 = scmp.eq.s32.totalorder %s27, 0
      %p132 = por %p130, %p131
      %p133 = scmp.ne.s32.totalorder %s121, %s122
      %p134 = scmp.eq.s32.totalorder %s28, 1
      %p135 = por %p133, %p134
      %p137 = scmp.ne.s32.totalorder %s122, %s136
      %p138 = scmp.eq.s32.totalorder %s28, 0
      %p139 = por %p137, %p138
      %s141 = sadd.s32 %s140, 1
      %p144 = scmp.eq.s32.totalorder %s22, 1
      %p145 = scmp.ne.s32.totalorder %s140, %s142
      %p146 = scmp.eq.s32.totalorder %s22, 0
      %p147 = por %p145, %p146
      %p148 = scmp.ne.s32.totalorder %s140, %s142
      %p149 = scmp.eq.s32.totalorder %s27, 1
      %p150 = por %p148, %p149
      %p151 = scmp.ne.s32.totalorder %s142, %s143
      %p152 = scmp.eq.s32.totalorder %s27, 0
      %p153 = por %p151, %p152
      %p154 = scmp.ne.s32.totalorder %s142, %s143
      %p155 = scmp.eq.s32.totalorder %s28, 1
      %p156 = por %p154, %p155
      %p158 = scmp.ne.s32.totalorder %s143, %s157
      %p159 = scmp.eq.s32.totalorder %s28, 0
      %p160 = por %p158, %p159
      %s162 = sadd.s32 %s161, 1
      %p165 = scmp.eq.s32.totalorder %s22, 1
      %p166 = scmp.ne.s32.totalorder %s161, %s163
      %p167 = scmp.eq.s32.totalorder %s22, 0
      %p168 = por %p166, %p167
      %p169 = scmp.ne.s32.totalorder %s161, %s163
      %p170 = scmp.eq.s32.totalorder %s27, 1
      %p171 = por %p169, %p170
      %p172 = scmp.ne.s32.totalorder %s163, %s164
      %p173 = scmp.eq.s32.totalorder %s27, 0
      %p174 = por %p172, %p173
      %p175 = scmp.ne.s32.totalorder %s163, %s164
      %p176 = scmp.eq.s32.totalorder %s28, 1
      %p177 = por %p175, %p176
      %p179 = scmp.ne.s32.totalorder %s164, %s178
      %p180 = scmp.eq.s32.totalorder %s28, 0
      %p181 = por %p179, %p180
      %s183 = sadd.s32 %s182, 1
      %p186 = scmp.eq.s32.totalorder %s22, 1
      %p187 = scmp.ne.s32.totalorder %s182, %s184
      %p188 = scmp.eq.s32.totalorder %s22, 0
      %p189 = por %p187, %p188
      %p190 = scmp.ne.s32.totalorder %s182, %s184
      %p191 = scmp.eq.s32.totalorder %s27, 1
      %p192 = por %p190, %p191
      %p193 = scmp.ne.s32.totalorder %s184, %s185
      %p194 = scmp.eq.s32.totalorder %s27, 0
      %p195 = por %p193, %p194
      %p196 = scmp.ne.s32.totalorder %s184, %s185
      %p197 = scmp.eq.s32.totalorder %s28, 1
      %p198 = por %p196, %p197
      %p200 = scmp.ne.s32.totalorder %s185, %s199
      %p201 = scmp.eq.s32.totalorder %s28, 0
      %p202 = por %p200, %p201
      %s204 = sadd.s32 %s203, 1
      %p207 = scmp.eq.s32.totalorder %s22, 1
      %p208 = scmp.ne.s32.totalorder %s203, %s205
      %p209 = scmp.eq.s32.totalorder %s22, 0
      %p210 = por %p208, %p209
      %p211 = scmp.ne.s32.totalorder %s203, %s205
      %p212 = scmp.eq.s32.totalorder %s27, 1
      %p213 = por %p211, %p212
      %p214 = scmp.ne.s32.totalorder %s205, %s206
      %p215 = scmp.eq.s32.totalorder %s27, 0
      %p216 = por %p214, %p215
      %p217 = scmp.ne.s32.totalorder %s205, %s206
      %p218 = scmp.eq.s32.totalorder %s28, 1
      %p219 = por %p217, %p218
      %p221 = scmp.ne.s32.totalorder %s206, %s220
      %p222 = scmp.eq.s32.totalorder %s28, 0
      %p223 = por %p221, %p222
      %s225 = sadd.s32 %s224, 1
      %p228 = scmp.eq.s32.totalorder %s22, 1
      %p229 = scmp.ne.s32.totalorder %s224, %s226
      %p230 = scmp.eq.s32.totalorder %s22, 0
      %p231 = por %p229, %p230
      %p232 = scmp.ne.s32.totalorder %s224, %s226
      %p233 = scmp.eq.s32.totalorder %s27, 1
      %p234 = por %p232, %p233
      %p235 = scmp.ne.s32.totalorder %s226, %s227
      %p236 = scmp.eq.s32.totalorder %s27, 0
      %p237 = por %p235, %p236
      %p238 = scmp.ne.s32.totalorder %s226, %s227
      %p239 = scmp.eq.s32.totalorder %s28, 1
      %p240 = por %p238, %p239
      %p242 = scmp.ne.s32.totalorder %s227, %s241
      %p243 = scmp.eq.s32.totalorder %s28, 0
      %p244 = por %p242, %p243
      %s246 = sadd.s32 %s245, 1
      %p249 = scmp.eq.s32.totalorder %s22, 1
      %p250 = scmp.ne.s32.totalorder %s245, %s247
      %p251 = scmp.eq.s32.totalorder %s22, 0
      %p252 = por %p250, %p251
      %p253 = scmp.ne.s32.totalorder %s245, %s247
      %p254 = scmp.eq.s32.totalorder %s27, 1
      %p255 = por %p253, %p254
      %p256 = scmp.ne.s32.totalorder %s247, %s248
      %p257 = scmp.eq.s32.totalorder %s27, 0
      %p258 = por %p256, %p257
      %p259 = scmp.ne.s32.totalorder %s247, %s248
      %p260 = scmp.eq.s32.totalorder %s28, 1
      %p261 = por %p259, %p260
      %p263 = scmp.ne.s32.totalorder %s248, %s262
      %p264 = scmp.eq.s32.totalorder %s28, 0
      %p265 = por %p263, %p264
      %s266 = ssub.s32 %s22, %s29
      %p267 = scmp.eq.s32.totalorder %s266, 0
      %s269 = sadd.s32 %s268, 1
      %s270 = scalar_select %p267, %s268, %s269
      %p273 = pneg %p267
      %p274 = scmp.eq.s32.totalorder %s22, 1
      %p275 = por %p273, %p274
      %p276 = scmp.ne.s32.totalorder %s268, %s271
      %p277 = scmp.eq.s32.totalorder %s22, 0
      %p278 = por %p276, %p277
      %p279 = scmp.ne.s32.totalorder %s268, %s271
      %p280 = scmp.eq.s32.totalorder %s27, 1
      %p281 = por %p279, %p280
      %p282 = scmp.ne.s32.totalorder %s271, %s272
      %p283 = scmp.eq.s32.totalorder %s27, 0
      %p284 = por %p282, %p283
      %p285 = scmp.ne.s32.totalorder %s271, %s272
      %p286 = scmp.eq.s32.totalorder %s28, 1
      %p287 = por %p285, %p286
      %p289 = scmp.ne.s32.totalorder %s272, %s288
      %p290 = scmp.eq.s32.totalorder %s28, 0
      %p291 = por %p289, %p290
      %p292 = scmp.le.s32.totalorder 1, %s22
      %p293 = scmp.lt.s32.totalorder %s22, 3
      %p294 = pnand %p292, %p293
      %p295 = pneg %p294
      // Predicated region
      $region9: #{tpu_custom_call.1} parent=5 // pred_check
        _
      $region10: #{tpu_custom_call.1} parent=5 // pred_check_branch
        %297 = sbr.rel (%p294) target = $region12
      $region11: #{tpu_custom_call.1} parent=5 // pred_region
        %s298 = ssub.s32 %s22, 1
        // Predicated region
        $region13: #{tpu_custom_call.1} parent=11 // pred_check
          %p299 = pneg %p69
        $region14: #{tpu_custom_call.1} parent=11 // pred_check_branch
          %301 = sbr.rel (%p299) target = $region16
        $region15: #{tpu_custom_call.1} parent=11 // pred_region
          _
        $region16: #{tpu_custom_call.1} parent=11 // pred_fallthru
          _
        // Predicated region
        $region17: #{tpu_custom_call.1} parent=11 // pred_check
          %p302 = pneg %p90
        $region18: #{tpu_custom_call.1} parent=11 // pred_check_branch
          %304 = sbr.rel (%p302) target = $region20
        $region19: #{tpu_custom_call.1} parent=11 // pred_region
          _
        $region20: #{tpu_custom_call.1} parent=11 // pred_fallthru
          _
        // Predicated region
        $region21: #{tpu_custom_call.1} parent=11 // pred_check
          %p305 = pneg %p111
        $region22: #{tpu_custom_call.1} parent=11 // pred_check_branch
          %307 = sbr.rel (%p305) target = $region24
        $region23: #{tpu_custom_call.1} parent=11 // pred_region
          _
        $region24: #{tpu_custom_call.1} parent=11 // pred_fallthru
          _
        // Predicated region
        $region25: #{tpu_custom_call.1} parent=11 // pred_check
          %p308 = pneg %p132
        $region26: #{tpu_custom_call.1} parent=11 // pred_check_branch
          %310 = sbr.rel (%p308) target = $region28
        $region27: #{tpu_custom_call.1} parent=11 // pred_region
          _
        $region28: #{tpu_custom_call.1} parent=11 // pred_fallthru
          _
        // Predicated region
        $region29: #{tpu_custom_call.1} parent=11 // pred_check
          %p311 = pneg %p153
        $region30: #{tpu_custom_call.1} parent=11 // pred_check_branch
          %313 = sbr.rel (%p311) target = $region32
        $region31: #{tpu_custom_call.1} parent=11 // pred_region
          _
        $region32: #{tpu_custom_call.1} parent=11 // pred_fallthru
          _
        // Predicated region
        $region33: #{tpu_custom_call.1} parent=11 // pred_check
          %p314 = pneg %p174
        $region34: #{tpu_custom_call.1} parent=11 // pred_check_branch
          %316 = sbr.rel (%p314) target = $region36
        $region35: #{tpu_custom_call.1} parent=11 // pred_region
          _
        $region36: #{tpu_custom_call.1} parent=11 // pred_fallthru
          _
        // Predicated region
        $region37: #{tpu_custom_call.1} parent=11 // pred_check
          %p317 = pneg %p195
        $region38: #{tpu_custom_call.1} parent=11 // pred_check_branch
          %319 = sbr.rel (%p317) target = $region40
        $region39: #{tpu_custom_call.1} parent=11 // pred_region
          _
        $region40: #{tpu_custom_call.1} parent=11 // pred_fallthru
          _
        // Predicated region
        $region41: #{tpu_custom_call.1} parent=11 // pred_check
          %p320 = pneg %p216
        $region42: #{tpu_custom_call.1} parent=11 // pred_check_branch
          %322 = sbr.rel (%p320) target = $region44
        $region43: #{tpu_custom_call.1} parent=11 // pred_region
          _
        $region44: #{tpu_custom_call.1} parent=11 // pred_fallthru
          _
        // Predicated region
        $region45: #{tpu_custom_call.1} parent=11 // pred_check
          %p323 = pneg %p237
        $region46: #{tpu_custom_call.1} parent=11 // pred_check_branch
          %325 = sbr.rel (%p323) target = $region48
        $region47: #{tpu_custom_call.1} parent=11 // pred_region
          _
        $region48: #{tpu_custom_call.1} parent=11 // pred_fallthru
          _
        // Predicated region
        $region49: #{tpu_custom_call.1} parent=11 // pred_check
          %p326 = pneg %p258
        $region50: #{tpu_custom_call.1} parent=11 // pred_check_branch
          %328 = sbr.rel (%p326) target = $region52
        $region51: #{tpu_custom_call.1} parent=11 // pred_region
          _
        $region52: #{tpu_custom_call.1} parent=11 // pred_fallthru
          _
      $region12: #{tpu_custom_call.1} parent=5 // pred_fallthru
        _
      %p329 = scmp.lt.s32.totalorder %s22, 2
      // Predicated region
      $region53: #{tpu_custom_call.1} parent=5 // pred_check
        %p330 = pneg %p329
      $region54: #{tpu_custom_call.1} parent=5 // pred_check_branch
        %332 = sbr.rel (%p330) target = $region56
      $region55: #{tpu_custom_call.1} parent=5 // pred_region
        // Predicated region
        $region57: #{tpu_custom_call.1} parent=55 // pred_check
          %p333 = pneg %p42
        $region58: #{tpu_custom_call.1} parent=55 // pred_check_branch
          %335 = sbr.rel (%p333) target = $region60
        $region59: #{tpu_custom_call.1} parent=55 // pred_region
          %s336 = smul.u32 2, %s22
          %p337 = scmp.lt.s32.totalorder %s336, 3
          %s338 = scalar_select %p337, %s336, 3
          %s339 = smul.addr %s338, 8
          %s340 = scalar_lea.vmem %s0, %s339
          %s341 = smul.u32 2, %s22
        $region60: #{tpu_custom_call.1} parent=55 // pred_fallthru
          _
      $region56: #{tpu_custom_call.1} parent=5 // pred_fallthru
        _
      %p342 = scmp.le.s32.totalorder 1, %s22
      %p343 = scmp.lt.s32.totalorder %s22, 3
      %p344 = pnand %p342, %p343
      %p345 = pneg %p344
      // Predicated region
      $region61: #{tpu_custom_call.1} parent=5 // pred_check
        _
      $region62: #{tpu_custom_call.1} parent=5 // pred_check_branch
        %347 = sbr.rel (%p344) target = $region64
      $region63: #{tpu_custom_call.1} parent=5 // pred_region
        %s348 = ssub.s32 %s22, 1
        %s349 = smul.u32 2, %s27
        %p350 = scmp.lt.s32.totalorder %s349, 3
        %s351 = scalar_select %p350, %s349, 3
        %s352 = smul.addr %s351, 8
        %s353 = scalar_lea.vmem %s0, %s352
        %p354 = pneg %p48
        %p355 = pneg %p45
        %p356 = pneg %p69
        %p357 = pneg %p66
        %p358 = pneg %p90
        %p359 = pneg %p87
        %p360 = pneg %p111
        %p361 = pneg %p108
        %p362 = pneg %p132
        %p363 = pneg %p129
        %p364 = pneg %p153
        %p365 = pneg %p150
        %p366 = pneg %p174
        %p367 = pneg %p171
        %p368 = pneg %p195
        %p369 = pneg %p192
        %p370 = pneg %p216
        %p371 = pneg %p213
        %p372 = pneg %p237
        %p373 = pneg %p234
        %p374 = pneg %p258
        %p375 = pneg %p255
        %p376 = pneg %p284
        %p377 = pneg %p281
        %s378 = sand.u32 %s271, 1
        %s379 = scalar_lea.sflag [#allocation4], %s378
        %s380 = sand.u32 %s271, 1
        %s381 = smul.addr %s380, 2
        %s382 = scalar_lea.vmem [#allocation3], %s381
        %s383 = smul.u32 2, %s27
        %p384 = scmp.lt.s32.totalorder %s383, 3
        %s385 = scalar_select %p384, %s383, 3
        %s386 = smul.addr %s385, 8
        %s387 = scalar_lea.vmem %s0, %s386
        %s388 = smul.u32 2, %s27
        %s389 = smul.u32 2, %s27
        %v391 = vld [vmem:[%s387] sm:$0x1f]
        %v392 = vld [vmem:[%s387 + $0x8] sm:$0x1f]
        %v393 = vpack.c.bf16 %v391, %v391
        %v394 = vpack.c.bf16 %v392, %v392
        %v395 = vld [vmem:[%s1] sm:$0xf]
        %v396 = vld [vmem:[%s1 + $0x4] sm:$0xf]
        %v397 = vld [vmem:[%s1 + $0x8] sm:$0xf]
        %v398 = vld [vmem:[%s1 + $0xc] sm:$0xf]
        %v399 = vld [vmem:[%s1 + $0x10] sm:$0xf]
        %v400 = vld [vmem:[%s1 + $0x14] sm:$0xf]
        %v401 = vld [vmem:[%s1 + $0x18] sm:$0xf]
        %v402 = vld [vmem:[%s1 + $0x1c] sm:$0xf]
        %v403 = vld [vmem:[%s2] sm:$0xff]
        %v404 = vld [vmem:[%s2 + $0x8] sm:$0xff]
        %v405 = vld [vmem:[%s2 + $0x10] sm:$0xff]
        %v406 = vld [vmem:[%s2 + $0x18] sm:$0xff]
        %v407 = vld [vmem:[%s2 + $0x20] sm:$0xff]
        %v408 = vld [vmem:[%s2 + $0x28] sm:$0xff]
        %v409 = vld [vmem:[%s2 + $0x30] sm:$0xff]
        %v410 = vld [vmem:[%s2 + $0x38] sm:$0xff]
        %412 = vset.pattern.permute.xlu0 0
        %413 = vperm.xlu0 %412, %v403
        %v414 = vpop.permute.xlu0 %413
        %417 = vset.pattern.permute.xlu0 0
        %418 = vperm.xlu0 %417, %v404
        %v419 = vpop.permute.xlu0 %418
        %422 = vset.pattern.permute.xlu0 0
        %423 = vperm.xlu0 %422, %v405
        %v424 = vpop.permute.xlu0 %423
        %427 = vset.pattern.permute.xlu0 0
        %428 = vperm.xlu0 %427, %v406
        %v429 = vpop.permute.xlu0 %428
        %432 = vset.pattern.permute.xlu0 0
        %433 = vperm.xlu0 %432, %v407
        %v434 = vpop.permute.xlu0 %433
        %437 = vset.pattern.permute.xlu0 0
        %438 = vperm.xlu0 %437, %v408
        %v439 = vpop.permute.xlu0 %438
        %442 = vset.pattern.permute.xlu0 0
        %443 = vperm.xlu0 %442, %v409
        %v444 = vpop.permute.xlu0 %443
        %447 = vset.pattern.permute.xlu0 0
        %448 = vperm.xlu0 %447, %v410
        %v449 = vpop.permute.xlu0 %448
        %v459 = vunpack.c.l.b16 %v395
        %v460 = vunpack.c.l.b16 %v396
        %v461 = vunpack.c.l.b16 %v397
        %v462 = vunpack.c.l.b16 %v398
        %v463 = vunpack.c.l.b16 %v399
        %v464 = vunpack.c.l.b16 %v400
        %v465 = vunpack.c.l.b16 %v401
        %v466 = vunpack.c.l.b16 %v402
        %v467 = vpack.c.b16 %v460, %v459
        %v468 = vpack.c.b16 %v462, %v461
        %v469 = vpack.c.b16 %v464, %v463
        %v470 = vpack.c.b16 %v466, %v465
        %vm471 = vcmask 39936
        %v473 = vsel %vm471, %v467, 0
        %v476 = vsel %vm471, %v468, 0
        %v479 = vsel %vm471, %v469, 0
        %v482 = vsel %vm471, %v470, 0
        %vm484 = vcmask 1041408
        %vm485 = vcmask 1042432
        %v486 = vsel %vm484, 4294967295, 65535
        %v487 = vsel %vm485, %v486, 0
        %v489 = vand.u32 %v393, %v487
        %v492 = vand.u32 %v394, %v487
        %494 = vmatpush.bf16.msra.mxu0 0
        %495 = vmatpush.bf16.msra.mxu0 0
        %496 = vmatpush.bf16.msra.mxu0 0
        %497 = vmatpush.bf16.msra.mxu0 0
        %498 = vmatpush.bf16.msra.mxu0 0
        %499 = vmatpush.bf16.msra.mxu0 0
        %500 = vmatpush.bf16.msra.mxu0 0
        %501 = vmatpush.bf16.msra.mxu0 %v489
        %502 = vmatmul.bf16.gmra.mxu0 %v473
        %v503 = vpop.f32.mrf.mxu0
        %v504 = vadd.f32 %v414, %v503
        %v505 = vpop.f32.mrf.mxu0
        %v506 = vadd.f32 %v419, %v505
        %507 = vmatmul.bf16.gmra.mxu0 %v476
        %v508 = vpop.f32.mrf.mxu0
        %v509 = vadd.f32 %v424, %v508
        %v510 = vpop.f32.mrf.mxu0
        %v511 = vadd.f32 %v429, %v510
        %512 = vmatmul.bf16.gmra.mxu0 %v479
        %v513 = vpop.f32.mrf.mxu0
        %v514 = vadd.f32 %v434, %v513
        %v515 = vpop.f32.mrf.mxu0
        %v516 = vadd.f32 %v439, %v515
        %517 = vmatmul.bf16.gmra.mxu0 %v482
        %v518 = vpop.f32.mrf.mxu0
        %v519 = vadd.f32 %v444, %v518
        %v520 = vpop.f32.mrf.mxu0
        %v521 = vadd.f32 %v449, %v520
        %522 = vdwg.mxu0
        %523 = vmatpush.bf16.msra.mxu0 0
        %524 = vmatpush.bf16.msra.mxu0 0
        %525 = vmatpush.bf16.msra.mxu0 0
        %526 = vmatpush.bf16.msra.mxu0 0
        %527 = vmatpush.bf16.msra.mxu0 0
        %528 = vmatpush.bf16.msra.mxu0 0
        %529 = vmatpush.bf16.msra.mxu0 0
        %530 = vmatpush.bf16.msra.mxu0 %v492
        %531 = vmatmul.bf16.gmra.mxu0 %v473
        %v532 = vpop.f32.mrf.mxu0
        %v533 = vadd.f32 %v414, %v532
        %v534 = vpop.f32.mrf.mxu0
        %v535 = vadd.f32 %v419, %v534
        %536 = vmatmul.bf16.gmra.mxu0 %v476
        %v537 = vpop.f32.mrf.mxu0
        %v538 = vadd.f32 %v424, %v537
        %v539 = vpop.f32.mrf.mxu0
        %v540 = vadd.f32 %v429, %v539
        %541 = vmatmul.bf16.gmra.mxu0 %v479
        %v542 = vpop.f32.mrf.mxu0
        %v543 = vadd.f32 %v434, %v542
        %v544 = vpop.f32.mrf.mxu0
        %v545 = vadd.f32 %v439, %v544
        %546 = vmatmul.bf16.gmra.mxu0 %v482
        %v547 = vpop.f32.mrf.mxu0
        %v548 = vadd.f32 %v444, %v547
        %v549 = vpop.f32.mrf.mxu0
        %v550 = vadd.f32 %v449, %v549
        %551 = vdwg.mxu0
        %v552 = vmul.f32 %v504, 0.01
        %v553 = vmul.f32 %v533, 0.01
        %v554 = vmul.f32 %v506, 0.01
        %v555 = vmul.f32 %v535, 0.01
        %v556 = vmul.f32 %v509, 0.01
        %v557 = vmul.f32 %v538, 0.01
        %v558 = vmul.f32 %v511, 0.01
        %v559 = vmul.f32 %v540, 0.01
        %v560 = vmul.f32 %v514, 0.01
        %v561 = vmul.f32 %v543, 0.01
        %v562 = vmul.f32 %v516, 0.01
        %v563 = vmul.f32 %v545, 0.01
        %v564 = vmul.f32 %v519, 0.01
        %v565 = vmul.f32 %v548, 0.01
        %v566 = vmul.f32 %v521, 0.01
        %v567 = vmul.f32 %v550, 0.01
        %v568 = vmax.f32 %v504, %v552
        %v569 = vmax.f32 %v533, %v553
        %v570 = vmax.f32 %v506, %v554
        %v571 = vmax.f32 %v535, %v555
        %v572 = vmax.f32 %v509, %v556
        %v573 = vmax.f32 %v538, %v557
        %v574 = vmax.f32 %v511, %v558
        %v575 = vmax.f32 %v540, %v559
        %v576 = vmax.f32 %v514, %v560
        %v577 = vmax.f32 %v543, %v561
        %v578 = vmax.f32 %v516, %v562
        %v579 = vmax.f32 %v545, %v563
        %v580 = vmax.f32 %v519, %v564
        %v581 = vmax.f32 %v548, %v565
        %v582 = vmax.f32 %v521, %v566
        %v583 = vmax.f32 %v550, %v567
        %v584 = vld [vmem:[%s3] sm:$0xf]
        %v585 = vld [vmem:[%s3 + $0x4] sm:$0xf]
        %v586 = vld [vmem:[%s3 + $0x8] sm:$0xf]
        %v587 = vld [vmem:[%s3 + $0xc] sm:$0xf]
        %v588 = vld [vmem:[%s3 + $0x10] sm:$0xf]
        %v589 = vld [vmem:[%s3 + $0x14] sm:$0xf]
        %v590 = vld [vmem:[%s3 + $0x18] sm:$0xf]
        %v591 = vld [vmem:[%s3 + $0x1c] sm:$0xf]
        %v592 = vld [vmem:[%s3 + $0x20] sm:$0xf]
        %v593 = vld [vmem:[%s3 + $0x24] sm:$0xf]
        %v594 = vld [vmem:[%s3 + $0x28] sm:$0xf]
        %v595 = vld [vmem:[%s3 + $0x2c] sm:$0xf]
        %v596 = vld [vmem:[%s3 + $0x30] sm:$0xf]
        %v597 = vld [vmem:[%s3 + $0x34] sm:$0xf]
        %v598 = vld [vmem:[%s3 + $0x38] sm:$0xf]
        %v599 = vld [vmem:[%s3 + $0x3c] sm:$0xf]
        %v600 = vld [vmem:[%s3 + $0x40] sm:$0xf]
        %v601 = vld [vmem:[%s3 + $0x44] sm:$0xf]
        %v602 = vld [vmem:[%s3 + $0x48] sm:$0xf]
        %v603 = vld [vmem:[%s3 + $0x4c] sm:$0xf]
        %v604 = vld [vmem:[%s3 + $0x50] sm:$0xf]
        %v605 = vld [vmem:[%s3 + $0x54] sm:$0xf]
        %v606 = vld [vmem:[%s3 + $0x58] sm:$0xf]
        %v607 = vld [vmem:[%s3 + $0x5c] sm:$0xf]
        %v608 = vld [vmem:[%s3 + $0x60] sm:$0xf]
        %v609 = vld [vmem:[%s3 + $0x64] sm:$0xf]
        %v610 = vld [vmem:[%s3 + $0x68] sm:$0xf]
        %v611 = vld [vmem:[%s3 + $0x6c] sm:$0xf]
        %v612 = vld [vmem:[%s3 + $0x70] sm:$0xf]
        %v613 = vld [vmem:[%s3 + $0x74] sm:$0xf]
        %v614 = vld [vmem:[%s3 + $0x78] sm:$0xf]
        %v615 = vld [vmem:[%s3 + $0x7c] sm:$0xf]
        %v616 = vpack.c.bf16 %v570, %v568
        %v617 = vpack.c.bf16 %v571, %v569
        %v618 = vpack.c.bf16 %v574, %v572
        %v619 = vpack.c.bf16 %v575, %v573
        %v620 = vpack.c.bf16 %v578, %v576
        %v621 = vpack.c.bf16 %v579, %v577
        %v622 = vpack.c.bf16 %v582, %v580
        %v623 = vpack.c.bf16 %v583, %v581
        %v624 = vld [vmem:[%s4] sm:$0xff]
        %v625 = vld [vmem:[%s4 + $0x8] sm:$0xff]
        %v626 = vld [vmem:[%s4 + $0x10] sm:$0xff]
        %v627 = vld [vmem:[%s4 + $0x18] sm:$0xff]
        %v628 = vld [vmem:[%s4 + $0x20] sm:$0xff]
        %v629 = vld [vmem:[%s4 + $0x28] sm:$0xff]
        %v630 = vld [vmem:[%s4 + $0x30] sm:$0xff]
        %v631 = vld [vmem:[%s4 + $0x38] sm:$0xff]
        %v632 = vld [vmem:[%s4 + $0x40] sm:$0xff]
        %v633 = vld [vmem:[%s4 + $0x48] sm:$0xff]
        %v634 = vld [vmem:[%s4 + $0x50] sm:$0xff]
        %v635 = vld [vmem:[%s4 + $0x58] sm:$0xff]
        %v636 = vld [vmem:[%s4 + $0x60] sm:$0xff]
        %v637 = vld [vmem:[%s4 + $0x68] sm:$0xff]
        %v638 = vld [vmem:[%s4 + $0x70] sm:$0xff]
        %v639 = vld [vmem:[%s4 + $0x78] sm:$0xff]
        %v640 = vld [vmem:[%s4 + $0x80] sm:$0xff]
        %v641 = vld [vmem:[%s4 + $0x88] sm:$0xff]
        %v642 = vld [vmem:[%s4 + $0x90] sm:$0xff]
        %v643 = vld [vmem:[%s4 + $0x98] sm:$0xff]
        %v644 = vld [vmem:[%s4 + $0xa0] sm:$0xff]
        %v645 = vld [vmem:[%s4 + $0xa8] sm:$0xff]
        %v646 = vld [vmem:[%s4 + $0xb0] sm:$0xff]
        %v647 = vld [vmem:[%s4 + $0xb8] sm:$0xff]
        %v648 = vld [vmem:[%s4 + $0xc0] sm:$0xff]
        %v649 = vld [vmem:[%s4 + $0xc8] sm:$0xff]
        %v650 = vld [vmem:[%s4 + $0xd0] sm:$0xff]
        %v651 = vld [vmem:[%s4 + $0xd8] sm:$0xff]
        %v652 = vld [vmem:[%s4 + $0xe0] sm:$0xff]
        %v653 = vld [vmem:[%s4 + $0xe8] sm:$0xff]
        %v654 = vld [vmem:[%s4 + $0xf0] sm:$0xff]
        %v655 = vld [vmem:[%s4 + $0xf8] sm:$0xff]
        %657 = vset.pattern.permute.xlu0 0
        %658 = vperm.xlu0 %657, %v624
        %v659 = vpop.permute.xlu0 %658
        %662 = vset.pattern.permute.xlu0 0
        %663 = vperm.xlu0 %662, %v625
        %v664 = vpop.permute.xlu0 %663
        %667 = vset.pattern.permute.xlu0 0
        %668 = vperm.xlu0 %667, %v626
        %v669 = vpop.permute.xlu0 %668
        %672 = vset.pattern.permute.xlu0 0
        %673 = vperm.xlu0 %672, %v627
        %v674 = vpop.permute.xlu0 %673
        %677 = vset.pattern.permute.xlu0 0
        %678 = vperm.xlu0 %677, %v628
        %v679 = vpop.permute.xlu0 %678
        %682 = vset.pattern.permute.xlu0 0
        %683 = vperm.xlu0 %682, %v629
        %v684 = vpop.permute.xlu0 %683
        %687 = vset.pattern.permute.xlu0 0
        %688 = vperm.xlu0 %687, %v630
        %v689 = vpop.permute.xlu0 %688
        %692 = vset.pattern.permute.xlu0 0
        %693 = vperm.xlu0 %692, %v631
        %v694 = vpop.permute.xlu0 %693
        %697 = vset.pattern.permute.xlu0 0
        %698 = vperm.xlu0 %697, %v632
        %v699 = vpop.permute.xlu0 %698
        %702 = vset.pattern.permute.xlu0 0
        %703 = vperm.xlu0 %702, %v633
        %v704 = vpop.permute.xlu0 %703
        %707 = vset.pattern.permute.xlu0 0
        %708 = vperm.xlu0 %707, %v634
        %v709 = vpop.permute.xlu0 %708
        %712 = vset.pattern.permute.xlu0 0
        %713 = vperm.xlu0 %712, %v635
        %v714 = vpop.permute.xlu0 %713
        %717 = vset.pattern.permute.xlu0 0
        %718 = vperm.xlu0 %717, %v636
        %v719 = vpop.permute.xlu0 %718
        %722 = vset.pattern.permute.xlu0 0
        %723 = vperm.xlu0 %722, %v637
        %v724 = vpop.permute.xlu0 %723
        %727 = vset.pattern.permute.xlu0 0
        %728 = vperm.xlu0 %727, %v638
        %v729 = vpop.permute.xlu0 %728
        %732 = vset.pattern.permute.xlu0 0
        %733 = vperm.xlu0 %732, %v639
        %v734 = vpop.permute.xlu0 %733
        %737 = vset.pattern.permute.xlu0 0
        %738 = vperm.xlu0 %737, %v640
        %v739 = vpop.permute.xlu0 %738
        %742 = vset.pattern.permute.xlu0 0
        %743 = vperm.xlu0 %742, %v641
        %v744 = vpop.permute.xlu0 %743
        %747 = vset.pattern.permute.xlu0 0
        %748 = vperm.xlu0 %747, %v642
        %v749 = vpop.permute.xlu0 %748
        %752 = vset.pattern.permute.xlu0 0
        %753 = vperm.xlu0 %752, %v643
        %v754 = vpop.permute.xlu0 %753
        %757 = vset.pattern.permute.xlu0 0
        %758 = vperm.xlu0 %757, %v644
        %v759 = vpop.permute.xlu0 %758
        %762 = vset.pattern.permute.xlu0 0
        %763 = vperm.xlu0 %762, %v645
        %v764 = vpop.permute.xlu0 %763
        %767 = vset.pattern.permute.xlu0 0
        %768 = vperm.xlu0 %767, %v646
        %v769 = vpop.permute.xlu0 %768
        %772 = vset.pattern.permute.xlu0 0
        %773 = vperm.xlu0 %772, %v647
        %v774 = vpop.permute.xlu0 %773
        %777 = vset.pattern.permute.xlu0 0
        %778 = vperm.xlu0 %777, %v648
        %v779 = vpop.permute.xlu0 %778
        %782 = vset.pattern.permute.xlu0 0
        %783 = vperm.xlu0 %782, %v649
        %v784 = vpop.permute.xlu0 %783
        %787 = vset.pattern.permute.xlu0 0
        %788 = vperm.xlu0 %787, %v650
        %v789 = vpop.permute.xlu0 %788
        %792 = vset.pattern.permute.xlu0 0
        %793 = vperm.xlu0 %792, %v651
        %v794 = vpop.permute.xlu0 %793
        %797 = vset.pattern.permute.xlu0 0
        %798 = vperm.xlu0 %797, %v652
        %v799 = vpop.permute.xlu0 %798
        %802 = vset.pattern.permute.xlu0 0
        %803 = vperm.xlu0 %802, %v653
        %v804 = vpop.permute.xlu0 %803
        %807 = vset.pattern.permute.xlu0 0
        %808 = vperm.xlu0 %807, %v654
        %v809 = vpop.permute.xlu0 %808
        %812 = vset.pattern.permute.xlu0 0
        %813 = vperm.xlu0 %812, %v655
        %v814 = vpop.permute.xlu0 %813
        %v848 = vunpack.c.l.b16 %v584
        %v849 = vunpack.c.l.b16 %v585
        %v850 = vunpack.c.l.b16 %v586
        %v851 = vunpack.c.l.b16 %v587
        %v852 = vunpack.c.l.b16 %v588
        %v853 = vunpack.c.l.b16 %v589
        %v854 = vunpack.c.l.b16 %v590
        %v855 = vunpack.c.l.b16 %v591
        %v856 = vunpack.c.l.b16 %v592
        %v857 = vunpack.c.l.b16 %v593
        %v858 = vunpack.c.l.b16 %v594
        %v859 = vunpack.c.l.b16 %v595
        %v860 = vunpack.c.l.b16 %v596
        %v861 = vunpack.c.l.b16 %v597
        %v862 = vunpack.c.l.b16 %v598
        %v863 = vunpack.c.l.b16 %v599
        %v864 = vunpack.c.l.b16 %v600
        %v865 = vunpack.c.l.b16 %v601
        %v866 = vunpack.c.l.b16 %v602
        %v867 = vunpack.c.l.b16 %v603
        %v868 = vunpack.c.l.b16 %v604
        %v869 = vunpack.c.l.b16 %v605
        %v870 = vunpack.c.l.b16 %v606
        %v871 = vunpack.c.l.b16 %v607
        %v872 = vunpack.c.l.b16 %v608
        %v873 = vunpack.c.l.b16 %v609
        %v874 = vunpack.c.l.b16 %v610
        %v875 = vunpack.c.l.b16 %v611
        %v876 = vunpack.c.l.b16 %v612
        %v877 = vunpack.c.l.b16 %v613
        %v878 = vunpack.c.l.b16 %v614
        %v879 = vunpack.c.l.b16 %v615
        %v880 = vpack.c.b16 %v849, %v848
        %v881 = vpack.c.b16 %v851, %v850
        %v882 = vpack.c.b16 %v853, %v852
        %v883 = vpack.c.b16 %v855, %v854
        %v884 = vpack.c.b16 %v857, %v856
        %v885 = vpack.c.b16 %v859, %v858
        %v886 = vpack.c.b16 %v861, %v860
        %v887 = vpack.c.b16 %v863, %v862
        %v888 = vpack.c.b16 %v865, %v864
        %v889 = vpack.c.b16 %v867, %v866
        %v890 = vpack.c.b16 %v869, %v868
        %v891 = vpack.c.b16 %v871, %v870
        %v892 = vpack.c.b16 %v873, %v872
        %v893 = vpack.c.b16 %v875, %v874
        %v894 = vpack.c.b16 %v877, %v876
        %v895 = vpack.c.b16 %v879, %v878
        %vm896 = vcmask 523264
        %v898 = vsel %vm896, %v880, 0
        %v901 = vsel %vm896, %v881, 0
        %v904 = vsel %vm896, %v882, 0
        %v907 = vsel %vm896, %v883, 0
        %v910 = vsel %vm896, %v884, 0
        %v913 = vsel %vm896, %v885, 0
        %v916 = vsel %vm896, %v886, 0
        %v919 = vsel %vm896, %v887, 0
        %v922 = vsel %vm896, %v888, 0
        %v925 = vsel %vm896, %v889, 0
        %v928 = vsel %vm896, %v890, 0
        %v931 = vsel %vm896, %v891, 0
        %v934 = vsel %vm896, %v892, 0
        %v937 = vsel %vm896, %v893, 0
        %v940 = vsel %vm896, %v894, 0
        %v943 = vsel %vm896, %v895, 0
        %945 = vmatpush.bf16.msra.mxu0 0
        %946 = vmatpush.bf16.msra.mxu0 0
        %947 = vmatpush.bf16.msra.mxu0 0
        %948 = vmatpush.bf16.msra.mxu0 0
        %949 = vmatpush.bf16.msra.mxu0 %v622
        %950 = vmatpush.bf16.msra.mxu0 %v620
        %951 = vmatpush.bf16.msra.mxu0 %v618
        %952 = vmatpush.bf16.msra.mxu0 %v616
        %953 = vmatmul.bf16.gmra.mxu0 %v898
        %v954 = vpop.f32.mrf.mxu0
        %v955 = vadd.f32 %v659, %v954
        %v956 = vpop.f32.mrf.mxu0
        %v957 = vadd.f32 %v664, %v956
        %958 = vmatmul.bf16.gmra.mxu0 %v901
        %v959 = vpop.f32.mrf.mxu0
        %v960 = vadd.f32 %v669, %v959
        %v961 = vpop.f32.mrf.mxu0
        %v962 = vadd.f32 %v674, %v961
        %963 = vmatmul.bf16.gmra.mxu0 %v904
        %v964 = vpop.f32.mrf.mxu0
        %v965 = vadd.f32 %v679, %v964
        %v966 = vpop.f32.mrf.mxu0
        %v967 = vadd.f32 %v684, %v966
        %968 = vmatmul.bf16.gmra.mxu0 %v907
        %v969 = vpop.f32.mrf.mxu0
        %v970 = vadd.f32 %v689, %v969
        %v971 = vpop.f32.mrf.mxu0
        %v972 = vadd.f32 %v694, %v971
        %973 = vmatmul.bf16.gmra.mxu0 %v910
        %v974 = vpop.f32.mrf.mxu0
        %v975 = vadd.f32 %v699, %v974
        %v976 = vpop.f32.mrf.mxu0
        %v977 = vadd.f32 %v704, %v976
        %978 = vmatmul.bf16.gmra.mxu0 %v913
        %v979 = vpop.f32.mrf.mxu0
        %v980 = vadd.f32 %v709, %v979
        %v981 = vpop.f32.mrf.mxu0
        %v982 = vadd.f32 %v714, %v981
        %983 = vmatmul.bf16.gmra.mxu0 %v916
        %v984 = vpop.f32.mrf.mxu0
        %v985 = vadd.f32 %v719, %v984
        %v986 = vpop.f32.mrf.mxu0
        %v987 = vadd.f32 %v724, %v986
        %988 = vmatmul.bf16.gmra.mxu0 %v919
        %v989 = vpop.f32.mrf.mxu0
        %v990 = vadd.f32 %v729, %v989
        %v991 = vpop.f32.mrf.mxu0
        %v992 = vadd.f32 %v734, %v991
        %993 = vmatmul.bf16.gmra.mxu0 %v922
        %v994 = vpop.f32.mrf.mxu0
        %v995 = vadd.f32 %v739, %v994
        %v996 = vpop.f32.mrf.mxu0
        %v997 = vadd.f32 %v744, %v996
        %998 = vmatmul.bf16.gmra.mxu0 %v925
        %v999 = vpop.f32.mrf.mxu0
        %v1000 = vadd.f32 %v749, %v999
        %v1001 = vpop.f32.mrf.mxu0
        %v1002 = vadd.f32 %v754, %v1001
        %1003 = vmatmul.bf16.gmra.mxu0 %v928
        %v1004 = vpop.f32.mrf.mxu0
        %v1005 = vadd.f32 %v759, %v1004
        %v1006 = vpop.f32.mrf.mxu0
        %v1007 = vadd.f32 %v764, %v1006
        %1008 = vmatmul.bf16.gmra.mxu0 %v931
        %v1009 = vpop.f32.mrf.mxu0
        %v1010 = vadd.f32 %v769, %v1009
        %v1011 = vpop.f32.mrf.mxu0
        %v1012 = vadd.f32 %v774, %v1011
        %1013 = vmatmul.bf16.gmra.mxu0 %v934
        %v1014 = vpop.f32.mrf.mxu0
        %v1015 = vadd.f32 %v779, %v1014
        %v1016 = vpop.f32.mrf.mxu0
        %v1017 = vadd.f32 %v784, %v1016
        %1018 = vmatmul.bf16.gmra.mxu0 %v937
        %v1019 = vpop.f32.mrf.mxu0
        %v1020 = vadd.f32 %v789, %v1019
        %v1021 = vpop.f32.mrf.mxu0
        %v1022 = vadd.f32 %v794, %v1021
        %1023 = vmatmul.bf16.gmra.mxu0 %v940
        %v1024 = vpop.f32.mrf.mxu0
        %v1025 = vadd.f32 %v799, %v1024
        %v1026 = vpop.f32.mrf.mxu0
        %v1027 = vadd.f32 %v804, %v1026
        %1028 = vmatmul.bf16.gmra.mxu0 %v943
        %v1029 = vpop.f32.mrf.mxu0
        %v1030 = vadd.f32 %v809, %v1029
        %v1031 = vpop.f32.mrf.mxu0
        %v1032 = vadd.f32 %v814, %v1031
        %1033 = vdwg.mxu0
        %1034 = vmatpush.bf16.msra.mxu0 0
        %1035 = vmatpush.bf16.msra.mxu0 0
        %1036 = vmatpush.bf16.msra.mxu0 0
        %1037 = vmatpush.bf16.msra.mxu0 0
        %1038 = vmatpush.bf16.msra.mxu0 %v623
        %1039 = vmatpush.bf16.msra.mxu0 %v621
        %1040 = vmatpush.bf16.msra.mxu0 %v619
        %1041 = vmatpush.bf16.msra.mxu0 %v617
        %1042 = vmatmul.bf16.gmra.mxu0 %v898
        %v1043 = vpop.f32.mrf.mxu0
        %v1044 = vadd.f32 %v659, %v1043
        %v1045 = vpop.f32.mrf.mxu0
        %v1046 = vadd.f32 %v664, %v1045
        %1047 = vmatmul.bf16.gmra.mxu0 %v901
        %v1048 = vpop.f32.mrf.mxu0
        %v1049 = vadd.f32 %v669, %v1048
        %v1050 = vpop.f32.mrf.mxu0
        %v1051 = vadd.f32 %v674, %v1050
        %1052 = vmatmul.bf16.gmra.mxu0 %v904
        %v1053 = vpop.f32.mrf.mxu0
        %v1054 = vadd.f32 %v679, %v1053
        %v1055 = vpop.f32.mrf.mxu0
        %v1056 = vadd.f32 %v684, %v1055
        %1057 = vmatmul.bf16.gmra.mxu0 %v907
        %v1058 = vpop.f32.mrf.mxu0
        %v1059 = vadd.f32 %v689, %v1058
        %v1060 = vpop.f32.mrf.mxu0
        %v1061 = vadd.f32 %v694, %v1060
        %1062 = vmatmul.bf16.gmra.mxu0 %v910
        %v1063 = vpop.f32.mrf.mxu0
        %v1064 = vadd.f32 %v699, %v1063
        %v1065 = vpop.f32.mrf.mxu0
        %v1066 = vadd.f32 %v704, %v1065
        %1067 = vmatmul.bf16.gmra.mxu0 %v913
        %v1068 = vpop.f32.mrf.mxu0
        %v1069 = vadd.f32 %v709, %v1068
        %v1070 = vpop.f32.mrf.mxu0
        %v1071 = vadd.f32 %v714, %v1070
        %1072 = vmatmul.bf16.gmra.mxu0 %v916
        %v1073 = vpop.f32.mrf.mxu0
        %v1074 = vadd.f32 %v719, %v1073
        %v1075 = vpop.f32.mrf.mxu0
        %v1076 = vadd.f32 %v724, %v1075
        %1077 = vmatmul.bf16.gmra.mxu0 %v919
        %v1078 = vpop.f32.mrf.mxu0
        %v1079 = vadd.f32 %v729, %v1078
        %v1080 = vpop.f32.mrf.mxu0
        %v1081 = vadd.f32 %v734, %v1080
        %1082 = vmatmul.bf16.gmra.mxu0 %v922
        %v1083 = vpop.f32.mrf.mxu0
        %v1084 = vadd.f32 %v739, %v1083
        %v1085 = vpop.f32.mrf.mxu0
        %v1086 = vadd.f32 %v744, %v1085
        %1087 = vmatmul.bf16.gmra.mxu0 %v925
        %v1088 = vpop.f32.mrf.mxu0
        %v1089 = vadd.f32 %v749, %v1088
        %v1090 = vpop.f32.mrf.mxu0
        %v1091 = vadd.f32 %v754, %v1090
        %1092 = vmatmul.bf16.gmra.mxu0 %v928
        %v1093 = vpop.f32.mrf.mxu0
        %v1094 = vadd.f32 %v759, %v1093
        %v1095 = vpop.f32.mrf.mxu0
        %v1096 = vadd.f32 %v764, %v1095
        %1097 = vmatmul.bf16.gmra.mxu0 %v931
        %v1098 = vpop.f32.mrf.mxu0
        %v1099 = vadd.f32 %v769, %v1098
        %v1100 = vpop.f32.mrf.mxu0
        %v1101 = vadd.f32 %v774, %v1100
        %1102 = vmatmul.bf16.gmra.mxu0 %v934
        %v1103 = vpop.f32.mrf.mxu0
        %v1104 = vadd.f32 %v779, %v1103
        %v1105 = vpop.f32.mrf.mxu0
        %v1106 = vadd.f32 %v784, %v1105
        %1107 = vmatmul.bf16.gmra.mxu0 %v937
        %v1108 = vpop.f32.mrf.mxu0
        %v1109 = vadd.f32 %v789, %v1108
        %v1110 = vpop.f32.mrf.mxu0
        %v1111 = vadd.f32 %v794, %v1110
        %1112 = vmatmul.bf16.gmra.mxu0 %v940
        %v1113 = vpop.f32.mrf.mxu0
        %v1114 = vadd.f32 %v799, %v1113
        %v1115 = vpop.f32.mrf.mxu0
        %v1116 = vadd.f32 %v804, %v1115
        %1117 = vmatmul.bf16.gmra.mxu0 %v943
        %v1118 = vpop.f32.mrf.mxu0
        %v1119 = vadd.f32 %v809, %v1118
        %v1120 = vpop.f32.mrf.mxu0
        %v1121 = vadd.f32 %v814, %v1120
        %1122 = vdwg.mxu0
        %v1123 = vmul.f32 %v955, 0.01
        %v1124 = vmul.f32 %v1044, 0.01
        %v1125 = vmul.f32 %v957, 0.01
        %v1126 = vmul.f32 %v1046, 0.01
        %v1127 = vmul.f32 %v960, 0.01
        %v1128 = vmul.f32 %v1049, 0.01
        %v1129 = vmul.f32 %v962, 0.01
        %v1130 = vmul.f32 %v1051, 0.01
        %v1131 = vmul.f32 %v965, 0.01
        %v1132 = vmul.f32 %v1054, 0.01
        %v1133 = vmul.f32 %v967, 0.01
        %v1134 = vmul.f32 %v1056, 0.01
        %v1135 = vmul.f32 %v970, 0.01
        %v1136 = vmul.f32 %v1059, 0.01
        %v1137 = vmul.f32 %v972, 0.01
        %v1138 = vmul.f32 %v1061, 0.01
        %v1139 = vmul.f32 %v975, 0.01
        %v1140 = vmul.f32 %v1064, 0.01
        %v1141 = vmul.f32 %v977, 0.01
        %v1142 = vmul.f32 %v1066, 0.01
        %v1143 = vmul.f32 %v980, 0.01
        %v1144 = vmul.f32 %v1069, 0.01
        %v1145 = vmul.f32 %v982, 0.01
        %v1146 = vmul.f32 %v1071, 0.01
        %v1147 = vmul.f32 %v985, 0.01
        %v1148 = vmul.f32 %v1074, 0.01
        %v1149 = vmul.f32 %v987, 0.01
        %v1150 = vmul.f32 %v1076, 0.01
        %v1151 = vmul.f32 %v990, 0.01
        %v1152 = vmul.f32 %v1079, 0.01
        %v1153 = vmul.f32 %v992, 0.01
        %v1154 = vmul.f32 %v1081, 0.01
        %v1155 = vmul.f32 %v995, 0.01
        %v1156 = vmul.f32 %v1084, 0.01
        %v1157 = vmul.f32 %v997, 0.01
        %v1158 = vmul.f32 %v1086, 0.01
        %v1159 = vmul.f32 %v1000, 0.01
        %v1160 = vmul.f32 %v1089, 0.01
        %v1161 = vmul.f32 %v1002, 0.01
        %v1162 = vmul.f32 %v1091, 0.01
        %v1163 = vmul.f32 %v1005, 0.01
        %v1164 = vmul.f32 %v1094, 0.01
        %v1165 = vmul.f32 %v1007, 0.01
        %v1166 = vmul.f32 %v1096, 0.01
        %v1167 = vmul.f32 %v1010, 0.01
        %v1168 = vmul.f32 %v1099, 0.01
        %v1169 = vmul.f32 %v1012, 0.01
        %v1170 = vmul.f32 %v1101, 0.01
        %v1171 = vmul.f32 %v1015, 0.01
        %v1172 = vmul.f32 %v1104, 0.01
        %v1173 = vmul.f32 %v1017, 0.01
        %v1174 = vmul.f32 %v1106, 0.01
        %v1175 = vmul.f32 %v1020, 0.01
        %v1176 = vmul.f32 %v1109, 0.01
        %v1177 = vmul.f32 %v1022, 0.01
        %v1178 = vmul.f32 %v1111, 0.01
        %v1179 = vmul.f32 %v1025, 0.01
        %v1180 = vmul.f32 %v1114, 0.01
        %v1181 = vmul.f32 %v1027, 0.01
        %v1182 = vmul.f32 %v1116, 0.01
        %v1183 = vmul.f32 %v1030, 0.01
        %v1184 = vmul.f32 %v1119, 0.01
        %v1185 = vmul.f32 %v1032, 0.01
        %v1186 = vmul.f32 %v1121, 0.01
        %v1187 = vmax.f32 %v955, %v1123
        %v1188 = vmax.f32 %v1044, %v1124
        %v1189 = vmax.f32 %v957, %v1125
        %v1190 = vmax.f32 %v1046, %v1126
        %v1191 = vmax.f32 %v960, %v1127
        %v1192 = vmax.f32 %v1049, %v1128
        %v1193 = vmax.f32 %v962, %v1129
        %v1194 = vmax.f32 %v1051, %v1130
        %v1195 = vmax.f32 %v965, %v1131
        %v1196 = vmax.f32 %v1054, %v1132
        %v1197 = vmax.f32 %v967, %v1133
        %v1198 = vmax.f32 %v1056, %v1134
        %v1199 = vmax.f32 %v970, %v1135
        %v1200 = vmax.f32 %v1059, %v1136
        %v1201 = vmax.f32 %v972, %v1137
        %v1202 = vmax.f32 %v1061, %v1138
        %v1203 = vmax.f32 %v975, %v1139
        %v1204 = vmax.f32 %v1064, %v1140
        %v1205 = vmax.f32 %v977, %v1141
        %v1206 = vmax.f32 %v1066, %v1142
        %v1207 = vmax.f32 %v980, %v1143
        %v1208 = vmax.f32 %v1069, %v1144
        %v1209 = vmax.f32 %v982, %v1145
        %v1210 = vmax.f32 %v1071, %v1146
        %v1211 = vmax.f32 %v985, %v1147
        %v1212 = vmax.f32 %v1074, %v1148
        %v1213 = vmax.f32 %v987, %v1149
        %v1214 = vmax.f32 %v1076, %v1150
        %v1215 = vmax.f32 %v990, %v1151
        %v1216 = vmax.f32 %v1079, %v1152
        %v1217 = vmax.f32 %v992, %v1153
        %v1218 = vmax.f32 %v1081, %v1154
        %v1219 = vmax.f32 %v995, %v1155
        %v1220 = vmax.f32 %v1084, %v1156
        %v1221 = vmax.f32 %v997, %v1157
        %v1222 = vmax.f32 %v1086, %v1158
        %v1223 = vmax.f32 %v1000, %v1159
        %v1224 = vmax.f32 %v1089, %v1160
        %v1225 = vmax.f32 %v1002, %v1161
        %v1226 = vmax.f32 %v1091, %v1162
        %v1227 = vmax.f32 %v1005, %v1163
        %v1228 = vmax.f32 %v1094, %v1164
        %v1229 = vmax.f32 %v1007, %v1165
        %v1230 = vmax.f32 %v1096, %v1166
        %v1231 = vmax.f32 %v1010, %v1167
        %v1232 = vmax.f32 %v1099, %v1168
        %v1233 = vmax.f32 %v1012, %v1169
        %v1234 = vmax.f32 %v1101, %v1170
        %v1235 = vmax.f32 %v1015, %v1171
        %v1236 = vmax.f32 %v1104, %v1172
        %v1237 = vmax.f32 %v1017, %v1173
        %v1238 = vmax.f32 %v1106, %v1174
        %v1239 = vmax.f32 %v1020, %v1175
        %v1240 = vmax.f32 %v1109, %v1176
        %v1241 = vmax.f32 %v1022, %v1177
        %v1242 = vmax.f32 %v1111, %v1178
        %v1243 = vmax.f32 %v1025, %v1179
        %v1244 = vmax.f32 %v1114, %v1180
        %v1245 = vmax.f32 %v1027, %v1181
        %v1246 = vmax.f32 %v1116, %v1182
        %v1247 = vmax.f32 %v1030, %v1183
        %v1248 = vmax.f32 %v1119, %v1184
        %v1249 = vmax.f32 %v1032, %v1185
        %v1250 = vmax.f32 %v1121, %v1186
        %v1251 = vld [vmem:[%s5] sm:$0xff]
        %v1252 = vld [vmem:[%s5 + $0x8] sm:$0xff]
        %v1253 = vld [vmem:[%s5 + $0x10] sm:$0xff]
        %v1254 = vld [vmem:[%s5 + $0x18] sm:$0xff]
        %v1255 = vld [vmem:[%s5 + $0x20] sm:$0xff]
        %v1256 = vld [vmem:[%s5 + $0x28] sm:$0xff]
        %v1257 = vld [vmem:[%s5 + $0x30] sm:$0xff]
        %v1258 = vld [vmem:[%s5 + $0x38] sm:$0xff]
        %v1259 = vld [vmem:[%s5 + $0x40] sm:$0xff]
        %v1260 = vld [vmem:[%s5 + $0x48] sm:$0xff]
        %v1261 = vld [vmem:[%s5 + $0x50] sm:$0xff]
        %v1262 = vld [vmem:[%s5 + $0x58] sm:$0xff]
        %v1263 = vld [vmem:[%s5 + $0x60] sm:$0xff]
        %v1264 = vld [vmem:[%s5 + $0x68] sm:$0xff]
        %v1265 = vld [vmem:[%s5 + $0x70] sm:$0xff]
        %v1266 = vld [vmem:[%s5 + $0x78] sm:$0xff]
        %v1267 = vld [vmem:[%s5 + $0x80] sm:$0xff]
        %v1268 = vld [vmem:[%s5 + $0x88] sm:$0xff]
        %v1269 = vld [vmem:[%s5 + $0x90] sm:$0xff]
        %v1270 = vld [vmem:[%s5 + $0x98] sm:$0xff]
        %v1271 = vld [vmem:[%s5 + $0xa0] sm:$0xff]
        %v1272 = vld [vmem:[%s5 + $0xa8] sm:$0xff]
        %v1273 = vld [vmem:[%s5 + $0xb0] sm:$0xff]
        %v1274 = vld [vmem:[%s5 + $0xb8] sm:$0xff]
        %v1275 = vld [vmem:[%s5 + $0xc0] sm:$0xff]
        %v1276 = vld [vmem:[%s5 + $0xc8] sm:$0xff]
        %v1277 = vld [vmem:[%s5 + $0xd0] sm:$0xff]
        %v1278 = vld [vmem:[%s5 + $0xd8] sm:$0xff]
        %v1279 = vld [vmem:[%s5 + $0xe0] sm:$0xff]
        %v1280 = vld [vmem:[%s5 + $0xe8] sm:$0xff]
        %v1281 = vld [vmem:[%s5 + $0xf0] sm:$0xff]
        %v1282 = vld [vmem:[%s5 + $0xf8] sm:$0xff]
        %v1283 = vpack.c.bf16 %v1189, %v1187
        %v1284 = vpack.c.bf16 %v1190, %v1188
        %v1285 = vpack.c.bf16 %v1193, %v1191
        %v1286 = vpack.c.bf16 %v1194, %v1192
        %v1287 = vpack.c.bf16 %v1197, %v1195
        %v1288 = vpack.c.bf16 %v1198, %v1196
        %v1289 = vpack.c.bf16 %v1201, %v1199
        %v1290 = vpack.c.bf16 %v1202, %v1200
        %v1291 = vpack.c.bf16 %v1205, %v1203
        %v1292 = vpack.c.bf16 %v1206, %v1204
        %v1293 = vpack.c.bf16 %v1209, %v1207
        %v1294 = vpack.c.bf16 %v1210, %v1208
        %v1295 = vpack.c.bf16 %v1213, %v1211
        %v1296 = vpack.c.bf16 %v1214, %v1212
        %v1297 = vpack.c.bf16 %v1217, %v1215
        %v1298 = vpack.c.bf16 %v1218, %v1216
        %v1299 = vpack.c.bf16 %v1221, %v1219
        %v1300 = vpack.c.bf16 %v1222, %v1220
        %v1301 = vpack.c.bf16 %v1225, %v1223
        %v1302 = vpack.c.bf16 %v1226, %v1224
        %v1303 = vpack.c.bf16 %v1229, %v1227
        %v1304 = vpack.c.bf16 %v1230, %v1228
        %v1305 = vpack.c.bf16 %v1233, %v1231
        %v1306 = vpack.c.bf16 %v1234, %v1232
        %v1307 = vpack.c.bf16 %v1237, %v1235
        %v1308 = vpack.c.bf16 %v1238, %v1236
        %v1309 = vpack.c.bf16 %v1241, %v1239
        %v1310 = vpack.c.bf16 %v1242, %v1240
        %v1311 = vpack.c.bf16 %v1245, %v1243
        %v1312 = vpack.c.bf16 %v1246, %v1244
        %v1313 = vpack.c.bf16 %v1249, %v1247
        %v1314 = vpack.c.bf16 %v1250, %v1248
        %v1315 = vld [vmem:[%s6] sm:$0xff]
        %v1316 = vld [vmem:[%s6 + $0x8] sm:$0xff]
        %v1317 = vld [vmem:[%s6 + $0x10] sm:$0xff]
        %v1318 = vld [vmem:[%s6 + $0x18] sm:$0xff]
        %v1319 = vld [vmem:[%s6 + $0x20] sm:$0xff]
        %v1320 = vld [vmem:[%s6 + $0x28] sm:$0xff]
        %v1321 = vld [vmem:[%s6 + $0x30] sm:$0xff]
        %v1322 = vld [vmem:[%s6 + $0x38] sm:$0xff]
        %v1323 = vld [vmem:[%s6 + $0x40] sm:$0xff]
        %v1324 = vld [vmem:[%s6 + $0x48] sm:$0xff]
        %v1325 = vld [vmem:[%s6 + $0x50] sm:$0xff]
        %v1326 = vld [vmem:[%s6 + $0x58] sm:$0xff]
        %v1327 = vld [vmem:[%s6 + $0x60] sm:$0xff]
        %v1328 = vld [vmem:[%s6 + $0x68] sm:$0xff]
        %v1329 = vld [vmem:[%s6 + $0x70] sm:$0xff]
        %v1330 = vld [vmem:[%s6 + $0x78] sm:$0xff]
        %v1331 = vld [vmem:[%s6 + $0x80] sm:$0xff]
        %v1332 = vld [vmem:[%s6 + $0x88] sm:$0xff]
        %v1333 = vld [vmem:[%s6 + $0x90] sm:$0xff]
        %v1334 = vld [vmem:[%s6 + $0x98] sm:$0xff]
        %v1335 = vld [vmem:[%s6 + $0xa0] sm:$0xff]
        %v1336 = vld [vmem:[%s6 + $0xa8] sm:$0xff]
        %v1337 = vld [vmem:[%s6 + $0xb0] sm:$0xff]
        %v1338 = vld [vmem:[%s6 + $0xb8] sm:$0xff]
        %v1339 = vld [vmem:[%s6 + $0xc0] sm:$0xff]
        %v1340 = vld [vmem:[%s6 + $0xc8] sm:$0xff]
        %v1341 = vld [vmem:[%s6 + $0xd0] sm:$0xff]
        %v1342 = vld [vmem:[%s6 + $0xd8] sm:$0xff]
        %v1343 = vld [vmem:[%s6 + $0xe0] sm:$0xff]
        %v1344 = vld [vmem:[%s6 + $0xe8] sm:$0xff]
        %v1345 = vld [vmem:[%s6 + $0xf0] sm:$0xff]
        %v1346 = vld [vmem:[%s6 + $0xf8] sm:$0xff]
        %1348 = vset.pattern.permute.xlu0 0
        %1349 = vperm.xlu0 %1348, %v1315
        %v1350 = vpop.permute.xlu0 %1349
        %1353 = vset.pattern.permute.xlu0 0
        %1354 = vperm.xlu0 %1353, %v1316
        %v1355 = vpop.permute.xlu0 %1354
        %1358 = vset.pattern.permute.xlu0 0
        %1359 = vperm.xlu0 %1358, %v1317
        %v1360 = vpop.permute.xlu0 %1359
        %1363 = vset.pattern.permute.xlu0 0
        %1364 = vperm.xlu0 %1363, %v1318
        %v1365 = vpop.permute.xlu0 %1364
        %1368 = vset.pattern.permute.xlu0 0
        %1369 = vperm.xlu0 %1368, %v1319
        %v1370 = vpop.permute.xlu0 %1369
        %1373 = vset.pattern.permute.xlu0 0
        %1374 = vperm.xlu0 %1373, %v1320
        %v1375 = vpop.permute.xlu0 %1374
        %1378 = vset.pattern.permute.xlu0 0
        %1379 = vperm.xlu0 %1378, %v1321
        %v1380 = vpop.permute.xlu0 %1379
        %1383 = vset.pattern.permute.xlu0 0
        %1384 = vperm.xlu0 %1383, %v1322
        %v1385 = vpop.permute.xlu0 %1384
        %1388 = vset.pattern.permute.xlu0 0
        %1389 = vperm.xlu0 %1388, %v1323
        %v1390 = vpop.permute.xlu0 %1389
        %1393 = vset.pattern.permute.xlu0 0
        %1394 = vperm.xlu0 %1393, %v1324
        %v1395 = vpop.permute.xlu0 %1394
        %1398 = vset.pattern.permute.xlu0 0
        %1399 = vperm.xlu0 %1398, %v1325
        %v1400 = vpop.permute.xlu0 %1399
        %1403 = vset.pattern.permute.xlu0 0
        %1404 = vperm.xlu0 %1403, %v1326
        %v1405 = vpop.permute.xlu0 %1404
        %1408 = vset.pattern.permute.xlu0 0
        %1409 = vperm.xlu0 %1408, %v1327
        %v1410 = vpop.permute.xlu0 %1409
        %1413 = vset.pattern.permute.xlu0 0
        %1414 = vperm.xlu0 %1413, %v1328
        %v1415 = vpop.permute.xlu0 %1414
        %1418 = vset.pattern.permute.xlu0 0
        %1419 = vperm.xlu0 %1418, %v1329
        %v1420 = vpop.permute.xlu0 %1419
        %1423 = vset.pattern.permute.xlu0 0
        %1424 = vperm.xlu0 %1423, %v1330
        %v1425 = vpop.permute.xlu0 %1424
        %1428 = vset.pattern.permute.xlu0 0
        %1429 = vperm.xlu0 %1428, %v1331
        %v1430 = vpop.permute.xlu0 %1429
        %1433 = vset.pattern.permute.xlu0 0
        %1434 = vperm.xlu0 %1433, %v1332
        %v1435 = vpop.permute.xlu0 %1434
        %1438 = vset.pattern.permute.xlu0 0
        %1439 = vperm.xlu0 %1438, %v1333
        %v1440 = vpop.permute.xlu0 %1439
        %1443 = vset.pattern.permute.xlu0 0
        %1444 = vperm.xlu0 %1443, %v1334
        %v1445 = vpop.permute.xlu0 %1444
        %1448 = vset.pattern.permute.xlu0 0
        %1449 = vperm.xlu0 %1448, %v1335
        %v1450 = vpop.permute.xlu0 %1449
        %1453 = vset.pattern.permute.xlu0 0
        %1454 = vperm.xlu0 %1453, %v1336
        %v1455 = vpop.permute.xlu0 %1454
        %1458 = vset.pattern.permute.xlu0 0
        %1459 = vperm.xlu0 %1458, %v1337
        %v1460 = vpop.permute.xlu0 %1459
        %1463 = vset.pattern.permute.xlu0 0
        %1464 = vperm.xlu0 %1463, %v1338
        %v1465 = vpop.permute.xlu0 %1464
        %1468 = vset.pattern.permute.xlu0 0
        %1469 = vperm.xlu0 %1468, %v1339
        %v1470 = vpop.permute.xlu0 %1469
        %1473 = vset.pattern.permute.xlu0 0
        %1474 = vperm.xlu0 %1473, %v1340
        %v1475 = vpop.permute.xlu0 %1474
        %1478 = vset.pattern.permute.xlu0 0
        %1479 = vperm.xlu0 %1478, %v1341
        %v1480 = vpop.permute.xlu0 %1479
        %1483 = vset.pattern.permute.xlu0 0
        %1484 = vperm.xlu0 %1483, %v1342
        %v1485 = vpop.permute.xlu0 %1484
        %1488 = vset.pattern.permute.xlu0 0
        %1489 = vperm.xlu0 %1488, %v1343
        %v1490 = vpop.permute.xlu0 %1489
        %1493 = vset.pattern.permute.xlu0 0
        %1494 = vperm.xlu0 %1493, %v1344
        %v1495 = vpop.permute.xlu0 %1494
        %1498 = vset.pattern.permute.xlu0 0
        %1499 = vperm.xlu0 %1498, %v1345
        %v1500 = vpop.permute.xlu0 %1499
        %1503 = vset.pattern.permute.xlu0 0
        %1504 = vperm.xlu0 %1503, %v1346
        %v1505 = vpop.permute.xlu0 %1504
        %v1539 = vunpack.c.l.b16 %v1251
        %v1540 = vunpack.c.h.b16 %v1251
        %v1541 = vunpack.c.l.b16 %v1252
        %v1542 = vunpack.c.h.b16 %v1252
        %v1543 = vunpack.c.l.b16 %v1253
        %v1544 = vunpack.c.h.b16 %v1253
        %v1545 = vunpack.c.l.b16 %v1254
        %v1546 = vunpack.c.h.b16 %v1254
        %v1547 = vunpack.c.l.b16 %v1255
        %v1548 = vunpack.c.h.b16 %v1255
        %v1549 = vunpack.c.l.b16 %v1256
        %v1550 = vunpack.c.h.b16 %v1256
        %v1551 = vunpack.c.l.b16 %v1257
        %v1552 = vunpack.c.h.b16 %v1257
        %v1553 = vunpack.c.l.b16 %v1258
        %v1554 = vunpack.c.h.b16 %v1258
        %v1555 = vunpack.c.l.b16 %v1259
        %v1556 = vunpack.c.h.b16 %v1259
        %v1557 = vunpack.c.l.b16 %v1260
        %v1558 = vunpack.c.h.b16 %v1260
        %v1559 = vunpack.c.l.b16 %v1261
        %v1560 = vunpack.c.h.b16 %v1261
        %v1561 = vunpack.c.l.b16 %v1262
        %v1562 = vunpack.c.h.b16 %v1262
        %v1563 = vunpack.c.l.b16 %v1263
        %v1564 = vunpack.c.h.b16 %v1263
        %v1565 = vunpack.c.l.b16 %v1264
        %v1566 = vunpack.c.h.b16 %v1264
        %v1567 = vunpack.c.l.b16 %v1265
        %v1568 = vunpack.c.h.b16 %v1265
        %v1569 = vunpack.c.l.b16 %v1266
        %v1570 = vunpack.c.h.b16 %v1266
        %v1571 = vunpack.c.l.b16 %v1267
        %v1572 = vunpack.c.h.b16 %v1267
        %v1573 = vunpack.c.l.b16 %v1268
        %v1574 = vunpack.c.h.b16 %v1268
        %v1575 = vunpack.c.l.b16 %v1269
        %v1576 = vunpack.c.h.b16 %v1269
        %v1577 = vunpack.c.l.b16 %v1270
        %v1578 = vunpack.c.h.b16 %v1270
        %v1579 = vunpack.c.l.b16 %v1271
        %v1580 = vunpack.c.h.b16 %v1271
        %v1581 = vunpack.c.l.b16 %v1272
        %v1582 = vunpack.c.h.b16 %v1272
        %v1583 = vunpack.c.l.b16 %v1273
        %v1584 = vunpack.c.h.b16 %v1273
        %v1585 = vunpack.c.l.b16 %v1274
        %v1586 = vunpack.c.h.b16 %v1274
        %v1587 = vunpack.c.l.b16 %v1275
        %v1588 = vunpack.c.h.b16 %v1275
        %v1589 = vunpack.c.l.b16 %v1276
        %v1590 = vunpack.c.h.b16 %v1276
        %v1591 = vunpack.c.l.b16 %v1277
        %v1592 = vunpack.c.h.b16 %v1277
        %v1593 = vunpack.c.l.b16 %v1278
        %v1594 = vunpack.c.h.b16 %v1278
        %v1595 = vunpack.c.l.b16 %v1279
        %v1596 = vunpack.c.h.b16 %v1279
        %v1597 = vunpack.c.l.b16 %v1280
        %v1598 = vunpack.c.h.b16 %v1280
        %v1599 = vunpack.c.l.b16 %v1281
        %v1600 = vunpack.c.h.b16 %v1281
        %v1601 = vunpack.c.l.b16 %v1282
        %v1602 = vunpack.c.h.b16 %v1282
        %v1603 = vpack.c.b16 %v1541, %v1539
        %v1604 = vpack.c.b16 %v1542, %v1540
        %v1605 = vpack.c.b16 %v1545, %v1543
        %v1606 = vpack.c.b16 %v1546, %v1544
        %v1607 = vpack.c.b16 %v1549, %v1547
        %v1608 = vpack.c.b16 %v1550, %v1548
        %v1609 = vpack.c.b16 %v1553, %v1551
        %v1610 = vpack.c.b16 %v1554, %v1552
        %v1611 = vpack.c.b16 %v1557, %v1555
        %v1612 = vpack.c.b16 %v1558, %v1556
        %v1613 = vpack.c.b16 %v1561, %v1559
        %v1614 = vpack.c.b16 %v1562, %v1560
        %v1615 = vpack.c.b16 %v1565, %v1563
        %v1616 = vpack.c.b16 %v1566, %v1564
        %v1617 = vpack.c.b16 %v1569, %v1567
        %v1618 = vpack.c.b16 %v1570, %v1568
        %v1619 = vpack.c.b16 %v1573, %v1571
        %v1620 = vpack.c.b16 %v1574, %v1572
        %v1621 = vpack.c.b16 %v1577, %v1575
        %v1622 = vpack.c.b16 %v1578, %v1576
        %v1623 = vpack.c.b16 %v1581, %v1579
        %v1624 = vpack.c.b16 %v1582, %v1580
        %v1625 = vpack.c.b16 %v1585, %v1583
        %v1626 = vpack.c.b16 %v1586, %v1584
        %v1627 = vpack.c.b16 %v1589, %v1587
        %v1628 = vpack.c.b16 %v1590, %v1588
        %v1629 = vpack.c.b16 %v1593, %v1591
        %v1630 = vpack.c.b16 %v1594, %v1592
        %v1631 = vpack.c.b16 %v1597, %v1595
        %v1632 = vpack.c.b16 %v1598, %v1596
        %v1633 = vpack.c.b16 %v1601, %v1599
        %v1634 = vpack.c.b16 %v1602, %v1600
        %1667 = vmatpush.bf16.msra.mxu0 %v1297
        %1668 = vmatpush.bf16.msra.mxu0 %v1295
        %1669 = vmatpush.bf16.msra.mxu0 %v1293
        %1670 = vmatpush.bf16.msra.mxu0 %v1291
        %1671 = vmatpush.bf16.msra.mxu0 %v1289
        %1672 = vmatpush.bf16.msra.mxu0 %v1287
        %1673 = vmatpush.bf16.msra.mxu0 %v1285
        %1674 = vmatpush.bf16.msra.mxu0 %v1283
        %1675 = vmatmul.bf16.gmra.mxu0 %v1603
        %v1676 = vpop.f32.mrf.mxu0
        %v1677 = vadd.f32 %v1350, %v1676
        %v1678 = vpop.f32.mrf.mxu0
        %v1679 = vadd.f32 %v1355, %v1678
        %1680 = vmatmul.bf16.gmra.mxu0 %v1605
        %v1681 = vpop.f32.mrf.mxu0
        %v1682 = vadd.f32 %v1360, %v1681
        %v1683 = vpop.f32.mrf.mxu0
        %v1684 = vadd.f32 %v1365, %v1683
        %1685 = vmatmul.bf16.gmra.mxu0 %v1607
        %v1686 = vpop.f32.mrf.mxu0
        %v1687 = vadd.f32 %v1370, %v1686
        %v1688 = vpop.f32.mrf.mxu0
        %v1689 = vadd.f32 %v1375, %v1688
        %1690 = vmatmul.bf16.gmra.mxu0 %v1609
        %v1691 = vpop.f32.mrf.mxu0
        %v1692 = vadd.f32 %v1380, %v1691
        %v1693 = vpop.f32.mrf.mxu0
        %v1694 = vadd.f32 %v1385, %v1693
        %1695 = vmatmul.bf16.gmra.mxu0 %v1611
        %v1696 = vpop.f32.mrf.mxu0
        %v1697 = vadd.f32 %v1390, %v1696
        %v1698 = vpop.f32.mrf.mxu0
        %v1699 = vadd.f32 %v1395, %v1698
        %1700 = vmatmul.bf16.gmra.mxu0 %v1613
        %v1701 = vpop.f32.mrf.mxu0
        %v1702 = vadd.f32 %v1400, %v1701
        %v1703 = vpop.f32.mrf.mxu0
        %v1704 = vadd.f32 %v1405, %v1703
        %1705 = vmatmul.bf16.gmra.mxu0 %v1615
        %v1706 = vpop.f32.mrf.mxu0
        %v1707 = vadd.f32 %v1410, %v1706
        %v1708 = vpop.f32.mrf.mxu0
        %v1709 = vadd.f32 %v1415, %v1708
        %1710 = vmatmul.bf16.gmra.mxu0 %v1617
        %v1711 = vpop.f32.mrf.mxu0
        %v1712 = vadd.f32 %v1420, %v1711
        %v1713 = vpop.f32.mrf.mxu0
        %v1714 = vadd.f32 %v1425, %v1713
        %1715 = vmatmul.bf16.gmra.mxu0 %v1619
        %v1716 = vpop.f32.mrf.mxu0
        %v1717 = vadd.f32 %v1430, %v1716
        %v1718 = vpop.f32.mrf.mxu0
        %v1719 = vadd.f32 %v1435, %v1718
        %1720 = vmatmul.bf16.gmra.mxu0 %v1621
        %v1721 = vpop.f32.mrf.mxu0
        %v1722 = vadd.f32 %v1440, %v1721
        %v1723 = vpop.f32.mrf.mxu0
        %v1724 = vadd.f32 %v1445, %v1723
        %1725 = vmatmul.bf16.gmra.mxu0 %v1623
        %v1726 = vpop.f32.mrf.mxu0
        %v1727 = vadd.f32 %v1450, %v1726
        %v1728 = vpop.f32.mrf.mxu0
        %v1729 = vadd.f32 %v1455, %v1728
        %1730 = vmatmul.bf16.gmra.mxu0 %v1625
        %v1731 = vpop.f32.mrf.mxu0
        %v1732 = vadd.f32 %v1460, %v1731
        %v1733 = vpop.f32.mrf.mxu0
        %v1734 = vadd.f32 %v1465, %v1733
        %1735 = vmatmul.bf16.gmra.mxu0 %v1627
        %v1736 = vpop.f32.mrf.mxu0
        %v1737 = vadd.f32 %v1470, %v1736
        %v1738 = vpop.f32.mrf.mxu0
        %v1739 = vadd.f32 %v1475, %v1738
        %1740 = vmatmul.bf16.gmra.mxu0 %v1629
        %v1741 = vpop.f32.mrf.mxu0
        %v1742 = vadd.f32 %v1480, %v1741
        %v1743 = vpop.f32.mrf.mxu0
        %v1744 = vadd.f32 %v1485, %v1743
        %1745 = vmatmul.bf16.gmra.mxu0 %v1631
        %v1746 = vpop.f32.mrf.mxu0
        %v1747 = vadd.f32 %v1490, %v1746
        %v1748 = vpop.f32.mrf.mxu0
        %v1749 = vadd.f32 %v1495, %v1748
        %1750 = vmatmul.bf16.gmra.mxu0 %v1633
        %v1751 = vpop.f32.mrf.mxu0
        %v1752 = vadd.f32 %v1500, %v1751
        %v1753 = vpop.f32.mrf.mxu0
        %v1754 = vadd.f32 %v1505, %v1753
        %1755 = vdwg.mxu0
        %1756 = vmatpush.bf16.msra.mxu0 %v1313
        %1757 = vmatpush.bf16.msra.mxu0 %v1311
        %1758 = vmatpush.bf16.msra.mxu0 %v1309
        %1759 = vmatpush.bf16.msra.mxu0 %v1307
        %1760 = vmatpush.bf16.msra.mxu0 %v1305
        %1761 = vmatpush.bf16.msra.mxu0 %v1303
        %1762 = vmatpush.bf16.msra.mxu0 %v1301
        %1763 = vmatpush.bf16.msra.mxu0 %v1299
        %1764 = vmatmul.bf16.gmra.mxu0 %v1604
        %v1765 = vpop.f32.mrf.mxu0
        %v1766 = vadd.f32 %v1677, %v1765
        %v1767 = vpop.f32.mrf.mxu0
        %v1768 = vadd.f32 %v1679, %v1767
        %1769 = vmatmul.bf16.gmra.mxu0 %v1606
        %v1770 = vpop.f32.mrf.mxu0
        %v1771 = vadd.f32 %v1682, %v1770
        %v1772 = vpop.f32.mrf.mxu0
        %v1773 = vadd.f32 %v1684, %v1772
        %1774 = vmatmul.bf16.gmra.mxu0 %v1608
        %v1775 = vpop.f32.mrf.mxu0
        %v1776 = vadd.f32 %v1687, %v1775
        %v1777 = vpop.f32.mrf.mxu0
        %v1778 = vadd.f32 %v1689, %v1777
        %1779 = vmatmul.bf16.gmra.mxu0 %v1610
        %v1780 = vpop.f32.mrf.mxu0
        %v1781 = vadd.f32 %v1692, %v1780
        %v1782 = vpop.f32.mrf.mxu0
        %v1783 = vadd.f32 %v1694, %v1782
        %1784 = vmatmul.bf16.gmra.mxu0 %v1612
        %v1785 = vpop.f32.mrf.mxu0
        %v1786 = vadd.f32 %v1697, %v1785
        %v1787 = vpop.f32.mrf.mxu0
        %v1788 = vadd.f32 %v1699, %v1787
        %1789 = vmatmul.bf16.gmra.mxu0 %v1614
        %v1790 = vpop.f32.mrf.mxu0
        %v1791 = vadd.f32 %v1702, %v1790
        %v1792 = vpop.f32.mrf.mxu0
        %v1793 = vadd.f32 %v1704, %v1792
        %1794 = vmatmul.bf16.gmra.mxu0 %v1616
        %v1795 = vpop.f32.mrf.mxu0
        %v1796 = vadd.f32 %v1707, %v1795
        %v1797 = vpop.f32.mrf.mxu0
        %v1798 = vadd.f32 %v1709, %v1797
        %1799 = vmatmul.bf16.gmra.mxu0 %v1618
        %v1800 = vpop.f32.mrf.mxu0
        %v1801 = vadd.f32 %v1712, %v1800
        %v1802 = vpop.f32.mrf.mxu0
        %v1803 = vadd.f32 %v1714, %v1802
        %1804 = vmatmul.bf16.gmra.mxu0 %v1620
        %v1805 = vpop.f32.mrf.mxu0
        %v1806 = vadd.f32 %v1717, %v1805
        %v1807 = vpop.f32.mrf.mxu0
        %v1808 = vadd.f32 %v1719, %v1807
        %1809 = vmatmul.bf16.gmra.mxu0 %v1622
        %v1810 = vpop.f32.mrf.mxu0
        %v1811 = vadd.f32 %v1722, %v1810
        %v1812 = vpop.f32.mrf.mxu0
        %v1813 = vadd.f32 %v1724, %v1812
        %1814 = vmatmul.bf16.gmra.mxu0 %v1624
        %v1815 = vpop.f32.mrf.mxu0
        %v1816 = vadd.f32 %v1727, %v1815
        %v1817 = vpop.f32.mrf.mxu0
        %v1818 = vadd.f32 %v1729, %v1817
        %1819 = vmatmul.bf16.gmra.mxu0 %v1626
        %v1820 = vpop.f32.mrf.mxu0
        %v1821 = vadd.f32 %v1732, %v1820
        %v1822 = vpop.f32.mrf.mxu0
        %v1823 = vadd.f32 %v1734, %v1822
        %1824 = vmatmul.bf16.gmra.mxu0 %v1628
        %v1825 = vpop.f32.mrf.mxu0
        %v1826 = vadd.f32 %v1737, %v1825
        %v1827 = vpop.f32.mrf.mxu0
        %v1828 = vadd.f32 %v1739, %v1827
        %1829 = vmatmul.bf16.gmra.mxu0 %v1630
        %v1830 = vpop.f32.mrf.mxu0
        %v1831 = vadd.f32 %v1742, %v1830
        %v1832 = vpop.f32.mrf.mxu0
        %v1833 = vadd.f32 %v1744, %v1832
        %1834 = vmatmul.bf16.gmra.mxu0 %v1632
        %v1835 = vpop.f32.mrf.mxu0
        %v1836 = vadd.f32 %v1747, %v1835
        %v1837 = vpop.f32.mrf.mxu0
        %v1838 = vadd.f32 %v1749, %v1837
        %1839 = vmatmul.bf16.gmra.mxu0 %v1634
        %v1840 = vpop.f32.mrf.mxu0
        %v1841 = vadd.f32 %v1752, %v1840
        %v1842 = vpop.f32.mrf.mxu0
        %v1843 = vadd.f32 %v1754, %v1842
        %1844 = vdwg.mxu0
        %1845 = vmatpush.bf16.msra.mxu0 %v1298
        %1846 = vmatpush.bf16.msra.mxu0 %v1296
        %1847 = vmatpush.bf16.msra.mxu0 %v1294
        %1848 = vmatpush.bf16.msra.mxu0 %v1292
        %1849 = vmatpush.bf16.msra.mxu0 %v1290
        %1850 = vmatpush.bf16.msra.mxu0 %v1288
        %1851 = vmatpush.bf16.msra.mxu0 %v1286
        %1852 = vmatpush.bf16.msra.mxu0 %v1284
        %1853 = vmatmul.bf16.gmra.mxu0 %v1603
        %v1854 = vpop.f32.mrf.mxu0
        %v1855 = vadd.f32 %v1350, %v1854
        %v1856 = vpop.f32.mrf.mxu0
        %v1857 = vadd.f32 %v1355, %v1856
        %1858 = vmatmul.bf16.gmra.mxu0 %v1605
        %v1859 = vpop.f32.mrf.mxu0
        %v1860 = vadd.f32 %v1360, %v1859
        %v1861 = vpop.f32.mrf.mxu0
        %v1862 = vadd.f32 %v1365, %v1861
        %1863 = vmatmul.bf16.gmra.mxu0 %v1607
        %v1864 = vpop.f32.mrf.mxu0
        %v1865 = vadd.f32 %v1370, %v1864
        %v1866 = vpop.f32.mrf.mxu0
        %v1867 = vadd.f32 %v1375, %v1866
        %1868 = vmatmul.bf16.gmra.mxu0 %v1609
        %v1869 = vpop.f32.mrf.mxu0
        %v1870 = vadd.f32 %v1380, %v1869
        %v1871 = vpop.f32.mrf.mxu0
        %v1872 = vadd.f32 %v1385, %v1871
        %1873 = vmatmul.bf16.gmra.mxu0 %v1611
        %v1874 = vpop.f32.mrf.mxu0
        %v1875 = vadd.f32 %v1390, %v1874
        %v1876 = vpop.f32.mrf.mxu0
        %v1877 = vadd.f32 %v1395, %v1876
        %1878 = vmatmul.bf16.gmra.mxu0 %v1613
        %v1879 = vpop.f32.mrf.mxu0
        %v1880 = vadd.f32 %v1400, %v1879
        %v1881 = vpop.f32.mrf.mxu0
        %v1882 = vadd.f32 %v1405, %v1881
        %1883 = vmatmul.bf16.gmra.mxu0 %v1615
        %v1884 = vpop.f32.mrf.mxu0
        %v1885 = vadd.f32 %v1410, %v1884
        %v1886 = vpop.f32.mrf.mxu0
        %v1887 = vadd.f32 %v1415, %v1886
        %1888 = vmatmul.bf16.gmra.mxu0 %v1617
        %v1889 = vpop.f32.mrf.mxu0
        %v1890 = vadd.f32 %v1420, %v1889
        %v1891 = vpop.f32.mrf.mxu0
        %v1892 = vadd.f32 %v1425, %v1891
        %1893 = vmatmul.bf16.gmra.mxu0 %v1619
        %v1894 = vpop.f32.mrf.mxu0
        %v1895 = vadd.f32 %v1430, %v1894
        %v1896 = vpop.f32.mrf.mxu0
        %v1897 = vadd.f32 %v1435, %v1896
        %1898 = vmatmul.bf16.gmra.mxu0 %v1621
        %v1899 = vpop.f32.mrf.mxu0
        %v1900 = vadd.f32 %v1440, %v1899
        %v1901 = vpop.f32.mrf.mxu0
        %v1902 = vadd.f32 %v1445, %v1901
        %1903 = vmatmul.bf16.gmra.mxu0 %v1623
        %v1904 = vpop.f32.mrf.mxu0
        %v1905 = vadd.f32 %v1450, %v1904
        %v1906 = vpop.f32.mrf.mxu0
        %v1907 = vadd.f32 %v1455, %v1906
        %1908 = vmatmul.bf16.gmra.mxu0 %v1625
        %v1909 = vpop.f32.mrf.mxu0
        %v1910 = vadd.f32 %v1460, %v1909
        %v1911 = vpop.f32.mrf.mxu0
        %v1912 = vadd.f32 %v1465, %v1911
        %1913 = vmatmul.bf16.gmra.mxu0 %v1627
        %v1914 = vpop.f32.mrf.mxu0
        %v1915 = vadd.f32 %v1470, %v1914
        %v1916 = vpop.f32.mrf.mxu0
        %v1917 = vadd.f32 %v1475, %v1916
        %1918 = vmatmul.bf16.gmra.mxu0 %v1629
        %v1919 = vpop.f32.mrf.mxu0
        %v1920 = vadd.f32 %v1480, %v1919
        %v1921 = vpop.f32.mrf.mxu0
        %v1922 = vadd.f32 %v1485, %v1921
        %1923 = vmatmul.bf16.gmra.mxu0 %v1631
        %v1924 = vpop.f32.mrf.mxu0
        %v1925 = vadd.f32 %v1490, %v1924
        %v1926 = vpop.f32.mrf.mxu0
        %v1927 = vadd.f32 %v1495, %v1926
        %1928 = vmatmul.bf16.gmra.mxu0 %v1633
        %v1929 = vpop.f32.mrf.mxu0
        %v1930 = vadd.f32 %v1500, %v1929
        %v1931 = vpop.f32.mrf.mxu0
        %v1932 = vadd.f32 %v1505, %v1931
        %1933 = vdwg.mxu0
        %1934 = vmatpush.bf16.msra.mxu0 %v1314
        %1935 = vmatpush.bf16.msra.mxu0 %v1312
        %1936 = vmatpush.bf16.msra.mxu0 %v1310
        %1937 = vmatpush.bf16.msra.mxu0 %v1308
        %1938 = vmatpush.bf16.msra.mxu0 %v1306
        %1939 = vmatpush.bf16.msra.mxu0 %v1304
        %1940 = vmatpush.bf16.msra.mxu0 %v1302
        %1941 = vmatpush.bf16.msra.mxu0 %v1300
        %1942 = vmatmul.bf16.gmra.mxu0 %v1604
        %v1943 = vpop.f32.mrf.mxu0
        %v1944 = vadd.f32 %v1855, %v1943
        %v1945 = vpop.f32.mrf.mxu0
        %v1946 = vadd.f32 %v1857, %v1945
        %1947 = vmatmul.bf16.gmra.mxu0 %v1606
        %v1948 = vpop.f32.mrf.mxu0
        %v1949 = vadd.f32 %v1860, %v1948
        %v1950 = vpop.f32.mrf.mxu0
        %v1951 = vadd.f32 %v1862, %v1950
        %1952 = vmatmul.bf16.gmra.mxu0 %v1608
        %v1953 = vpop.f32.mrf.mxu0
        %v1954 = vadd.f32 %v1865, %v1953
        %v1955 = vpop.f32.mrf.mxu0
        %v1956 = vadd.f32 %v1867, %v1955
        %1957 = vmatmul.bf16.gmra.mxu0 %v1610
        %v1958 = vpop.f32.mrf.mxu0
        %v1959 = vadd.f32 %v1870, %v1958
        %v1960 = vpop.f32.mrf.mxu0
        %v1961 = vadd.f32 %v1872, %v1960
        %1962 = vmatmul.bf16.gmra.mxu0 %v1612
        %v1963 = vpop.f32.mrf.mxu0
        %v1964 = vadd.f32 %v1875, %v1963
        %v1965 = vpop.f32.mrf.mxu0
        %v1966 = vadd.f32 %v1877, %v1965
        %1967 = vmatmul.bf16.gmra.mxu0 %v1614
        %v1968 = vpop.f32.mrf.mxu0
        %v1969 = vadd.f32 %v1880, %v1968
        %v1970 = vpop.f32.mrf.mxu0
        %v1971 = vadd.f32 %v1882, %v1970
        %1972 = vmatmul.bf16.gmra.mxu0 %v1616
        %v1973 = vpop.f32.mrf.mxu0
        %v1974 = vadd.f32 %v1885, %v1973
        %v1975 = vpop.f32.mrf.mxu0
        %v1976 = vadd.f32 %v1887, %v1975
        %1977 = vmatmul.bf16.gmra.mxu0 %v1618
        %v1978 = vpop.f32.mrf.mxu0
        %v1979 = vadd.f32 %v1890, %v1978
        %v1980 = vpop.f32.mrf.mxu0
        %v1981 = vadd.f32 %v1892, %v1980
        %1982 = vmatmul.bf16.gmra.mxu0 %v1620
        %v1983 = vpop.f32.mrf.mxu0
        %v1984 = vadd.f32 %v1895, %v1983
        %v1985 = vpop.f32.mrf.mxu0
        %v1986 = vadd.f32 %v1897, %v1985
        %1987 = vmatmul.bf16.gmra.mxu0 %v1622
        %v1988 = vpop.f32.mrf.mxu0
        %v1989 = vadd.f32 %v1900, %v1988
        %v1990 = vpop.f32.mrf.mxu0
        %v1991 = vadd.f32 %v1902, %v1990
        %1992 = vmatmul.bf16.gmra.mxu0 %v1624
        %v1993 = vpop.f32.mrf.mxu0
        %v1994 = vadd.f32 %v1905, %v1993
        %v1995 = vpop.f32.mrf.mxu0
        %v1996 = vadd.f32 %v1907, %v1995
        %1997 = vmatmul.bf16.gmra.mxu0 %v1626
        %v1998 = vpop.f32.mrf.mxu0
        %v1999 = vadd.f32 %v1910, %v1998
        %v2000 = vpop.f32.mrf.mxu0
        %v2001 = vadd.f32 %v1912, %v2000
        %2002 = vmatmul.bf16.gmra.mxu0 %v1628
        %v2003 = vpop.f32.mrf.mxu0
        %v2004 = vadd.f32 %v1915, %v2003
        %v2005 = vpop.f32.mrf.mxu0
        %v2006 = vadd.f32 %v1917, %v2005
        %2007 = vmatmul.bf16.gmra.mxu0 %v1630
        %v2008 = vpop.f32.mrf.mxu0
        %v2009 = vadd.f32 %v1920, %v2008
        %v2010 = vpop.f32.mrf.mxu0
        %v2011 = vadd.f32 %v1922, %v2010
        %2012 = vmatmul.bf16.gmra.mxu0 %v1632
        %v2013 = vpop.f32.mrf.mxu0
        %v2014 = vadd.f32 %v1925, %v2013
        %v2015 = vpop.f32.mrf.mxu0
        %v2016 = vadd.f32 %v1927, %v2015
        %2017 = vmatmul.bf16.gmra.mxu0 %v1634
        %v2018 = vpop.f32.mrf.mxu0
        %v2019 = vadd.f32 %v1930, %v2018
        %v2020 = vpop.f32.mrf.mxu0
        %v2021 = vadd.f32 %v1932, %v2020
        %2022 = vdwg.mxu0
        %v2023 = vadd.f32 %v1187, %v1766
        %v2024 = vadd.f32 %v1188, %v1944
        %v2025 = vadd.f32 %v1189, %v1768
        %v2026 = vadd.f32 %v1190, %v1946
        %v2027 = vadd.f32 %v1191, %v1771
        %v2028 = vadd.f32 %v1192, %v1949
        %v2029 = vadd.f32 %v1193, %v1773
        %v2030 = vadd.f32 %v1194, %v1951
        %v2031 = vadd.f32 %v1195, %v1776
        %v2032 = vadd.f32 %v1196, %v1954
        %v2033 = vadd.f32 %v1197, %v1778
        %v2034 = vadd.f32 %v1198, %v1956
        %v2035 = vadd.f32 %v1199, %v1781
        %v2036 = vadd.f32 %v1200, %v1959
        %v2037 = vadd.f32 %v1201, %v1783
        %v2038 = vadd.f32 %v1202, %v1961
        %v2039 = vadd.f32 %v1203, %v1786
        %v2040 = vadd.f32 %v1204, %v1964
        %v2041 = vadd.f32 %v1205, %v1788
        %v2042 = vadd.f32 %v1206, %v1966
        %v2043 = vadd.f32 %v1207, %v1791
        %v2044 = vadd.f32 %v1208, %v1969
        %v2045 = vadd.f32 %v1209, %v1793
        %v2046 = vadd.f32 %v1210, %v1971
        %v2047 = vadd.f32 %v1211, %v1796
        %v2048 = vadd.f32 %v1212, %v1974
        %v2049 = vadd.f32 %v1213, %v1798
        %v2050 = vadd.f32 %v1214, %v1976
        %v2051 = vadd.f32 %v1215, %v1801
        %v2052 = vadd.f32 %v1216, %v1979
        %v2053 = vadd.f32 %v1217, %v1803
        %v2054 = vadd.f32 %v1218, %v1981
        %v2055 = vadd.f32 %v1219, %v1806
        %v2056 = vadd.f32 %v1220, %v1984
        %v2057 = vadd.f32 %v1221, %v1808
        %v2058 = vadd.f32 %v1222, %v1986
        %v2059 = vadd.f32 %v1223, %v1811
        %v2060 = vadd.f32 %v1224, %v1989
        %v2061 = vadd.f32 %v1225, %v1813
        %v2062 = vadd.f32 %v1226, %v1991
        %v2063 = vadd.f32 %v1227, %v1816
        %v2064 = vadd.f32 %v1228, %v1994
        %v2065 = vadd.f32 %v1229, %v1818
        %v2066 = vadd.f32 %v1230, %v1996
        %v2067 = vadd.f32 %v1231, %v1821
        %v2068 = vadd.f32 %v1232, %v1999
        %v2069 = vadd.f32 %v1233, %v1823
        %v2070 = vadd.f32 %v1234, %v2001
        %v2071 = vadd.f32 %v1235, %v1826
        %v2072 = vadd.f32 %v1236, %v2004
        %v2073 = vadd.f32 %v1237, %v1828
        %v2074 = vadd.f32 %v1238, %v2006
        %v2075 = vadd.f32 %v1239, %v1831
        %v2076 = vadd.f32 %v1240, %v2009
        %v2077 = vadd.f32 %v1241, %v1833
        %v2078 = vadd.f32 %v1242, %v2011
        %v2079 = vadd.f32 %v1243, %v1836
        %v2080 = vadd.f32 %v1244, %v2014
        %v2081 = vadd.f32 %v1245, %v1838
        %v2082 = vadd.f32 %v1246, %v2016
        %v2083 = vadd.f32 %v1247, %v1841
        %v2084 = vadd.f32 %v1248, %v2019
        %v2085 = vadd.f32 %v1249, %v1843
        %v2086 = vadd.f32 %v1250, %v2021
        %v2087 = vmul.f32 %v2023, 0.01
        %v2088 = vmul.f32 %v2024, 0.01
        %v2089 = vmul.f32 %v2025, 0.01
        %v2090 = vmul.f32 %v2026, 0.01
        %v2091 = vmul.f32 %v2027, 0.01
        %v2092 = vmul.f32 %v2028, 0.01
        %v2093 = vmul.f32 %v2029, 0.01
        %v2094 = vmul.f32 %v2030, 0.01
        %v2095 = vmul.f32 %v2031, 0.01
        %v2096 = vmul.f32 %v2032, 0.01
        %v2097 = vmul.f32 %v2033, 0.01
        %v2098 = vmul.f32 %v2034, 0.01
        %v2099 = vmul.f32 %v2035, 0.01
        %v2100 = vmul.f32 %v2036, 0.01
        %v2101 = vmul.f32 %v2037, 0.01
        %v2102 = vmul.f32 %v2038, 0.01
        %v2103 = vmul.f32 %v2039, 0.01
        %v2104 = vmul.f32 %v2040, 0.01
        %v2105 = vmul.f32 %v2041, 0.01
        %v2106 = vmul.f32 %v2042, 0.01
        %v2107 = vmul.f32 %v2043, 0.01
        %v2108 = vmul.f32 %v2044, 0.01
        %v2109 = vmul.f32 %v2045, 0.01
        %v2110 = vmul.f32 %v2046, 0.01
        %v2111 = vmul.f32 %v2047, 0.01
        %v2112 = vmul.f32 %v2048, 0.01
        %v2113 = vmul.f32 %v2049, 0.01
        %v2114 = vmul.f32 %v2050, 0.01
        %v2115 = vmul.f32 %v2051, 0.01
        %v2116 = vmul.f32 %v2052, 0.01
        %v2117 = vmul.f32 %v2053, 0.01
        %v2118 = vmul.f32 %v2054, 0.01
        %v2119 = vmul.f32 %v2055, 0.01
        %v2120 = vmul.f32 %v2056, 0.01
        %v2121 = vmul.f32 %v2057, 0.01
        %v2122 = vmul.f32 %v2058, 0.01
        %v2123 = vmul.f32 %v2059, 0.01
        %v2124 = vmul.f32 %v2060, 0.01
        %v2125 = vmul.f32 %v2061, 0.01
        %v2126 = vmul.f32 %v2062, 0.01
        %v2127 = vmul.f32 %v2063, 0.01
        %v2128 = vmul.f32 %v2064, 0.01
        %v2129 = vmul.f32 %v2065, 0.01
        %v2130 = vmul.f32 %v2066, 0.01
        %v2131 = vmul.f32 %v2067, 0.01
        %v2132 = vmul.f32 %v2068, 0.01
        %v2133 = vmul.f32 %v2069, 0.01
        %v2134 = vmul.f32 %v2070, 0.01
        %v2135 = vmul.f32 %v2071, 0.01
        %v2136 = vmul.f32 %v2072, 0.01
        %v2137 = vmul.f32 %v2073, 0.01
        %v2138 = vmul.f32 %v2074, 0.01
        %v2139 = vmul.f32 %v2075, 0.01
        %v2140 = vmul.f32 %v2076, 0.01
        %v2141 = vmul.f32 %v2077, 0.01
        %v2142 = vmul.f32 %v2078, 0.01
        %v2143 = vmul.f32 %v2079, 0.01
        %v2144 = vmul.f32 %v2080, 0.01
        %v2145 = vmul.f32 %v2081, 0.01
        %v2146 = vmul.f32 %v2082, 0.01
        %v2147 = vmul.f32 %v2083, 0.01
        %v2148 = vmul.f32 %v2084, 0.01
        %v2149 = vmul.f32 %v2085, 0.01
        %v2150 = vmul.f32 %v2086, 0.01
        %v2151 = vmax.f32 %v2023, %v2087
        %v2152 = vmax.f32 %v2024, %v2088
        %v2153 = vmax.f32 %v2025, %v2089
        %v2154 = vmax.f32 %v2026, %v2090
        %v2155 = vmax.f32 %v2027, %v2091
        %v2156 = vmax.f32 %v2028, %v2092
        %v2157 = vmax.f32 %v2029, %v2093
        %v2158 = vmax.f32 %v2030, %v2094
        %v2159 = vmax.f32 %v2031, %v2095
        %v2160 = vmax.f32 %v2032, %v2096
        %v2161 = vmax.f32 %v2033, %v2097
        %v2162 = vmax.f32 %v2034, %v2098
        %v2163 = vmax.f32 %v2035, %v2099
        %v2164 = vmax.f32 %v2036, %v2100
        %v2165 = vmax.f32 %v2037, %v2101
        %v2166 = vmax.f32 %v2038, %v2102
        %v2167 = vmax.f32 %v2039, %v2103
        %v2168 = vmax.f32 %v2040, %v2104
        %v2169 = vmax.f32 %v2041, %v2105
        %v2170 = vmax.f32 %v2042, %v2106
        %v2171 = vmax.f32 %v2043, %v2107
        %v2172 = vmax.f32 %v2044, %v2108
        %v2173 = vmax.f32 %v2045, %v2109
        %v2174 = vmax.f32 %v2046, %v2110
        %v2175 = vmax.f32 %v2047, %v2111
        %v2176 = vmax.f32 %v2048, %v2112
        %v2177 = vmax.f32 %v2049, %v2113
        %v2178 = vmax.f32 %v2050, %v2114
        %v2179 = vmax.f32 %v2051, %v2115
        %v2180 = vmax.f32 %v2052, %v2116
        %v2181 = vmax.f32 %v2053, %v2117
        %v2182 = vmax.f32 %v2054, %v2118
        %v2183 = vmax.f32 %v2055, %v2119
        %v2184 = vmax.f32 %v2056, %v2120
        %v2185 = vmax.f32 %v2057, %v2121
        %v2186 = vmax.f32 %v2058, %v2122
        %v2187 = vmax.f32 %v2059, %v2123
        %v2188 = vmax.f32 %v2060, %v2124
        %v2189 = vmax.f32 %v2061, %v2125
        %v2190 = vmax.f32 %v2062, %v2126
        %v2191 = vmax.f32 %v2063, %v2127
        %v2192 = vmax.f32 %v2064, %v2128
        %v2193 = vmax.f32 %v2065, %v2129
        %v2194 = vmax.f32 %v2066, %v2130
        %v2195 = vmax.f32 %v2067, %v2131
        %v2196 = vmax.f32 %v2068, %v2132
        %v2197 = vmax.f32 %v2069, %v2133
        %v2198 = vmax.f32 %v2070, %v2134
        %v2199 = vmax.f32 %v2071, %v2135
        %v2200 = vmax.f32 %v2072, %v2136
        %v2201 = vmax.f32 %v2073, %v2137
        %v2202 = vmax.f32 %v2074, %v2138
        %v2203 = vmax.f32 %v2075, %v2139
        %v2204 = vmax.f32 %v2076, %v2140
        %v2205 = vmax.f32 %v2077, %v2141
        %v2206 = vmax.f32 %v2078, %v2142
        %v2207 = vmax.f32 %v2079, %v2143
        %v2208 = vmax.f32 %v2080, %v2144
        %v2209 = vmax.f32 %v2081, %v2145
        %v2210 = vmax.f32 %v2082, %v2146
        %v2211 = vmax.f32 %v2083, %v2147
        %v2212 = vmax.f32 %v2084, %v2148
        %v2213 = vmax.f32 %v2085, %v2149
        %v2214 = vmax.f32 %v2086, %v2150
        %s2215 = scalar_lea.vmem %s5, 256
        %v2216 = vld [vmem:[%s2215] sm:$0xff]
        %v2217 = vld [vmem:[%s2215 + $0x8] sm:$0xff]
        %v2218 = vld [vmem:[%s2215 + $0x10] sm:$0xff]
        %v2219 = vld [vmem:[%s2215 + $0x18] sm:$0xff]
        %v2220 = vld [vmem:[%s2215 + $0x20] sm:$0xff]
        %v2221 = vld [vmem:[%s2215 + $0x28] sm:$0xff]
        %v2222 = vld [vmem:[%s2215 + $0x30] sm:$0xff]
        %v2223 = vld [vmem:[%s2215 + $0x38] sm:$0xff]
        %v2224 = vld [vmem:[%s2215 + $0x40] sm:$0xff]
        %v2225 = vld [vmem:[%s2215 + $0x48] sm:$0xff]
        %v2226 = vld [vmem:[%s2215 + $0x50] sm:$0xff]
        %v2227 = vld [vmem:[%s2215 + $0x58] sm:$0xff]
        %v2228 = vld [vmem:[%s2215 + $0x60] sm:$0xff]
        %v2229 = vld [vmem:[%s2215 + $0x68] sm:$0xff]
        %v2230 = vld [vmem:[%s2215 + $0x70] sm:$0xff]
        %v2231 = vld [vmem:[%s2215 + $0x78] sm:$0xff]
        %v2232 = vld [vmem:[%s2215 + $0x80] sm:$0xff]
        %v2233 = vld [vmem:[%s2215 + $0x88] sm:$0xff]
        %v2234 = vld [vmem:[%s2215 + $0x90] sm:$0xff]
        %v2235 = vld [vmem:[%s2215 + $0x98] sm:$0xff]
        %v2236 = vld [vmem:[%s2215 + $0xa0] sm:$0xff]
        %v2237 = vld [vmem:[%s2215 + $0xa8] sm:$0xff]
        %v2238 = vld [vmem:[%s2215 + $0xb0] sm:$0xff]
        %v2239 = vld [vmem:[%s2215 + $0xb8] sm:$0xff]
        %v2240 = vld [vmem:[%s2215 + $0xc0] sm:$0xff]
        %v2241 = vld [vmem:[%s2215 + $0xc8] sm:$0xff]
        %v2242 = vld [vmem:[%s2215 + $0xd0] sm:$0xff]
        %v2243 = vld [vmem:[%s2215 + $0xd8] sm:$0xff]
        %v2244 = vld [vmem:[%s2215 + $0xe0] sm:$0xff]
        %v2245 = vld [vmem:[%s2215 + $0xe8] sm:$0xff]
        %v2246 = vld [vmem:[%s2215 + $0xf0] sm:$0xff]
        %v2247 = vld [vmem:[%s2215 + $0xf8] sm:$0xff]
        %v2248 = vpack.c.bf16 %v2153, %v2151
        %v2249 = vpack.c.bf16 %v2154, %v2152
        %v2250 = vpack.c.bf16 %v2157, %v2155
        %v2251 = vpack.c.bf16 %v2158, %v2156
        %v2252 = vpack.c.bf16 %v2161, %v2159
        %v2253 = vpack.c.bf16 %v2162, %v2160
        %v2254 = vpack.c.bf16 %v2165, %v2163
        %v2255 = vpack.c.bf16 %v2166, %v2164
        %v2256 = vpack.c.bf16 %v2169, %v2167
        %v2257 = vpack.c.bf16 %v2170, %v2168
        %v2258 = vpack.c.bf16 %v2173, %v2171
        %v2259 = vpack.c.bf16 %v2174, %v2172
        %v2260 = vpack.c.bf16 %v2177, %v2175
        %v2261 = vpack.c.bf16 %v2178, %v2176
        %v2262 = vpack.c.bf16 %v2181, %v2179
        %v2263 = vpack.c.bf16 %v2182, %v2180
        %v2264 = vpack.c.bf16 %v2185, %v2183
        %v2265 = vpack.c.bf16 %v2186, %v2184
        %v2266 = vpack.c.bf16 %v2189, %v2187
        %v2267 = vpack.c.bf16 %v2190, %v2188
        %v2268 = vpack.c.bf16 %v2193, %v2191
        %v2269 = vpack.c.bf16 %v2194, %v2192
        %v2270 = vpack.c.bf16 %v2197, %v2195
        %v2271 = vpack.c.bf16 %v2198, %v2196
        %v2272 = vpack.c.bf16 %v2201, %v2199
        %v2273 = vpack.c.bf16 %v2202, %v2200
        %v2274 = vpack.c.bf16 %v2205, %v2203
        %v2275 = vpack.c.bf16 %v2206, %v2204
        %v2276 = vpack.c.bf16 %v2209, %v2207
        %v2277 = vpack.c.bf16 %v2210, %v2208
        %v2278 = vpack.c.bf16 %v2213, %v2211
        %v2279 = vpack.c.bf16 %v2214, %v2212
        %s2280 = scalar_lea.vmem %s6, 256
        %v2281 = vld [vmem:[%s2280] sm:$0xff]
        %v2282 = vld [vmem:[%s2280 + $0x8] sm:$0xff]
        %v2283 = vld [vmem:[%s2280 + $0x10] sm:$0xff]
        %v2284 = vld [vmem:[%s2280 + $0x18] sm:$0xff]
        %v2285 = vld [vmem:[%s2280 + $0x20] sm:$0xff]
        %v2286 = vld [vmem:[%s2280 + $0x28] sm:$0xff]
        %v2287 = vld [vmem:[%s2280 + $0x30] sm:$0xff]
        %v2288 = vld [vmem:[%s2280 + $0x38] sm:$0xff]
        %v2289 = vld [vmem:[%s2280 + $0x40] sm:$0xff]
        %v2290 = vld [vmem:[%s2280 + $0x48] sm:$0xff]
        %v2291 = vld [vmem:[%s2280 + $0x50] sm:$0xff]
        %v2292 = vld [vmem:[%s2280 + $0x58] sm:$0xff]
        %v2293 = vld [vmem:[%s2280 + $0x60] sm:$0xff]
        %v2294 = vld [vmem:[%s2280 + $0x68] sm:$0xff]
        %v2295 = vld [vmem:[%s2280 + $0x70] sm:$0xff]
        %v2296 = vld [vmem:[%s2280 + $0x78] sm:$0xff]
        %v2297 = vld [vmem:[%s2280 + $0x80] sm:$0xff]
        %v2298 = vld [vmem:[%s2280 + $0x88] sm:$0xff]
        %v2299 = vld [vmem:[%s2280 + $0x90] sm:$0xff]
        %v2300 = vld [vmem:[%s2280 + $0x98] sm:$0xff]
        %v2301 = vld [vmem:[%s2280 + $0xa0] sm:$0xff]
        %v2302 = vld [vmem:[%s2280 + $0xa8] sm:$0xff]
        %v2303 = vld [vmem:[%s2280 + $0xb0] sm:$0xff]
        %v2304 = vld [vmem:[%s2280 + $0xb8] sm:$0xff]
        %v2305 = vld [vmem:[%s2280 + $0xc0] sm:$0xff]
        %v2306 = vld [vmem:[%s2280 + $0xc8] sm:$0xff]
        %v2307 = vld [vmem:[%s2280 + $0xd0] sm:$0xff]
        %v2308 = vld [vmem:[%s2280 + $0xd8] sm:$0xff]
        %v2309 = vld [vmem:[%s2280 + $0xe0] sm:$0xff]
        %v2310 = vld [vmem:[%s2280 + $0xe8] sm:$0xff]
        %v2311 = vld [vmem:[%s2280 + $0xf0] sm:$0xff]
        %v2312 = vld [vmem:[%s2280 + $0xf8] sm:$0xff]
        %2314 = vset.pattern.permute.xlu0 0
        %2315 = vperm.xlu0 %2314, %v2281
        %v2316 = vpop.permute.xlu0 %2315
        %2319 = vset.pattern.permute.xlu0 0
        %2320 = vperm.xlu0 %2319, %v2282
        %v2321 = vpop.permute.xlu0 %2320
        %2324 = vset.pattern.permute.xlu0 0
        %2325 = vperm.xlu0 %2324, %v2283
        %v2326 = vpop.permute.xlu0 %2325
        %2329 = vset.pattern.permute.xlu0 0
        %2330 = vperm.xlu0 %2329, %v2284
        %v2331 = vpop.permute.xlu0 %2330
        %2334 = vset.pattern.permute.xlu0 0
        %2335 = vperm.xlu0 %2334, %v2285
        %v2336 = vpop.permute.xlu0 %2335
        %2339 = vset.pattern.permute.xlu0 0
        %2340 = vperm.xlu0 %2339, %v2286
        %v2341 = vpop.permute.xlu0 %2340
        %2344 = vset.pattern.permute.xlu0 0
        %2345 = vperm.xlu0 %2344, %v2287
        %v2346 = vpop.permute.xlu0 %2345
        %2349 = vset.pattern.permute.xlu0 0
        %2350 = vperm.xlu0 %2349, %v2288
        %v2351 = vpop.permute.xlu0 %2350
        %2354 = vset.pattern.permute.xlu0 0
        %2355 = vperm.xlu0 %2354, %v2289
        %v2356 = vpop.permute.xlu0 %2355
        %2359 = vset.pattern.permute.xlu0 0
        %2360 = vperm.xlu0 %2359, %v2290
        %v2361 = vpop.permute.xlu0 %2360
        %2364 = vset.pattern.permute.xlu0 0
        %2365 = vperm.xlu0 %2364, %v2291
        %v2366 = vpop.permute.xlu0 %2365
        %2369 = vset.pattern.permute.xlu0 0
        %2370 = vperm.xlu0 %2369, %v2292
        %v2371 = vpop.permute.xlu0 %2370
        %2374 = vset.pattern.permute.xlu0 0
        %2375 = vperm.xlu0 %2374, %v2293
        %v2376 = vpop.permute.xlu0 %2375
        %2379 = vset.pattern.permute.xlu0 0
        %2380 = vperm.xlu0 %2379, %v2294
        %v2381 = vpop.permute.xlu0 %2380
        %2384 = vset.pattern.permute.xlu0 0
        %2385 = vperm.xlu0 %2384, %v2295
        %v2386 = vpop.permute.xlu0 %2385
        %2389 = vset.pattern.permute.xlu0 0
        %2390 = vperm.xlu0 %2389, %v2296
        %v2391 = vpop.permute.xlu0 %2390
        %2394 = vset.pattern.permute.xlu0 0
        %2395 = vperm.xlu0 %2394, %v2297
        %v2396 = vpop.permute.xlu0 %2395
        %2399 = vset.pattern.permute.xlu0 0
        %2400 = vperm.xlu0 %2399, %v2298
        %v2401 = vpop.permute.xlu0 %2400
        %2404 = vset.pattern.permute.xlu0 0
        %2405 = vperm.xlu0 %2404, %v2299
        %v2406 = vpop.permute.xlu0 %2405
        %2409 = vset.pattern.permute.xlu0 0
        %2410 = vperm.xlu0 %2409, %v2300
        %v2411 = vpop.permute.xlu0 %2410
        %2414 = vset.pattern.permute.xlu0 0
        %2415 = vperm.xlu0 %2414, %v2301
        %v2416 = vpop.permute.xlu0 %2415
        %2419 = vset.pattern.permute.xlu0 0
        %2420 = vperm.xlu0 %2419, %v2302
        %v2421 = vpop.permute.xlu0 %2420
        %2424 = vset.pattern.permute.xlu0 0
        %2425 = vperm.xlu0 %2424, %v2303
        %v2426 = vpop.permute.xlu0 %2425
        %2429 = vset.pattern.permute.xlu0 0
        %2430 = vperm.xlu0 %2429, %v2304
        %v2431 = vpop.permute.xlu0 %2430
        %2434 = vset.pattern.permute.xlu0 0
        %2435 = vperm.xlu0 %2434, %v2305
        %v2436 = vpop.permute.xlu0 %2435
        %2439 = vset.pattern.permute.xlu0 0
        %2440 = vperm.xlu0 %2439, %v2306
        %v2441 = vpop.permute.xlu0 %2440
        %2444 = vset.pattern.permute.xlu0 0
        %2445 = vperm.xlu0 %2444, %v2307
        %v2446 = vpop.permute.xlu0 %2445
        %2449 = vset.pattern.permute.xlu0 0
        %2450 = vperm.xlu0 %2449, %v2308
        %v2451 = vpop.permute.xlu0 %2450
        %2454 = vset.pattern.permute.xlu0 0
        %2455 = vperm.xlu0 %2454, %v2309
        %v2456 = vpop.permute.xlu0 %2455
        %2459 = vset.pattern.permute.xlu0 0
        %2460 = vperm.xlu0 %2459, %v2310
        %v2461 = vpop.permute.xlu0 %2460
        %2464 = vset.pattern.permute.xlu0 0
        %2465 = vperm.xlu0 %2464, %v2311
        %v2466 = vpop.permute.xlu0 %2465
        %2469 = vset.pattern.permute.xlu0 0
        %2470 = vperm.xlu0 %2469, %v2312
        %v2471 = vpop.permute.xlu0 %2470
        %v2505 = vunpack.c.l.b16 %v2216
        %v2506 = vunpack.c.h.b16 %v2216
        %v2507 = vunpack.c.l.b16 %v2217
        %v2508 = vunpack.c.h.b16 %v2217
        %v2509 = vunpack.c.l.b16 %v2218
        %v2510 = vunpack.c.h.b16 %v2218
        %v2511 = vunpack.c.l.b16 %v2219
        %v2512 = vunpack.c.h.b16 %v2219
        %v2513 = vunpack.c.l.b16 %v2220
        %v2514 = vunpack.c.h.b16 %v2220
        %v2515 = vunpack.c.l.b16 %v2221
        %v2516 = vunpack.c.h.b16 %v2221
        %v2517 = vunpack.c.l.b16 %v2222
        %v2518 = vunpack.c.h.b16 %v2222
        %v2519 = vunpack.c.l.b16 %v2223
        %v2520 = vunpack.c.h.b16 %v2223
        %v2521 = vunpack.c.l.b16 %v2224
        %v2522 = vunpack.c.h.b16 %v2224
        %v2523 = vunpack.c.l.b16 %v2225
        %v2524 = vunpack.c.h.b16 %v2225
        %v2525 = vunpack.c.l.b16 %v2226
        %v2526 = vunpack.c.h.b16 %v2226
        %v2527 = vunpack.c.l.b16 %v2227
        %v2528 = vunpack.c.h.b16 %v2227
        %v2529 = vunpack.c.l.b16 %v2228
        %v2530 = vunpack.c.h.b16 %v2228
        %v2531 = vunpack.c.l.b16 %v2229
        %v2532 = vunpack.c.h.b16 %v2229
        %v2533 = vunpack.c.l.b16 %v2230
        %v2534 = vunpack.c.h.b16 %v2230
        %v2535 = vunpack.c.l.b16 %v2231
        %v2536 = vunpack.c.h.b16 %v2231
        %v2537 = vunpack.c.l.b16 %v2232
        %v2538 = vunpack.c.h.b16 %v2232
        %v2539 = vunpack.c.l.b16 %v2233
        %v2540 = vunpack.c.h.b16 %v2233
        %v2541 = vunpack.c.l.b16 %v2234
        %v2542 = vunpack.c.h.b16 %v2234
        %v2543 = vunpack.c.l.b16 %v2235
        %v2544 = vunpack.c.h.b16 %v2235
        %v2545 = vunpack.c.l.b16 %v2236
        %v2546 = vunpack.c.h.b16 %v2236
        %v2547 = vunpack.c.l.b16 %v2237
        %v2548 = vunpack.c.h.b16 %v2237
        %v2549 = vunpack.c.l.b16 %v2238
        %v2550 = vunpack.c.h.b16 %v2238
        %v2551 = vunpack.c.l.b16 %v2239
        %v2552 = vunpack.c.h.b16 %v2239
        %v2553 = vunpack.c.l.b16 %v2240
        %v2554 = vunpack.c.h.b16 %v2240
        %v2555 = vunpack.c.l.b16 %v2241
        %v2556 = vunpack.c.h.b16 %v2241
        %v2557 = vunpack.c.l.b16 %v2242
        %v2558 = vunpack.c.h.b16 %v2242
        %v2559 = vunpack.c.l.b16 %v2243
        %v2560 = vunpack.c.h.b16 %v2243
        %v2561 = vunpack.c.l.b16 %v2244
        %v2562 = vunpack.c.h.b16 %v2244
        %v2563 = vunpack.c.l.b16 %v2245
        %v2564 = vunpack.c.h.b16 %v2245
        %v2565 = vunpack.c.l.b16 %v2246
        %v2566 = vunpack.c.h.b16 %v2246
        %v2567 = vunpack.c.l.b16 %v2247
        %v2568 = vunpack.c.h.b16 %v2247
        %v2569 = vpack.c.b16 %v2507, %v2505
        %v2570 = vpack.c.b16 %v2508, %v2506
        %v2571 = vpack.c.b16 %v2511, %v2509
        %v2572 = vpack.c.b16 %v2512, %v2510
        %v2573 = vpack.c.b16 %v2515, %v2513
        %v2574 = vpack.c.b16 %v2516, %v2514
        %v2575 = vpack.c.b16 %v2519, %v2517
        %v2576 = vpack.c.b16 %v2520, %v2518
        %v2577 = vpack.c.b16 %v2523, %v2521
        %v2578 = vpack.c.b16 %v2524, %v2522
        %v2579 = vpack.c.b16 %v2527, %v2525
        %v2580 = vpack.c.b16 %v2528, %v2526
        %v2581 = vpack.c.b16 %v2531, %v2529
        %v2582 = vpack.c.b16 %v2532, %v2530
        %v2583 = vpack.c.b16 %v2535, %v2533
        %v2584 = vpack.c.b16 %v2536, %v2534
        %v2585 = vpack.c.b16 %v2539, %v2537
        %v2586 = vpack.c.b16 %v2540, %v2538
        %v2587 = vpack.c.b16 %v2543, %v2541
        %v2588 = vpack.c.b16 %v2544, %v2542
        %v2589 = vpack.c.b16 %v2547, %v2545
        %v2590 = vpack.c.b16 %v2548, %v2546
        %v2591 = vpack.c.b16 %v2551, %v2549
        %v2592 = vpack.c.b16 %v2552, %v2550
        %v2593 = vpack.c.b16 %v2555, %v2553
        %v2594 = vpack.c.b16 %v2556, %v2554
        %v2595 = vpack.c.b16 %v2559, %v2557
        %v2596 = vpack.c.b16 %v2560, %v2558
        %v2597 = vpack.c.b16 %v2563, %v2561
        %v2598 = vpack.c.b16 %v2564, %v2562
        %v2599 = vpack.c.b16 %v2567, %v2565
        %v2600 = vpack.c.b16 %v2568, %v2566
        %2633 = vmatpush.bf16.msra.mxu0 %v2262
        %2634 = vmatpush.bf16.msra.mxu0 %v2260
        %2635 = vmatpush.bf16.msra.mxu0 %v2258
        %2636 = vmatpush.bf16.msra.mxu0 %v2256
        %2637 = vmatpush.bf16.msra.mxu0 %v2254
        %2638 = vmatpush.bf16.msra.mxu0 %v2252
        %2639 = vmatpush.bf16.msra.mxu0 %v2250
        %2640 = vmatpush.bf16.msra.mxu0 %v2248
        %2641 = vmatmul.bf16.gmra.mxu0 %v2569
        %v2642 = vpop.f32.mrf.mxu0
        %v2643 = vadd.f32 %v2316, %v2642
        %v2644 = vpop.f32.mrf.mxu0
        %v2645 = vadd.f32 %v2321, %v2644
        %2646 = vmatmul.bf16.gmra.mxu0 %v2571
        %v2647 = vpop.f32.mrf.mxu0
        %v2648 = vadd.f32 %v2326, %v2647
        %v2649 = vpop.f32.mrf.mxu0
        %v2650 = vadd.f32 %v2331, %v2649
        %2651 = vmatmul.bf16.gmra.mxu0 %v2573
        %v2652 = vpop.f32.mrf.mxu0
        %v2653 = vadd.f32 %v2336, %v2652
        %v2654 = vpop.f32.mrf.mxu0
        %v2655 = vadd.f32 %v2341, %v2654
        %2656 = vmatmul.bf16.gmra.mxu0 %v2575
        %v2657 = vpop.f32.mrf.mxu0
        %v2658 = vadd.f32 %v2346, %v2657
        %v2659 = vpop.f32.mrf.mxu0
        %v2660 = vadd.f32 %v2351, %v2659
        %2661 = vmatmul.bf16.gmra.mxu0 %v2577
        %v2662 = vpop.f32.mrf.mxu0
        %v2663 = vadd.f32 %v2356, %v2662
        %v2664 = vpop.f32.mrf.mxu0
        %v2665 = vadd.f32 %v2361, %v2664
        %2666 = vmatmul.bf16.gmra.mxu0 %v2579
        %v2667 = vpop.f32.mrf.mxu0
        %v2668 = vadd.f32 %v2366, %v2667
        %v2669 = vpop.f32.mrf.mxu0
        %v2670 = vadd.f32 %v2371, %v2669
        %2671 = vmatmul.bf16.gmra.mxu0 %v2581
        %v2672 = vpop.f32.mrf.mxu0
        %v2673 = vadd.f32 %v2376, %v2672
        %v2674 = vpop.f32.mrf.mxu0
        %v2675 = vadd.f32 %v2381, %v2674
        %2676 = vmatmul.bf16.gmra.mxu0 %v2583
        %v2677 = vpop.f32.mrf.mxu0
        %v2678 = vadd.f32 %v2386, %v2677
        %v2679 = vpop.f32.mrf.mxu0
        %v2680 = vadd.f32 %v2391, %v2679
        %2681 = vmatmul.bf16.gmra.mxu0 %v2585
        %v2682 = vpop.f32.mrf.mxu0
        %v2683 = vadd.f32 %v2396, %v2682
        %v2684 = vpop.f32.mrf.mxu0
        %v2685 = vadd.f32 %v2401, %v2684
        %2686 = vmatmul.bf16.gmra.mxu0 %v2587
        %v2687 = vpop.f32.mrf.mxu0
        %v2688 = vadd.f32 %v2406, %v2687
        %v2689 = vpop.f32.mrf.mxu0
        %v2690 = vadd.f32 %v2411, %v2689
        %2691 = vmatmul.bf16.gmra.mxu0 %v2589
        %v2692 = vpop.f32.mrf.mxu0
        %v2693 = vadd.f32 %v2416, %v2692
        %v2694 = vpop.f32.mrf.mxu0
        %v2695 = vadd.f32 %v2421, %v2694
        %2696 = vmatmul.bf16.gmra.mxu0 %v2591
        %v2697 = vpop.f32.mrf.mxu0
        %v2698 = vadd.f32 %v2426, %v2697
        %v2699 = vpop.f32.mrf.mxu0
        %v2700 = vadd.f32 %v2431, %v2699
        %2701 = vmatmul.bf16.gmra.mxu0 %v2593
        %v2702 = vpop.f32.mrf.mxu0
        %v2703 = vadd.f32 %v2436, %v2702
        %v2704 = vpop.f32.mrf.mxu0
        %v2705 = vadd.f32 %v2441, %v2704
        %2706 = vmatmul.bf16.gmra.mxu0 %v2595
        %v2707 = vpop.f32.mrf.mxu0
        %v2708 = vadd.f32 %v2446, %v2707
        %v2709 = vpop.f32.mrf.mxu0
        %v2710 = vadd.f32 %v2451, %v2709
        %2711 = vmatmul.bf16.gmra.mxu0 %v2597
        %v2712 = vpop.f32.mrf.mxu0
        %v2713 = vadd.f32 %v2456, %v2712
        %v2714 = vpop.f32.mrf.mxu0
        %v2715 = vadd.f32 %v2461, %v2714
        %2716 = vmatmul.bf16.gmra.mxu0 %v2599
        %v2717 = vpop.f32.mrf.mxu0
        %v2718 = vadd.f32 %v2466, %v2717
        %v2719 = vpop.f32.mrf.mxu0
        %v2720 = vadd.f32 %v2471, %v2719
        %2721 = vdwg.mxu0
        %2722 = vmatpush.bf16.msra.mxu0 %v2278
        %2723 = vmatpush.bf16.msra.mxu0 %v2276
        %2724 = vmatpush.bf16.msra.mxu0 %v2274
        %2725 = vmatpush.bf16.msra.mxu0 %v2272
        %2726 = vmatpush.bf16.msra.mxu0 %v2270
        %2727 = vmatpush.bf16.msra.mxu0 %v2268
        %2728 = vmatpush.bf16.msra.mxu0 %v2266
        %2729 = vmatpush.bf16.msra.mxu0 %v2264
        %2730 = vmatmul.bf16.gmra.mxu0 %v2570
        %v2731 = vpop.f32.mrf.mxu0
        %v2732 = vadd.f32 %v2643, %v2731
        %v2733 = vpop.f32.mrf.mxu0
        %v2734 = vadd.f32 %v2645, %v2733
        %2735 = vmatmul.bf16.gmra.mxu0 %v2572
        %v2736 = vpop.f32.mrf.mxu0
        %v2737 = vadd.f32 %v2648, %v2736
        %v2738 = vpop.f32.mrf.mxu0
        %v2739 = vadd.f32 %v2650, %v2738
        %2740 = vmatmul.bf16.gmra.mxu0 %v2574
        %v2741 = vpop.f32.mrf.mxu0
        %v2742 = vadd.f32 %v2653, %v2741
        %v2743 = vpop.f32.mrf.mxu0
        %v2744 = vadd.f32 %v2655, %v2743
        %2745 = vmatmul.bf16.gmra.mxu0 %v2576
        %v2746 = vpop.f32.mrf.mxu0
        %v2747 = vadd.f32 %v2658, %v2746
        %v2748 = vpop.f32.mrf.mxu0
        %v2749 = vadd.f32 %v2660, %v2748
        %2750 = vmatmul.bf16.gmra.mxu0 %v2578
        %v2751 = vpop.f32.mrf.mxu0
        %v2752 = vadd.f32 %v2663, %v2751
        %v2753 = vpop.f32.mrf.mxu0
        %v2754 = vadd.f32 %v2665, %v2753
        %2755 = vmatmul.bf16.gmra.mxu0 %v2580
        %v2756 = vpop.f32.mrf.mxu0
        %v2757 = vadd.f32 %v2668, %v2756
        %v2758 = vpop.f32.mrf.mxu0
        %v2759 = vadd.f32 %v2670, %v2758
        %2760 = vmatmul.bf16.gmra.mxu0 %v2582
        %v2761 = vpop.f32.mrf.mxu0
        %v2762 = vadd.f32 %v2673, %v2761
        %v2763 = vpop.f32.mrf.mxu0
        %v2764 = vadd.f32 %v2675, %v2763
        %2765 = vmatmul.bf16.gmra.mxu0 %v2584
        %v2766 = vpop.f32.mrf.mxu0
        %v2767 = vadd.f32 %v2678, %v2766
        %v2768 = vpop.f32.mrf.mxu0
        %v2769 = vadd.f32 %v2680, %v2768
        %2770 = vmatmul.bf16.gmra.mxu0 %v2586
        %v2771 = vpop.f32.mrf.mxu0
        %v2772 = vadd.f32 %v2683, %v2771
        %v2773 = vpop.f32.mrf.mxu0
        %v2774 = vadd.f32 %v2685, %v2773
        %2775 = vmatmul.bf16.gmra.mxu0 %v2588
        %v2776 = vpop.f32.mrf.mxu0
        %v2777 = vadd.f32 %v2688, %v2776
        %v2778 = vpop.f32.mrf.mxu0
        %v2779 = vadd.f32 %v2690, %v2778
        %2780 = vmatmul.bf16.gmra.mxu0 %v2590
        %v2781 = vpop.f32.mrf.mxu0
        %v2782 = vadd.f32 %v2693, %v2781
        %v2783 = vpop.f32.mrf.mxu0
        %v2784 = vadd.f32 %v2695, %v2783
        %2785 = vmatmul.bf16.gmra.mxu0 %v2592
        %v2786 = vpop.f32.mrf.mxu0
        %v2787 = vadd.f32 %v2698, %v2786
        %v2788 = vpop.f32.mrf.mxu0
        %v2789 = vadd.f32 %v2700, %v2788
        %2790 = vmatmul.bf16.gmra.mxu0 %v2594
        %v2791 = vpop.f32.mrf.mxu0
        %v2792 = vadd.f32 %v2703, %v2791
        %v2793 = vpop.f32.mrf.mxu0
        %v2794 = vadd.f32 %v2705, %v2793
        %2795 = vmatmul.bf16.gmra.mxu0 %v2596
        %v2796 = vpop.f32.mrf.mxu0
        %v2797 = vadd.f32 %v2708, %v2796
        %v2798 = vpop.f32.mrf.mxu0
        %v2799 = vadd.f32 %v2710, %v2798
        %2800 = vmatmul.bf16.gmra.mxu0 %v2598
        %v2801 = vpop.f32.mrf.mxu0
        %v2802 = vadd.f32 %v2713, %v2801
        %v2803 = vpop.f32.mrf.mxu0
        %v2804 = vadd.f32 %v2715, %v2803
        %2805 = vmatmul.bf16.gmra.mxu0 %v2600
        %v2806 = vpop.f32.mrf.mxu0
        %v2807 = vadd.f32 %v2718, %v2806
        %v2808 = vpop.f32.mrf.mxu0
        %v2809 = vadd.f32 %v2720, %v2808
        %2810 = vdwg.mxu0
        %2811 = vmatpush.bf16.msra.mxu0 %v2263
        %2812 = vmatpush.bf16.msra.mxu0 %v2261
        %2813 = vmatpush.bf16.msra.mxu0 %v2259
        %2814 = vmatpush.bf16.msra.mxu0 %v2257
        %2815 = vmatpush.bf16.msra.mxu0 %v2255
        %2816 = vmatpush.bf16.msra.mxu0 %v2253
        %2817 = vmatpush.bf16.msra.mxu0 %v2251
        %2818 = vmatpush.bf16.msra.mxu0 %v2249
        %2819 = vmatmul.bf16.gmra.mxu0 %v2569
        %v2820 = vpop.f32.mrf.mxu0
        %v2821 = vadd.f32 %v2316, %v2820
        %v2822 = vpop.f32.mrf.mxu0
        %v2823 = vadd.f32 %v2321, %v2822
        %2824 = vmatmul.bf16.gmra.mxu0 %v2571
        %v2825 = vpop.f32.mrf.mxu0
        %v2826 = vadd.f32 %v2326, %v2825
        %v2827 = vpop.f32.mrf.mxu0
        %v2828 = vadd.f32 %v2331, %v2827
        %2829 = vmatmul.bf16.gmra.mxu0 %v2573
        %v2830 = vpop.f32.mrf.mxu0
        %v2831 = vadd.f32 %v2336, %v2830
        %v2832 = vpop.f32.mrf.mxu0
        %v2833 = vadd.f32 %v2341, %v2832
        %2834 = vmatmul.bf16.gmra.mxu0 %v2575
        %v2835 = vpop.f32.mrf.mxu0
        %v2836 = vadd.f32 %v2346, %v2835
        %v2837 = vpop.f32.mrf.mxu0
        %v2838 = vadd.f32 %v2351, %v2837
        %2839 = vmatmul.bf16.gmra.mxu0 %v2577
        %v2840 = vpop.f32.mrf.mxu0
        %v2841 = vadd.f32 %v2356, %v2840
        %v2842 = vpop.f32.mrf.mxu0
        %v2843 = vadd.f32 %v2361, %v2842
        %2844 = vmatmul.bf16.gmra.mxu0 %v2579
        %v2845 = vpop.f32.mrf.mxu0
        %v2846 = vadd.f32 %v2366, %v2845
        %v2847 = vpop.f32.mrf.mxu0
        %v2848 = vadd.f32 %v2371, %v2847
        %2849 = vmatmul.bf16.gmra.mxu0 %v2581
        %v2850 = vpop.f32.mrf.mxu0
        %v2851 = vadd.f32 %v2376, %v2850
        %v2852 = vpop.f32.mrf.mxu0
        %v2853 = vadd.f32 %v2381, %v2852
        %2854 = vmatmul.bf16.gmra.mxu0 %v2583
        %v2855 = vpop.f32.mrf.mxu0
        %v2856 = vadd.f32 %v2386, %v2855
        %v2857 = vpop.f32.mrf.mxu0
        %v2858 = vadd.f32 %v2391, %v2857
        %2859 = vmatmul.bf16.gmra.mxu0 %v2585
        %v2860 = vpop.f32.mrf.mxu0
        %v2861 = vadd.f32 %v2396, %v2860
        %v2862 = vpop.f32.mrf.mxu0
        %v2863 = vadd.f32 %v2401, %v2862
        %2864 = vmatmul.bf16.gmra.mxu0 %v2587
        %v2865 = vpop.f32.mrf.mxu0
        %v2866 = vadd.f32 %v2406, %v2865
        %v2867 = vpop.f32.mrf.mxu0
        %v2868 = vadd.f32 %v2411, %v2867
        %2869 = vmatmul.bf16.gmra.mxu0 %v2589
        %v2870 = vpop.f32.mrf.mxu0
        %v2871 = vadd.f32 %v2416, %v2870
        %v2872 = vpop.f32.mrf.mxu0
        %v2873 = vadd.f32 %v2421, %v2872
        %2874 = vmatmul.bf16.gmra.mxu0 %v2591
        %v2875 = vpop.f32.mrf.mxu0
        %v2876 = vadd.f32 %v2426, %v2875
        %v2877 = vpop.f32.mrf.mxu0
        %v2878 = vadd.f32 %v2431, %v2877
        %2879 = vmatmul.bf16.gmra.mxu0 %v2593
        %v2880 = vpop.f32.mrf.mxu0
        %v2881 = vadd.f32 %v2436, %v2880
        %v2882 = vpop.f32.mrf.mxu0
        %v2883 = vadd.f32 %v2441, %v2882
        %2884 = vmatmul.bf16.gmra.mxu0 %v2595
        %v2885 = vpop.f32.mrf.mxu0
        %v2886 = vadd.f32 %v2446, %v2885
        %v2887 = vpop.f32.mrf.mxu0
        %v2888 = vadd.f32 %v2451, %v2887
        %2889 = vmatmul.bf16.gmra.mxu0 %v2597
        %v2890 = vpop.f32.mrf.mxu0
        %v2891 = vadd.f32 %v2456, %v2890
        %v2892 = vpop.f32.mrf.mxu0
        %v2893 = vadd.f32 %v2461, %v2892
        %2894 = vmatmul.bf16.gmra.mxu0 %v2599
        %v2895 = vpop.f32.mrf.mxu0
        %v2896 = vadd.f32 %v2466, %v2895
        %v2897 = vpop.f32.mrf.mxu0
        %v2898 = vadd.f32 %v2471, %v2897
        %2899 = vdwg.mxu0
        %2900 = vmatpush.bf16.msra.mxu0 %v2279
        %2901 = vmatpush.bf16.msra.mxu0 %v2277
        %2902 = vmatpush.bf16.msra.mxu0 %v2275
        %2903 = vmatpush.bf16.msra.mxu0 %v2273
        %2904 = vmatpush.bf16.msra.mxu0 %v2271
        %2905 = vmatpush.bf16.msra.mxu0 %v2269
        %2906 = vmatpush.bf16.msra.mxu0 %v2267
        %2907 = vmatpush.bf16.msra.mxu0 %v2265
        %2908 = vmatmul.bf16.gmra.mxu0 %v2570
        %v2909 = vpop.f32.mrf.mxu0
        %v2910 = vadd.f32 %v2821, %v2909
        %v2911 = vpop.f32.mrf.mxu0
        %v2912 = vadd.f32 %v2823, %v2911
        %2913 = vmatmul.bf16.gmra.mxu0 %v2572
        %v2914 = vpop.f32.mrf.mxu0
        %v2915 = vadd.f32 %v2826, %v2914
        %v2916 = vpop.f32.mrf.mxu0
        %v2917 = vadd.f32 %v2828, %v2916
        %2918 = vmatmul.bf16.gmra.mxu0 %v2574
        %v2919 = vpop.f32.mrf.mxu0
        %v2920 = vadd.f32 %v2831, %v2919
        %v2921 = vpop.f32.mrf.mxu0
        %v2922 = vadd.f32 %v2833, %v2921
        %2923 = vmatmul.bf16.gmra.mxu0 %v2576
        %v2924 = vpop.f32.mrf.mxu0
        %v2925 = vadd.f32 %v2836, %v2924
        %v2926 = vpop.f32.mrf.mxu0
        %v2927 = vadd.f32 %v2838, %v2926
        %2928 = vmatmul.bf16.gmra.mxu0 %v2578
        %v2929 = vpop.f32.mrf.mxu0
        %v2930 = vadd.f32 %v2841, %v2929
        %v2931 = vpop.f32.mrf.mxu0
        %v2932 = vadd.f32 %v2843, %v2931
        %2933 = vmatmul.bf16.gmra.mxu0 %v2580
        %v2934 = vpop.f32.mrf.mxu0
        %v2935 = vadd.f32 %v2846, %v2934
        %v2936 = vpop.f32.mrf.mxu0
        %v2937 = vadd.f32 %v2848, %v2936
        %2938 = vmatmul.bf16.gmra.mxu0 %v2582
        %v2939 = vpop.f32.mrf.mxu0
        %v2940 = vadd.f32 %v2851, %v2939
        %v2941 = vpop.f32.mrf.mxu0
        %v2942 = vadd.f32 %v2853, %v2941
        %2943 = vmatmul.bf16.gmra.mxu0 %v2584
        %v2944 = vpop.f32.mrf.mxu0
        %v2945 = vadd.f32 %v2856, %v2944
        %v2946 = vpop.f32.mrf.mxu0
        %v2947 = vadd.f32 %v2858, %v2946
        %2948 = vmatmul.bf16.gmra.mxu0 %v2586
        %v2949 = vpop.f32.mrf.mxu0
        %v2950 = vadd.f32 %v2861, %v2949
        %v2951 = vpop.f32.mrf.mxu0
        %v2952 = vadd.f32 %v2863, %v2951
        %2953 = vmatmul.bf16.gmra.mxu0 %v2588
        %v2954 = vpop.f32.mrf.mxu0
        %v2955 = vadd.f32 %v2866, %v2954
        %v2956 = vpop.f32.mrf.mxu0
        %v2957 = vadd.f32 %v2868, %v2956
        %2958 = vmatmul.bf16.gmra.mxu0 %v2590
        %v2959 = vpop.f32.mrf.mxu0
        %v2960 = vadd.f32 %v2871, %v2959
        %v2961 = vpop.f32.mrf.mxu0
        %v2962 = vadd.f32 %v2873, %v2961
        %2963 = vmatmul.bf16.gmra.mxu0 %v2592
        %v2964 = vpop.f32.mrf.mxu0
        %v2965 = vadd.f32 %v2876, %v2964
        %v2966 = vpop.f32.mrf.mxu0
        %v2967 = vadd.f32 %v2878, %v2966
        %2968 = vmatmul.bf16.gmra.mxu0 %v2594
        %v2969 = vpop.f32.mrf.mxu0
        %v2970 = vadd.f32 %v2881, %v2969
        %v2971 = vpop.f32.mrf.mxu0
        %v2972 = vadd.f32 %v2883, %v2971
        %2973 = vmatmul.bf16.gmra.mxu0 %v2596
        %v2974 = vpop.f32.mrf.mxu0
        %v2975 = vadd.f32 %v2886, %v2974
        %v2976 = vpop.f32.mrf.mxu0
        %v2977 = vadd.f32 %v2888, %v2976
        %2978 = vmatmul.bf16.gmra.mxu0 %v2598
        %v2979 = vpop.f32.mrf.mxu0
        %v2980 = vadd.f32 %v2891, %v2979
        %v2981 = vpop.f32.mrf.mxu0
        %v2982 = vadd.f32 %v2893, %v2981
        %2983 = vmatmul.bf16.gmra.mxu0 %v2600
        %v2984 = vpop.f32.mrf.mxu0
        %v2985 = vadd.f32 %v2896, %v2984
        %v2986 = vpop.f32.mrf.mxu0
        %v2987 = vadd.f32 %v2898, %v2986
        %2988 = vdwg.mxu0
        %v2989 = vadd.f32 %v2151, %v2732
        %v2990 = vadd.f32 %v2152, %v2910
        %v2991 = vadd.f32 %v2153, %v2734
        %v2992 = vadd.f32 %v2154, %v2912
        %v2993 = vadd.f32 %v2155, %v2737
        %v2994 = vadd.f32 %v2156, %v2915
        %v2995 = vadd.f32 %v2157, %v2739
        %v2996 = vadd.f32 %v2158, %v2917
        %v2997 = vadd.f32 %v2159, %v2742
        %v2998 = vadd.f32 %v2160, %v2920
        %v2999 = vadd.f32 %v2161, %v2744
        %v3000 = vadd.f32 %v2162, %v2922
        %v3001 = vadd.f32 %v2163, %v2747
        %v3002 = vadd.f32 %v2164, %v2925
        %v3003 = vadd.f32 %v2165, %v2749
        %v3004 = vadd.f32 %v2166, %v2927
        %v3005 = vadd.f32 %v2167, %v2752
        %v3006 = vadd.f32 %v2168, %v2930
        %v3007 = vadd.f32 %v2169, %v2754
        %v3008 = vadd.f32 %v2170, %v2932
        %v3009 = vadd.f32 %v2171, %v2757
        %v3010 = vadd.f32 %v2172, %v2935
        %v3011 = vadd.f32 %v2173, %v2759
        %v3012 = vadd.f32 %v2174, %v2937
        %v3013 = vadd.f32 %v2175, %v2762
        %v3014 = vadd.f32 %v2176, %v2940
        %v3015 = vadd.f32 %v2177, %v2764
        %v3016 = vadd.f32 %v2178, %v2942
        %v3017 = vadd.f32 %v2179, %v2767
        %v3018 = vadd.f32 %v2180, %v2945
        %v3019 = vadd.f32 %v2181, %v2769
        %v3020 = vadd.f32 %v2182, %v2947
        %v3021 = vadd.f32 %v2183, %v2772
        %v3022 = vadd.f32 %v2184, %v2950
        %v3023 = vadd.f32 %v2185, %v2774
        %v3024 = vadd.f32 %v2186, %v2952
        %v3025 = vadd.f32 %v2187, %v2777
        %v3026 = vadd.f32 %v2188, %v2955
        %v3027 = vadd.f32 %v2189, %v2779
        %v3028 = vadd.f32 %v2190, %v2957
        %v3029 = vadd.f32 %v2191, %v2782
        %v3030 = vadd.f32 %v2192, %v2960
        %v3031 = vadd.f32 %v2193, %v2784
        %v3032 = vadd.f32 %v2194, %v2962
        %v3033 = vadd.f32 %v2195, %v2787
        %v3034 = vadd.f32 %v2196, %v2965
        %v3035 = vadd.f32 %v2197, %v2789
        %v3036 = vadd.f32 %v2198, %v2967
        %v3037 = vadd.f32 %v2199, %v2792
        %v3038 = vadd.f32 %v2200, %v2970
        %v3039 = vadd.f32 %v2201, %v2794
        %v3040 = vadd.f32 %v2202, %v2972
        %v3041 = vadd.f32 %v2203, %v2797
        %v3042 = vadd.f32 %v2204, %v2975
        %v3043 = vadd.f32 %v2205, %v2799
        %v3044 = vadd.f32 %v2206, %v2977
        %v3045 = vadd.f32 %v2207, %v2802
        %v3046 = vadd.f32 %v2208, %v2980
        %v3047 = vadd.f32 %v2209, %v2804
        %v3048 = vadd.f32 %v2210, %v2982
        %v3049 = vadd.f32 %v2211, %v2807
        %v3050 = vadd.f32 %v2212, %v2985
        %v3051 = vadd.f32 %v2213, %v2809
        %v3052 = vadd.f32 %v2214, %v2987
        %v3053 = vmul.f32 %v2989, 0.01
        %v3054 = vmul.f32 %v2990, 0.01
        %v3055 = vmul.f32 %v2991, 0.01
        %v3056 = vmul.f32 %v2992, 0.01
        %v3057 = vmul.f32 %v2993, 0.01
        %v3058 = vmul.f32 %v2994, 0.01
        %v3059 = vmul.f32 %v2995, 0.01
        %v3060 = vmul.f32 %v2996, 0.01
        %v3061 = vmul.f32 %v2997, 0.01
        %v3062 = vmul.f32 %v2998, 0.01
        %v3063 = vmul.f32 %v2999, 0.01
        %v3064 = vmul.f32 %v3000, 0.01
        %v3065 = vmul.f32 %v3001, 0.01
        %v3066 = vmul.f32 %v3002, 0.01
        %v3067 = vmul.f32 %v3003, 0.01
        %v3068 = vmul.f32 %v3004, 0.01
        %v3069 = vmul.f32 %v3005, 0.01
        %v3070 = vmul.f32 %v3006, 0.01
        %v3071 = vmul.f32 %v3007, 0.01
        %v3072 = vmul.f32 %v3008, 0.01
        %v3073 = vmul.f32 %v3009, 0.01
        %v3074 = vmul.f32 %v3010, 0.01
        %v3075 = vmul.f32 %v3011, 0.01
        %v3076 = vmul.f32 %v3012, 0.01
        %v3077 = vmul.f32 %v3013, 0.01
        %v3078 = vmul.f32 %v3014, 0.01
        %v3079 = vmul.f32 %v3015, 0.01
        %v3080 = vmul.f32 %v3016, 0.01
        %v3081 = vmul.f32 %v3017, 0.01
        %v3082 = vmul.f32 %v3018, 0.01
        %v3083 = vmul.f32 %v3019, 0.01
        %v3084 = vmul.f32 %v3020, 0.01
        %v3085 = vmul.f32 %v3021, 0.01
        %v3086 = vmul.f32 %v3022, 0.01
        %v3087 = vmul.f32 %v3023, 0.01
        %v3088 = vmul.f32 %v3024, 0.01
        %v3089 = vmul.f32 %v3025, 0.01
        %v3090 = vmul.f32 %v3026, 0.01
        %v3091 = vmul.f32 %v3027, 0.01
        %v3092 = vmul.f32 %v3028, 0.01
        %v3093 = vmul.f32 %v3029, 0.01
        %v3094 = vmul.f32 %v3030, 0.01
        %v3095 = vmul.f32 %v3031, 0.01
        %v3096 = vmul.f32 %v3032, 0.01
        %v3097 = vmul.f32 %v3033, 0.01
        %v3098 = vmul.f32 %v3034, 0.01
        %v3099 = vmul.f32 %v3035, 0.01
        %v3100 = vmul.f32 %v3036, 0.01
        %v3101 = vmul.f32 %v3037, 0.01
        %v3102 = vmul.f32 %v3038, 0.01
        %v3103 = vmul.f32 %v3039, 0.01
        %v3104 = vmul.f32 %v3040, 0.01
        %v3105 = vmul.f32 %v3041, 0.01
        %v3106 = vmul.f32 %v3042, 0.01
        %v3107 = vmul.f32 %v3043, 0.01
        %v3108 = vmul.f32 %v3044, 0.01
        %v3109 = vmul.f32 %v3045, 0.01
        %v3110 = vmul.f32 %v3046, 0.01
        %v3111 = vmul.f32 %v3047, 0.01
        %v3112 = vmul.f32 %v3048, 0.01
        %v3113 = vmul.f32 %v3049, 0.01
        %v3114 = vmul.f32 %v3050, 0.01
        %v3115 = vmul.f32 %v3051, 0.01
        %v3116 = vmul.f32 %v3052, 0.01
        %v3117 = vmax.f32 %v2989, %v3053
        %v3118 = vmax.f32 %v2990, %v3054
        %v3119 = vmax.f32 %v2991, %v3055
        %v3120 = vmax.f32 %v2992, %v3056
        %v3121 = vmax.f32 %v2993, %v3057
        %v3122 = vmax.f32 %v2994, %v3058
        %v3123 = vmax.f32 %v2995, %v3059
        %v3124 = vmax.f32 %v2996, %v3060
        %v3125 = vmax.f32 %v2997, %v3061
        %v3126 = vmax.f32 %v2998, %v3062
        %v3127 = vmax.f32 %v2999, %v3063
        %v3128 = vmax.f32 %v3000, %v3064
        %v3129 = vmax.f32 %v3001, %v3065
        %v3130 = vmax.f32 %v3002, %v3066
        %v3131 = vmax.f32 %v3003, %v3067
        %v3132 = vmax.f32 %v3004, %v3068
        %v3133 = vmax.f32 %v3005, %v3069
        %v3134 = vmax.f32 %v3006, %v3070
        %v3135 = vmax.f32 %v3007, %v3071
        %v3136 = vmax.f32 %v3008, %v3072
        %v3137 = vmax.f32 %v3009, %v3073
        %v3138 = vmax.f32 %v3010, %v3074
        %v3139 = vmax.f32 %v3011, %v3075
        %v3140 = vmax.f32 %v3012, %v3076
        %v3141 = vmax.f32 %v3013, %v3077
        %v3142 = vmax.f32 %v3014, %v3078
        %v3143 = vmax.f32 %v3015, %v3079
        %v3144 = vmax.f32 %v3016, %v3080
        %v3145 = vmax.f32 %v3017, %v3081
        %v3146 = vmax.f32 %v3018, %v3082
        %v3147 = vmax.f32 %v3019, %v3083
        %v3148 = vmax.f32 %v3020, %v3084
        %v3149 = vmax.f32 %v3021, %v3085
        %v3150 = vmax.f32 %v3022, %v3086
        %v3151 = vmax.f32 %v3023, %v3087
        %v3152 = vmax.f32 %v3024, %v3088
        %v3153 = vmax.f32 %v3025, %v3089
        %v3154 = vmax.f32 %v3026, %v3090
        %v3155 = vmax.f32 %v3027, %v3091
        %v3156 = vmax.f32 %v3028, %v3092
        %v3157 = vmax.f32 %v3029, %v3093
        %v3158 = vmax.f32 %v3030, %v3094
        %v3159 = vmax.f32 %v3031, %v3095
        %v3160 = vmax.f32 %v3032, %v3096
        %v3161 = vmax.f32 %v3033, %v3097
        %v3162 = vmax.f32 %v3034, %v3098
        %v3163 = vmax.f32 %v3035, %v3099
        %v3164 = vmax.f32 %v3036, %v3100
        %v3165 = vmax.f32 %v3037, %v3101
        %v3166 = vmax.f32 %v3038, %v3102
        %v3167 = vmax.f32 %v3039, %v3103
        %v3168 = vmax.f32 %v3040, %v3104
        %v3169 = vmax.f32 %v3041, %v3105
        %v3170 = vmax.f32 %v3042, %v3106
        %v3171 = vmax.f32 %v3043, %v3107
        %v3172 = vmax.f32 %v3044, %v3108
        %v3173 = vmax.f32 %v3045, %v3109
        %v3174 = vmax.f32 %v3046, %v3110
        %v3175 = vmax.f32 %v3047, %v3111
        %v3176 = vmax.f32 %v3048, %v3112
        %v3177 = vmax.f32 %v3049, %v3113
        %v3178 = vmax.f32 %v3050, %v3114
        %v3179 = vmax.f32 %v3051, %v3115
        %v3180 = vmax.f32 %v3052, %v3116
        %s3181 = scalar_lea.vmem %s5, 512
        %v3182 = vld [vmem:[%s3181] sm:$0xff]
        %v3183 = vld [vmem:[%s3181 + $0x8] sm:$0xff]
        %v3184 = vld [vmem:[%s3181 + $0x10] sm:$0xff]
        %v3185 = vld [vmem:[%s3181 + $0x18] sm:$0xff]
        %v3186 = vld [vmem:[%s3181 + $0x20] sm:$0xff]
        %v3187 = vld [vmem:[%s3181 + $0x28] sm:$0xff]
        %v3188 = vld [vmem:[%s3181 + $0x30] sm:$0xff]
        %v3189 = vld [vmem:[%s3181 + $0x38] sm:$0xff]
        %v3190 = vld [vmem:[%s3181 + $0x40] sm:$0xff]
        %v3191 = vld [vmem:[%s3181 + $0x48] sm:$0xff]
        %v3192 = vld [vmem:[%s3181 + $0x50] sm:$0xff]
        %v3193 = vld [vmem:[%s3181 + $0x58] sm:$0xff]
        %v3194 = vld [vmem:[%s3181 + $0x60] sm:$0xff]
        %v3195 = vld [vmem:[%s3181 + $0x68] sm:$0xff]
        %v3196 = vld [vmem:[%s3181 + $0x70] sm:$0xff]
        %v3197 = vld [vmem:[%s3181 + $0x78] sm:$0xff]
        %v3198 = vld [vmem:[%s3181 + $0x80] sm:$0xff]
        %v3199 = vld [vmem:[%s3181 + $0x88] sm:$0xff]
        %v3200 = vld [vmem:[%s3181 + $0x90] sm:$0xff]
        %v3201 = vld [vmem:[%s3181 + $0x98] sm:$0xff]
        %v3202 = vld [vmem:[%s3181 + $0xa0] sm:$0xff]
        %v3203 = vld [vmem:[%s3181 + $0xa8] sm:$0xff]
        %v3204 = vld [vmem:[%s3181 + $0xb0] sm:$0xff]
        %v3205 = vld [vmem:[%s3181 + $0xb8] sm:$0xff]
        %v3206 = vld [vmem:[%s3181 + $0xc0] sm:$0xff]
        %v3207 = vld [vmem:[%s3181 + $0xc8] sm:$0xff]
        %v3208 = vld [vmem:[%s3181 + $0xd0] sm:$0xff]
        %v3209 = vld [vmem:[%s3181 + $0xd8] sm:$0xff]
        %v3210 = vld [vmem:[%s3181 + $0xe0] sm:$0xff]
        %v3211 = vld [vmem:[%s3181 + $0xe8] sm:$0xff]
        %v3212 = vld [vmem:[%s3181 + $0xf0] sm:$0xff]
        %v3213 = vld [vmem:[%s3181 + $0xf8] sm:$0xff]
        %v3214 = vpack.c.bf16 %v3119, %v3117
        %v3215 = vpack.c.bf16 %v3120, %v3118
        %v3216 = vpack.c.bf16 %v3123, %v3121
        %v3217 = vpack.c.bf16 %v3124, %v3122
        %v3218 = vpack.c.bf16 %v3127, %v3125
        %v3219 = vpack.c.bf16 %v3128, %v3126
        %v3220 = vpack.c.bf16 %v3131, %v3129
        %v3221 = vpack.c.bf16 %v3132, %v3130
        %v3222 = vpack.c.bf16 %v3135, %v3133
        %v3223 = vpack.c.bf16 %v3136, %v3134
        %v3224 = vpack.c.bf16 %v3139, %v3137
        %v3225 = vpack.c.bf16 %v3140, %v3138
        %v3226 = vpack.c.bf16 %v3143, %v3141
        %v3227 = vpack.c.bf16 %v3144, %v3142
        %v3228 = vpack.c.bf16 %v3147, %v3145
        %v3229 = vpack.c.bf16 %v3148, %v3146
        %v3230 = vpack.c.bf16 %v3151, %v3149
        %v3231 = vpack.c.bf16 %v3152, %v3150
        %v3232 = vpack.c.bf16 %v3155, %v3153
        %v3233 = vpack.c.bf16 %v3156, %v3154
        %v3234 = vpack.c.bf16 %v3159, %v3157
        %v3235 = vpack.c.bf16 %v3160, %v3158
        %v3236 = vpack.c.bf16 %v3163, %v3161
        %v3237 = vpack.c.bf16 %v3164, %v3162
        %v3238 = vpack.c.bf16 %v3167, %v3165
        %v3239 = vpack.c.bf16 %v3168, %v3166
        %v3240 = vpack.c.bf16 %v3171, %v3169
        %v3241 = vpack.c.bf16 %v3172, %v3170
        %v3242 = vpack.c.bf16 %v3175, %v3173
        %v3243 = vpack.c.bf16 %v3176, %v3174
        %v3244 = vpack.c.bf16 %v3179, %v3177
        %v3245 = vpack.c.bf16 %v3180, %v3178
        %s3246 = scalar_lea.vmem %s6, 512
        %v3247 = vld [vmem:[%s3246] sm:$0xff]
        %v3248 = vld [vmem:[%s3246 + $0x8] sm:$0xff]
        %v3249 = vld [vmem:[%s3246 + $0x10] sm:$0xff]
        %v3250 = vld [vmem:[%s3246 + $0x18] sm:$0xff]
        %v3251 = vld [vmem:[%s3246 + $0x20] sm:$0xff]
        %v3252 = vld [vmem:[%s3246 + $0x28] sm:$0xff]
        %v3253 = vld [vmem:[%s3246 + $0x30] sm:$0xff]
        %v3254 = vld [vmem:[%s3246 + $0x38] sm:$0xff]
        %v3255 = vld [vmem:[%s3246 + $0x40] sm:$0xff]
        %v3256 = vld [vmem:[%s3246 + $0x48] sm:$0xff]
        %v3257 = vld [vmem:[%s3246 + $0x50] sm:$0xff]
        %v3258 = vld [vmem:[%s3246 + $0x58] sm:$0xff]
        %v3259 = vld [vmem:[%s3246 + $0x60] sm:$0xff]
        %v3260 = vld [vmem:[%s3246 + $0x68] sm:$0xff]
        %v3261 = vld [vmem:[%s3246 + $0x70] sm:$0xff]
        %v3262 = vld [vmem:[%s3246 + $0x78] sm:$0xff]
        %v3263 = vld [vmem:[%s3246 + $0x80] sm:$0xff]
        %v3264 = vld [vmem:[%s3246 + $0x88] sm:$0xff]
        %v3265 = vld [vmem:[%s3246 + $0x90] sm:$0xff]
        %v3266 = vld [vmem:[%s3246 + $0x98] sm:$0xff]
        %v3267 = vld [vmem:[%s3246 + $0xa0] sm:$0xff]
        %v3268 = vld [vmem:[%s3246 + $0xa8] sm:$0xff]
        %v3269 = vld [vmem:[%s3246 + $0xb0] sm:$0xff]
        %v3270 = vld [vmem:[%s3246 + $0xb8] sm:$0xff]
        %v3271 = vld [vmem:[%s3246 + $0xc0] sm:$0xff]
        %v3272 = vld [vmem:[%s3246 + $0xc8] sm:$0xff]
        %v3273 = vld [vmem:[%s3246 + $0xd0] sm:$0xff]
        %v3274 = vld [vmem:[%s3246 + $0xd8] sm:$0xff]
        %v3275 = vld [vmem:[%s3246 + $0xe0] sm:$0xff]
        %v3276 = vld [vmem:[%s3246 + $0xe8] sm:$0xff]
        %v3277 = vld [vmem:[%s3246 + $0xf0] sm:$0xff]
        %v3278 = vld [vmem:[%s3246 + $0xf8] sm:$0xff]
        %3280 = vset.pattern.permute.xlu0 0
        %3281 = vperm.xlu0 %3280, %v3247
        %v3282 = vpop.permute.xlu0 %3281
        %3285 = vset.pattern.permute.xlu0 0
        %3286 = vperm.xlu0 %3285, %v3248
        %v3287 = vpop.permute.xlu0 %3286
        %3290 = vset.pattern.permute.xlu0 0
        %3291 = vperm.xlu0 %3290, %v3249
        %v3292 = vpop.permute.xlu0 %3291
        %3295 = vset.pattern.permute.xlu0 0
        %3296 = vperm.xlu0 %3295, %v3250
        %v3297 = vpop.permute.xlu0 %3296
        %3300 = vset.pattern.permute.xlu0 0
        %3301 = vperm.xlu0 %3300, %v3251
        %v3302 = vpop.permute.xlu0 %3301
        %3305 = vset.pattern.permute.xlu0 0
        %3306 = vperm.xlu0 %3305, %v3252
        %v3307 = vpop.permute.xlu0 %3306
        %3310 = vset.pattern.permute.xlu0 0
        %3311 = vperm.xlu0 %3310, %v3253
        %v3312 = vpop.permute.xlu0 %3311
        %3315 = vset.pattern.permute.xlu0 0
        %3316 = vperm.xlu0 %3315, %v3254
        %v3317 = vpop.permute.xlu0 %3316
        %3320 = vset.pattern.permute.xlu0 0
        %3321 = vperm.xlu0 %3320, %v3255
        %v3322 = vpop.permute.xlu0 %3321
        %3325 = vset.pattern.permute.xlu0 0
        %3326 = vperm.xlu0 %3325, %v3256
        %v3327 = vpop.permute.xlu0 %3326
        %3330 = vset.pattern.permute.xlu0 0
        %3331 = vperm.xlu0 %3330, %v3257
        %v3332 = vpop.permute.xlu0 %3331
        %3335 = vset.pattern.permute.xlu0 0
        %3336 = vperm.xlu0 %3335, %v3258
        %v3337 = vpop.permute.xlu0 %3336
        %3340 = vset.pattern.permute.xlu0 0
        %3341 = vperm.xlu0 %3340, %v3259
        %v3342 = vpop.permute.xlu0 %3341
        %3345 = vset.pattern.permute.xlu0 0
        %3346 = vperm.xlu0 %3345, %v3260
        %v3347 = vpop.permute.xlu0 %3346
        %3350 = vset.pattern.permute.xlu0 0
        %3351 = vperm.xlu0 %3350, %v3261
        %v3352 = vpop.permute.xlu0 %3351
        %3355 = vset.pattern.permute.xlu0 0
        %3356 = vperm.xlu0 %3355, %v3262
        %v3357 = vpop.permute.xlu0 %3356
        %3360 = vset.pattern.permute.xlu0 0
        %3361 = vperm.xlu0 %3360, %v3263
        %v3362 = vpop.permute.xlu0 %3361
        %3365 = vset.pattern.permute.xlu0 0
        %3366 = vperm.xlu0 %3365, %v3264
        %v3367 = vpop.permute.xlu0 %3366
        %3370 = vset.pattern.permute.xlu0 0
        %3371 = vperm.xlu0 %3370, %v3265
        %v3372 = vpop.permute.xlu0 %3371
        %3375 = vset.pattern.permute.xlu0 0
        %3376 = vperm.xlu0 %3375, %v3266
        %v3377 = vpop.permute.xlu0 %3376
        %3380 = vset.pattern.permute.xlu0 0
        %3381 = vperm.xlu0 %3380, %v3267
        %v3382 = vpop.permute.xlu0 %3381
        %3385 = vset.pattern.permute.xlu0 0
        %3386 = vperm.xlu0 %3385, %v3268
        %v3387 = vpop.permute.xlu0 %3386
        %3390 = vset.pattern.permute.xlu0 0
        %3391 = vperm.xlu0 %3390, %v3269
        %v3392 = vpop.permute.xlu0 %3391
        %3395 = vset.pattern.permute.xlu0 0
        %3396 = vperm.xlu0 %3395, %v3270
        %v3397 = vpop.permute.xlu0 %3396
        %3400 = vset.pattern.permute.xlu0 0
        %3401 = vperm.xlu0 %3400, %v3271
        %v3402 = vpop.permute.xlu0 %3401
        %3405 = vset.pattern.permute.xlu0 0
        %3406 = vperm.xlu0 %3405, %v3272
        %v3407 = vpop.permute.xlu0 %3406
        %3410 = vset.pattern.permute.xlu0 0
        %3411 = vperm.xlu0 %3410, %v3273
        %v3412 = vpop.permute.xlu0 %3411
        %3415 = vset.pattern.permute.xlu0 0
        %3416 = vperm.xlu0 %3415, %v3274
        %v3417 = vpop.permute.xlu0 %3416
        %3420 = vset.pattern.permute.xlu0 0
        %3421 = vperm.xlu0 %3420, %v3275
        %v3422 = vpop.permute.xlu0 %3421
        %3425 = vset.pattern.permute.xlu0 0
        %3426 = vperm.xlu0 %3425, %v3276
        %v3427 = vpop.permute.xlu0 %3426
        %3430 = vset.pattern.permute.xlu0 0
        %3431 = vperm.xlu0 %3430, %v3277
        %v3432 = vpop.permute.xlu0 %3431
        %3435 = vset.pattern.permute.xlu0 0
        %3436 = vperm.xlu0 %3435, %v3278
        %v3437 = vpop.permute.xlu0 %3436
        %v3471 = vunpack.c.l.b16 %v3182
        %v3472 = vunpack.c.h.b16 %v3182
        %v3473 = vunpack.c.l.b16 %v3183
        %v3474 = vunpack.c.h.b16 %v3183
        %v3475 = vunpack.c.l.b16 %v3184
        %v3476 = vunpack.c.h.b16 %v3184
        %v3477 = vunpack.c.l.b16 %v3185
        %v3478 = vunpack.c.h.b16 %v3185
        %v3479 = vunpack.c.l.b16 %v3186
        %v3480 = vunpack.c.h.b16 %v3186
        %v3481 = vunpack.c.l.b16 %v3187
        %v3482 = vunpack.c.h.b16 %v3187
        %v3483 = vunpack.c.l.b16 %v3188
        %v3484 = vunpack.c.h.b16 %v3188
        %v3485 = vunpack.c.l.b16 %v3189
        %v3486 = vunpack.c.h.b16 %v3189
        %v3487 = vunpack.c.l.b16 %v3190
        %v3488 = vunpack.c.h.b16 %v3190
        %v3489 = vunpack.c.l.b16 %v3191
        %v3490 = vunpack.c.h.b16 %v3191
        %v3491 = vunpack.c.l.b16 %v3192
        %v3492 = vunpack.c.h.b16 %v3192
        %v3493 = vunpack.c.l.b16 %v3193
        %v3494 = vunpack.c.h.b16 %v3193
        %v3495 = vunpack.c.l.b16 %v3194
        %v3496 = vunpack.c.h.b16 %v3194
        %v3497 = vunpack.c.l.b16 %v3195
        %v3498 = vunpack.c.h.b16 %v3195
        %v3499 = vunpack.c.l.b16 %v3196
        %v3500 = vunpack.c.h.b16 %v3196
        %v3501 = vunpack.c.l.b16 %v3197
        %v3502 = vunpack.c.h.b16 %v3197
        %v3503 = vunpack.c.l.b16 %v3198
        %v3504 = vunpack.c.h.b16 %v3198
        %v3505 = vunpack.c.l.b16 %v3199
        %v3506 = vunpack.c.h.b16 %v3199
        %v3507 = vunpack.c.l.b16 %v3200
        %v3508 = vunpack.c.h.b16 %v3200
        %v3509 = vunpack.c.l.b16 %v3201
        %v3510 = vunpack.c.h.b16 %v3201
        %v3511 = vunpack.c.l.b16 %v3202
        %v3512 = vunpack.c.h.b16 %v3202
        %v3513 = vunpack.c.l.b16 %v3203
        %v3514 = vunpack.c.h.b16 %v3203
        %v3515 = vunpack.c.l.b16 %v3204
        %v3516 = vunpack.c.h.b16 %v3204
        %v3517 = vunpack.c.l.b16 %v3205
        %v3518 = vunpack.c.h.b16 %v3205
        %v3519 = vunpack.c.l.b16 %v3206
        %v3520 = vunpack.c.h.b16 %v3206
        %v3521 = vunpack.c.l.b16 %v3207
        %v3522 = vunpack.c.h.b16 %v3207
        %v3523 = vunpack.c.l.b16 %v3208
        %v3524 = vunpack.c.h.b16 %v3208
        %v3525 = vunpack.c.l.b16 %v3209
        %v3526 = vunpack.c.h.b16 %v3209
        %v3527 = vunpack.c.l.b16 %v3210
        %v3528 = vunpack.c.h.b16 %v3210
        %v3529 = vunpack.c.l.b16 %v3211
        %v3530 = vunpack.c.h.b16 %v3211
        %v3531 = vunpack.c.l.b16 %v3212
        %v3532 = vunpack.c.h.b16 %v3212
        %v3533 = vunpack.c.l.b16 %v3213
        %v3534 = vunpack.c.h.b16 %v3213
        %v3535 = vpack.c.b16 %v3473, %v3471
        %v3536 = vpack.c.b16 %v3474, %v3472
        %v3537 = vpack.c.b16 %v3477, %v3475
        %v3538 = vpack.c.b16 %v3478, %v3476
        %v3539 = vpack.c.b16 %v3481, %v3479
        %v3540 = vpack.c.b16 %v3482, %v3480
        %v3541 = vpack.c.b16 %v3485, %v3483
        %v3542 = vpack.c.b16 %v3486, %v3484
        %v3543 = vpack.c.b16 %v3489, %v3487
        %v3544 = vpack.c.b16 %v3490, %v3488
        %v3545 = vpack.c.b16 %v3493, %v3491
        %v3546 = vpack.c.b16 %v3494, %v3492
        %v3547 = vpack.c.b16 %v3497, %v3495
        %v3548 = vpack.c.b16 %v3498, %v3496
        %v3549 = vpack.c.b16 %v3501, %v3499
        %v3550 = vpack.c.b16 %v3502, %v3500
        %v3551 = vpack.c.b16 %v3505, %v3503
        %v3552 = vpack.c.b16 %v3506, %v3504
        %v3553 = vpack.c.b16 %v3509, %v3507
        %v3554 = vpack.c.b16 %v3510, %v3508
        %v3555 = vpack.c.b16 %v3513, %v3511
        %v3556 = vpack.c.b16 %v3514, %v3512
        %v3557 = vpack.c.b16 %v3517, %v3515
        %v3558 = vpack.c.b16 %v3518, %v3516
        %v3559 = vpack.c.b16 %v3521, %v3519
        %v3560 = vpack.c.b16 %v3522, %v3520
        %v3561 = vpack.c.b16 %v3525, %v3523
        %v3562 = vpack.c.b16 %v3526, %v3524
        %v3563 = vpack.c.b16 %v3529, %v3527
        %v3564 = vpack.c.b16 %v3530, %v3528
        %v3565 = vpack.c.b16 %v3533, %v3531
        %v3566 = vpack.c.b16 %v3534, %v3532
        %3599 = vmatpush.bf16.msra.mxu0 %v3228
        %3600 = vmatpush.bf16.msra.mxu0 %v3226
        %3601 = vmatpush.bf16.msra.mxu0 %v3224
        %3602 = vmatpush.bf16.msra.mxu0 %v3222
        %3603 = vmatpush.bf16.msra.mxu0 %v3220
        %3604 = vmatpush.bf16.msra.mxu0 %v3218
        %3605 = vmatpush.bf16.msra.mxu0 %v3216
        %3606 = vmatpush.bf16.msra.mxu0 %v3214
        %3607 = vmatmul.bf16.gmra.mxu0 %v3535
        %v3608 = vpop.f32.mrf.mxu0
        %v3609 = vadd.f32 %v3282, %v3608
        %v3610 = vpop.f32.mrf.mxu0
        %v3611 = vadd.f32 %v3287, %v3610
        %3612 = vmatmul.bf16.gmra.mxu0 %v3537
        %v3613 = vpop.f32.mrf.mxu0
        %v3614 = vadd.f32 %v3292, %v3613
        %v3615 = vpop.f32.mrf.mxu0
        %v3616 = vadd.f32 %v3297, %v3615
        %3617 = vmatmul.bf16.gmra.mxu0 %v3539
        %v3618 = vpop.f32.mrf.mxu0
        %v3619 = vadd.f32 %v3302, %v3618
        %v3620 = vpop.f32.mrf.mxu0
        %v3621 = vadd.f32 %v3307, %v3620
        %3622 = vmatmul.bf16.gmra.mxu0 %v3541
        %v3623 = vpop.f32.mrf.mxu0
        %v3624 = vadd.f32 %v3312, %v3623
        %v3625 = vpop.f32.mrf.mxu0
        %v3626 = vadd.f32 %v3317, %v3625
        %3627 = vmatmul.bf16.gmra.mxu0 %v3543
        %v3628 = vpop.f32.mrf.mxu0
        %v3629 = vadd.f32 %v3322, %v3628
        %v3630 = vpop.f32.mrf.mxu0
        %v3631 = vadd.f32 %v3327, %v3630
        %3632 = vmatmul.bf16.gmra.mxu0 %v3545
        %v3633 = vpop.f32.mrf.mxu0
        %v3634 = vadd.f32 %v3332, %v3633
        %v3635 = vpop.f32.mrf.mxu0
        %v3636 = vadd.f32 %v3337, %v3635
        %3637 = vmatmul.bf16.gmra.mxu0 %v3547
        %v3638 = vpop.f32.mrf.mxu0
        %v3639 = vadd.f32 %v3342, %v3638
        %v3640 = vpop.f32.mrf.mxu0
        %v3641 = vadd.f32 %v3347, %v3640
        %3642 = vmatmul.bf16.gmra.mxu0 %v3549
        %v3643 = vpop.f32.mrf.mxu0
        %v3644 = vadd.f32 %v3352, %v3643
        %v3645 = vpop.f32.mrf.mxu0
        %v3646 = vadd.f32 %v3357, %v3645
        %3647 = vmatmul.bf16.gmra.mxu0 %v3551
        %v3648 = vpop.f32.mrf.mxu0
        %v3649 = vadd.f32 %v3362, %v3648
        %v3650 = vpop.f32.mrf.mxu0
        %v3651 = vadd.f32 %v3367, %v3650
        %3652 = vmatmul.bf16.gmra.mxu0 %v3553
        %v3653 = vpop.f32.mrf.mxu0
        %v3654 = vadd.f32 %v3372, %v3653
        %v3655 = vpop.f32.mrf.mxu0
        %v3656 = vadd.f32 %v3377, %v3655
        %3657 = vmatmul.bf16.gmra.mxu0 %v3555
        %v3658 = vpop.f32.mrf.mxu0
        %v3659 = vadd.f32 %v3382, %v3658
        %v3660 = vpop.f32.mrf.mxu0
        %v3661 = vadd.f32 %v3387, %v3660
        %3662 = vmatmul.bf16.gmra.mxu0 %v3557
        %v3663 = vpop.f32.mrf.mxu0
        %v3664 = vadd.f32 %v3392, %v3663
        %v3665 = vpop.f32.mrf.mxu0
        %v3666 = vadd.f32 %v3397, %v3665
        %3667 = vmatmul.bf16.gmra.mxu0 %v3559
        %v3668 = vpop.f32.mrf.mxu0
        %v3669 = vadd.f32 %v3402, %v3668
        %v3670 = vpop.f32.mrf.mxu0
        %v3671 = vadd.f32 %v3407, %v3670
        %3672 = vmatmul.bf16.gmra.mxu0 %v3561
        %v3673 = vpop.f32.mrf.mxu0
        %v3674 = vadd.f32 %v3412, %v3673
        %v3675 = vpop.f32.mrf.mxu0
        %v3676 = vadd.f32 %v3417, %v3675
        %3677 = vmatmul.bf16.gmra.mxu0 %v3563
        %v3678 = vpop.f32.mrf.mxu0
        %v3679 = vadd.f32 %v3422, %v3678
        %v3680 = vpop.f32.mrf.mxu0
        %v3681 = vadd.f32 %v3427, %v3680
        %3682 = vmatmul.bf16.gmra.mxu0 %v3565
        %v3683 = vpop.f32.mrf.mxu0
        %v3684 = vadd.f32 %v3432, %v3683
        %v3685 = vpop.f32.mrf.mxu0
        %v3686 = vadd.f32 %v3437, %v3685
        %3687 = vdwg.mxu0
        %3688 = vmatpush.bf16.msra.mxu0 %v3244
        %3689 = vmatpush.bf16.msra.mxu0 %v3242
        %3690 = vmatpush.bf16.msra.mxu0 %v3240
        %3691 = vmatpush.bf16.msra.mxu0 %v3238
        %3692 = vmatpush.bf16.msra.mxu0 %v3236
        %3693 = vmatpush.bf16.msra.mxu0 %v3234
        %3694 = vmatpush.bf16.msra.mxu0 %v3232
        %3695 = vmatpush.bf16.msra.mxu0 %v3230
        %3696 = vmatmul.bf16.gmra.mxu0 %v3536
        %v3697 = vpop.f32.mrf.mxu0
        %v3698 = vadd.f32 %v3609, %v3697
        %v3699 = vpop.f32.mrf.mxu0
        %v3700 = vadd.f32 %v3611, %v3699
        %3701 = vmatmul.bf16.gmra.mxu0 %v3538
        %v3702 = vpop.f32.mrf.mxu0
        %v3703 = vadd.f32 %v3614, %v3702
        %v3704 = vpop.f32.mrf.mxu0
        %v3705 = vadd.f32 %v3616, %v3704
        %3706 = vmatmul.bf16.gmra.mxu0 %v3540
        %v3707 = vpop.f32.mrf.mxu0
        %v3708 = vadd.f32 %v3619, %v3707
        %v3709 = vpop.f32.mrf.mxu0
        %v3710 = vadd.f32 %v3621, %v3709
        %3711 = vmatmul.bf16.gmra.mxu0 %v3542
        %v3712 = vpop.f32.mrf.mxu0
        %v3713 = vadd.f32 %v3624, %v3712
        %v3714 = vpop.f32.mrf.mxu0
        %v3715 = vadd.f32 %v3626, %v3714
        %3716 = vmatmul.bf16.gmra.mxu0 %v3544
        %v3717 = vpop.f32.mrf.mxu0
        %v3718 = vadd.f32 %v3629, %v3717
        %v3719 = vpop.f32.mrf.mxu0
        %v3720 = vadd.f32 %v3631, %v3719
        %3721 = vmatmul.bf16.gmra.mxu0 %v3546
        %v3722 = vpop.f32.mrf.mxu0
        %v3723 = vadd.f32 %v3634, %v3722
        %v3724 = vpop.f32.mrf.mxu0
        %v3725 = vadd.f32 %v3636, %v3724
        %3726 = vmatmul.bf16.gmra.mxu0 %v3548
        %v3727 = vpop.f32.mrf.mxu0
        %v3728 = vadd.f32 %v3639, %v3727
        %v3729 = vpop.f32.mrf.mxu0
        %v3730 = vadd.f32 %v3641, %v3729
        %3731 = vmatmul.bf16.gmra.mxu0 %v3550
        %v3732 = vpop.f32.mrf.mxu0
        %v3733 = vadd.f32 %v3644, %v3732
        %v3734 = vpop.f32.mrf.mxu0
        %v3735 = vadd.f32 %v3646, %v3734
        %3736 = vmatmul.bf16.gmra.mxu0 %v3552
        %v3737 = vpop.f32.mrf.mxu0
        %v3738 = vadd.f32 %v3649, %v3737
        %v3739 = vpop.f32.mrf.mxu0
        %v3740 = vadd.f32 %v3651, %v3739
        %3741 = vmatmul.bf16.gmra.mxu0 %v3554
        %v3742 = vpop.f32.mrf.mxu0
        %v3743 = vadd.f32 %v3654, %v3742
        %v3744 = vpop.f32.mrf.mxu0
        %v3745 = vadd.f32 %v3656, %v3744
        %3746 = vmatmul.bf16.gmra.mxu0 %v3556
        %v3747 = vpop.f32.mrf.mxu0
        %v3748 = vadd.f32 %v3659, %v3747
        %v3749 = vpop.f32.mrf.mxu0
        %v3750 = vadd.f32 %v3661, %v3749
        %3751 = vmatmul.bf16.gmra.mxu0 %v3558
        %v3752 = vpop.f32.mrf.mxu0
        %v3753 = vadd.f32 %v3664, %v3752
        %v3754 = vpop.f32.mrf.mxu0
        %v3755 = vadd.f32 %v3666, %v3754
        %3756 = vmatmul.bf16.gmra.mxu0 %v3560
        %v3757 = vpop.f32.mrf.mxu0
        %v3758 = vadd.f32 %v3669, %v3757
        %v3759 = vpop.f32.mrf.mxu0
        %v3760 = vadd.f32 %v3671, %v3759
        %3761 = vmatmul.bf16.gmra.mxu0 %v3562
        %v3762 = vpop.f32.mrf.mxu0
        %v3763 = vadd.f32 %v3674, %v3762
        %v3764 = vpop.f32.mrf.mxu0
        %v3765 = vadd.f32 %v3676, %v3764
        %3766 = vmatmul.bf16.gmra.mxu0 %v3564
        %v3767 = vpop.f32.mrf.mxu0
        %v3768 = vadd.f32 %v3679, %v3767
        %v3769 = vpop.f32.mrf.mxu0
        %v3770 = vadd.f32 %v3681, %v3769
        %3771 = vmatmul.bf16.gmra.mxu0 %v3566
        %v3772 = vpop.f32.mrf.mxu0
        %v3773 = vadd.f32 %v3684, %v3772
        %v3774 = vpop.f32.mrf.mxu0
        %v3775 = vadd.f32 %v3686, %v3774
        %3776 = vdwg.mxu0
        %3777 = vmatpush.bf16.msra.mxu0 %v3229
        %3778 = vmatpush.bf16.msra.mxu0 %v3227
        %3779 = vmatpush.bf16.msra.mxu0 %v3225
        %3780 = vmatpush.bf16.msra.mxu0 %v3223
        %3781 = vmatpush.bf16.msra.mxu0 %v3221
        %3782 = vmatpush.bf16.msra.mxu0 %v3219
        %3783 = vmatpush.bf16.msra.mxu0 %v3217
        %3784 = vmatpush.bf16.msra.mxu0 %v3215
        %3785 = vmatmul.bf16.gmra.mxu0 %v3535
        %v3786 = vpop.f32.mrf.mxu0
        %v3787 = vadd.f32 %v3282, %v3786
        %v3788 = vpop.f32.mrf.mxu0
        %v3789 = vadd.f32 %v3287, %v3788
        %3790 = vmatmul.bf16.gmra.mxu0 %v3537
        %v3791 = vpop.f32.mrf.mxu0
        %v3792 = vadd.f32 %v3292, %v3791
        %v3793 = vpop.f32.mrf.mxu0
        %v3794 = vadd.f32 %v3297, %v3793
        %3795 = vmatmul.bf16.gmra.mxu0 %v3539
        %v3796 = vpop.f32.mrf.mxu0
        %v3797 = vadd.f32 %v3302, %v3796
        %v3798 = vpop.f32.mrf.mxu0
        %v3799 = vadd.f32 %v3307, %v3798
        %3800 = vmatmul.bf16.gmra.mxu0 %v3541
        %v3801 = vpop.f32.mrf.mxu0
        %v3802 = vadd.f32 %v3312, %v3801
        %v3803 = vpop.f32.mrf.mxu0
        %v3804 = vadd.f32 %v3317, %v3803
        %3805 = vmatmul.bf16.gmra.mxu0 %v3543
        %v3806 = vpop.f32.mrf.mxu0
        %v3807 = vadd.f32 %v3322, %v3806
        %v3808 = vpop.f32.mrf.mxu0
        %v3809 = vadd.f32 %v3327, %v3808
        %3810 = vmatmul.bf16.gmra.mxu0 %v3545
        %v3811 = vpop.f32.mrf.mxu0
        %v3812 = vadd.f32 %v3332, %v3811
        %v3813 = vpop.f32.mrf.mxu0
        %v3814 = vadd.f32 %v3337, %v3813
        %3815 = vmatmul.bf16.gmra.mxu0 %v3547
        %v3816 = vpop.f32.mrf.mxu0
        %v3817 = vadd.f32 %v3342, %v3816
        %v3818 = vpop.f32.mrf.mxu0
        %v3819 = vadd.f32 %v3347, %v3818
        %3820 = vmatmul.bf16.gmra.mxu0 %v3549
        %v3821 = vpop.f32.mrf.mxu0
        %v3822 = vadd.f32 %v3352, %v3821
        %v3823 = vpop.f32.mrf.mxu0
        %v3824 = vadd.f32 %v3357, %v3823
        %3825 = vmatmul.bf16.gmra.mxu0 %v3551
        %v3826 = vpop.f32.mrf.mxu0
        %v3827 = vadd.f32 %v3362, %v3826
        %v3828 = vpop.f32.mrf.mxu0
        %v3829 = vadd.f32 %v3367, %v3828
        %3830 = vmatmul.bf16.gmra.mxu0 %v3553
        %v3831 = vpop.f32.mrf.mxu0
        %v3832 = vadd.f32 %v3372, %v3831
        %v3833 = vpop.f32.mrf.mxu0
        %v3834 = vadd.f32 %v3377, %v3833
        %3835 = vmatmul.bf16.gmra.mxu0 %v3555
        %v3836 = vpop.f32.mrf.mxu0
        %v3837 = vadd.f32 %v3382, %v3836
        %v3838 = vpop.f32.mrf.mxu0
        %v3839 = vadd.f32 %v3387, %v3838
        %3840 = vmatmul.bf16.gmra.mxu0 %v3557
        %v3841 = vpop.f32.mrf.mxu0
        %v3842 = vadd.f32 %v3392, %v3841
        %v3843 = vpop.f32.mrf.mxu0
        %v3844 = vadd.f32 %v3397, %v3843
        %3845 = vmatmul.bf16.gmra.mxu0 %v3559
        %v3846 = vpop.f32.mrf.mxu0
        %v3847 = vadd.f32 %v3402, %v3846
        %v3848 = vpop.f32.mrf.mxu0
        %v3849 = vadd.f32 %v3407, %v3848
        %3850 = vmatmul.bf16.gmra.mxu0 %v3561
        %v3851 = vpop.f32.mrf.mxu0
        %v3852 = vadd.f32 %v3412, %v3851
        %v3853 = vpop.f32.mrf.mxu0
        %v3854 = vadd.f32 %v3417, %v3853
        %3855 = vmatmul.bf16.gmra.mxu0 %v3563
        %v3856 = vpop.f32.mrf.mxu0
        %v3857 = vadd.f32 %v3422, %v3856
        %v3858 = vpop.f32.mrf.mxu0
        %v3859 = vadd.f32 %v3427, %v3858
        %3860 = vmatmul.bf16.gmra.mxu0 %v3565
        %v3861 = vpop.f32.mrf.mxu0
        %v3862 = vadd.f32 %v3432, %v3861
        %v3863 = vpop.f32.mrf.mxu0
        %v3864 = vadd.f32 %v3437, %v3863
        %3865 = vdwg.mxu0
        %3866 = vmatpush.bf16.msra.mxu0 %v3245
        %3867 = vmatpush.bf16.msra.mxu0 %v3243
        %3868 = vmatpush.bf16.msra.mxu0 %v3241
        %3869 = vmatpush.bf16.msra.mxu0 %v3239
        %3870 = vmatpush.bf16.msra.mxu0 %v3237
        %3871 = vmatpush.bf16.msra.mxu0 %v3235
        %3872 = vmatpush.bf16.msra.mxu0 %v3233
        %3873 = vmatpush.bf16.msra.mxu0 %v3231
        %3874 = vmatmul.bf16.gmra.mxu0 %v3536
        %v3875 = vpop.f32.mrf.mxu0
        %v3876 = vadd.f32 %v3787, %v3875
        %v3877 = vpop.f32.mrf.mxu0
        %v3878 = vadd.f32 %v3789, %v3877
        %3879 = vmatmul.bf16.gmra.mxu0 %v3538
        %v3880 = vpop.f32.mrf.mxu0
        %v3881 = vadd.f32 %v3792, %v3880
        %v3882 = vpop.f32.mrf.mxu0
        %v3883 = vadd.f32 %v3794, %v3882
        %3884 = vmatmul.bf16.gmra.mxu0 %v3540
        %v3885 = vpop.f32.mrf.mxu0
        %v3886 = vadd.f32 %v3797, %v3885
        %v3887 = vpop.f32.mrf.mxu0
        %v3888 = vadd.f32 %v3799, %v3887
        %3889 = vmatmul.bf16.gmra.mxu0 %v3542
        %v3890 = vpop.f32.mrf.mxu0
        %v3891 = vadd.f32 %v3802, %v3890
        %v3892 = vpop.f32.mrf.mxu0
        %v3893 = vadd.f32 %v3804, %v3892
        %3894 = vmatmul.bf16.gmra.mxu0 %v3544
        %v3895 = vpop.f32.mrf.mxu0
        %v3896 = vadd.f32 %v3807, %v3895
        %v3897 = vpop.f32.mrf.mxu0
        %v3898 = vadd.f32 %v3809, %v3897
        %3899 = vmatmul.bf16.gmra.mxu0 %v3546
        %v3900 = vpop.f32.mrf.mxu0
        %v3901 = vadd.f32 %v3812, %v3900
        %v3902 = vpop.f32.mrf.mxu0
        %v3903 = vadd.f32 %v3814, %v3902
        %3904 = vmatmul.bf16.gmra.mxu0 %v3548
        %v3905 = vpop.f32.mrf.mxu0
        %v3906 = vadd.f32 %v3817, %v3905
        %v3907 = vpop.f32.mrf.mxu0
        %v3908 = vadd.f32 %v3819, %v3907
        %3909 = vmatmul.bf16.gmra.mxu0 %v3550
        %v3910 = vpop.f32.mrf.mxu0
        %v3911 = vadd.f32 %v3822, %v3910
        %v3912 = vpop.f32.mrf.mxu0
        %v3913 = vadd.f32 %v3824, %v3912
        %3914 = vmatmul.bf16.gmra.mxu0 %v3552
        %v3915 = vpop.f32.mrf.mxu0
        %v3916 = vadd.f32 %v3827, %v3915
        %v3917 = vpop.f32.mrf.mxu0
        %v3918 = vadd.f32 %v3829, %v3917
        %3919 = vmatmul.bf16.gmra.mxu0 %v3554
        %v3920 = vpop.f32.mrf.mxu0
        %v3921 = vadd.f32 %v3832, %v3920
        %v3922 = vpop.f32.mrf.mxu0
        %v3923 = vadd.f32 %v3834, %v3922
        %3924 = vmatmul.bf16.gmra.mxu0 %v3556
        %v3925 = vpop.f32.mrf.mxu0
        %v3926 = vadd.f32 %v3837, %v3925
        %v3927 = vpop.f32.mrf.mxu0
        %v3928 = vadd.f32 %v3839, %v3927
        %3929 = vmatmul.bf16.gmra.mxu0 %v3558
        %v3930 = vpop.f32.mrf.mxu0
        %v3931 = vadd.f32 %v3842, %v3930
        %v3932 = vpop.f32.mrf.mxu0
        %v3933 = vadd.f32 %v3844, %v3932
        %3934 = vmatmul.bf16.gmra.mxu0 %v3560
        %v3935 = vpop.f32.mrf.mxu0
        %v3936 = vadd.f32 %v3847, %v3935
        %v3937 = vpop.f32.mrf.mxu0
        %v3938 = vadd.f32 %v3849, %v3937
        %3939 = vmatmul.bf16.gmra.mxu0 %v3562
        %v3940 = vpop.f32.mrf.mxu0
        %v3941 = vadd.f32 %v3852, %v3940
        %v3942 = vpop.f32.mrf.mxu0
        %v3943 = vadd.f32 %v3854, %v3942
        %3944 = vmatmul.bf16.gmra.mxu0 %v3564
        %v3945 = vpop.f32.mrf.mxu0
        %v3946 = vadd.f32 %v3857, %v3945
        %v3947 = vpop.f32.mrf.mxu0
        %v3948 = vadd.f32 %v3859, %v3947
        %3949 = vmatmul.bf16.gmra.mxu0 %v3566
        %v3950 = vpop.f32.mrf.mxu0
        %v3951 = vadd.f32 %v3862, %v3950
        %v3952 = vpop.f32.mrf.mxu0
        %v3953 = vadd.f32 %v3864, %v3952
        %3954 = vdwg.mxu0
        %v3955 = vadd.f32 %v3117, %v3698
        %v3956 = vadd.f32 %v3118, %v3876
        %v3957 = vadd.f32 %v3119, %v3700
        %v3958 = vadd.f32 %v3120, %v3878
        %v3959 = vadd.f32 %v3121, %v3703
        %v3960 = vadd.f32 %v3122, %v3881
        %v3961 = vadd.f32 %v3123, %v3705
        %v3962 = vadd.f32 %v3124, %v3883
        %v3963 = vadd.f32 %v3125, %v3708
        %v3964 = vadd.f32 %v3126, %v3886
        %v3965 = vadd.f32 %v3127, %v3710
        %v3966 = vadd.f32 %v3128, %v3888
        %v3967 = vadd.f32 %v3129, %v3713
        %v3968 = vadd.f32 %v3130, %v3891
        %v3969 = vadd.f32 %v3131, %v3715
        %v3970 = vadd.f32 %v3132, %v3893
        %v3971 = vadd.f32 %v3133, %v3718
        %v3972 = vadd.f32 %v3134, %v3896
        %v3973 = vadd.f32 %v3135, %v3720
        %v3974 = vadd.f32 %v3136, %v3898
        %v3975 = vadd.f32 %v3137, %v3723
        %v3976 = vadd.f32 %v3138, %v3901
        %v3977 = vadd.f32 %v3139, %v3725
        %v3978 = vadd.f32 %v3140, %v3903
        %v3979 = vadd.f32 %v3141, %v3728
        %v3980 = vadd.f32 %v3142, %v3906
        %v3981 = vadd.f32 %v3143, %v3730
        %v3982 = vadd.f32 %v3144, %v3908
        %v3983 = vadd.f32 %v3145, %v3733
        %v3984 = vadd.f32 %v3146, %v3911
        %v3985 = vadd.f32 %v3147, %v3735
        %v3986 = vadd.f32 %v3148, %v3913
        %v3987 = vadd.f32 %v3149, %v3738
        %v3988 = vadd.f32 %v3150, %v3916
        %v3989 = vadd.f32 %v3151, %v3740
        %v3990 = vadd.f32 %v3152, %v3918
        %v3991 = vadd.f32 %v3153, %v3743
        %v3992 = vadd.f32 %v3154, %v3921
        %v3993 = vadd.f32 %v3155, %v3745
        %v3994 = vadd.f32 %v3156, %v3923
        %v3995 = vadd.f32 %v3157, %v3748
        %v3996 = vadd.f32 %v3158, %v3926
        %v3997 = vadd.f32 %v3159, %v3750
        %v3998 = vadd.f32 %v3160, %v3928
        %v3999 = vadd.f32 %v3161, %v3753
        %v4000 = vadd.f32 %v3162, %v3931
        %v4001 = vadd.f32 %v3163, %v3755
        %v4002 = vadd.f32 %v3164, %v3933
        %v4003 = vadd.f32 %v3165, %v3758
        %v4004 = vadd.f32 %v3166, %v3936
        %v4005 = vadd.f32 %v3167, %v3760
        %v4006 = vadd.f32 %v3168, %v3938
        %v4007 = vadd.f32 %v3169, %v3763
        %v4008 = vadd.f32 %v3170, %v3941
        %v4009 = vadd.f32 %v3171, %v3765
        %v4010 = vadd.f32 %v3172, %v3943
        %v4011 = vadd.f32 %v3173, %v3768
        %v4012 = vadd.f32 %v3174, %v3946
        %v4013 = vadd.f32 %v3175, %v3770
        %v4014 = vadd.f32 %v3176, %v3948
        %v4015 = vadd.f32 %v3177, %v3773
        %v4016 = vadd.f32 %v3178, %v3951
        %v4017 = vadd.f32 %v3179, %v3775
        %v4018 = vadd.f32 %v3180, %v3953
        %v4019 = vmul.f32 %v3955, 0.01
        %v4020 = vmul.f32 %v3956, 0.01
        %v4021 = vmul.f32 %v3957, 0.01
        %v4022 = vmul.f32 %v3958, 0.01
        %v4023 = vmul.f32 %v3959, 0.01
        %v4024 = vmul.f32 %v3960, 0.01
        %v4025 = vmul.f32 %v3961, 0.01
        %v4026 = vmul.f32 %v3962, 0.01
        %v4027 = vmul.f32 %v3963, 0.01
        %v4028 = vmul.f32 %v3964, 0.01
        %v4029 = vmul.f32 %v3965, 0.01
        %v4030 = vmul.f32 %v3966, 0.01
        %v4031 = vmul.f32 %v3967, 0.01
        %v4032 = vmul.f32 %v3968, 0.01
        %v4033 = vmul.f32 %v3969, 0.01
        %v4034 = vmul.f32 %v3970, 0.01
        %v4035 = vmul.f32 %v3971, 0.01
        %v4036 = vmul.f32 %v3972, 0.01
        %v4037 = vmul.f32 %v3973, 0.01
        %v4038 = vmul.f32 %v3974, 0.01
        %v4039 = vmul.f32 %v3975, 0.01
        %v4040 = vmul.f32 %v3976, 0.01
        %v4041 = vmul.f32 %v3977, 0.01
        %v4042 = vmul.f32 %v3978, 0.01
        %v4043 = vmul.f32 %v3979, 0.01
        %v4044 = vmul.f32 %v3980, 0.01
        %v4045 = vmul.f32 %v3981, 0.01
        %v4046 = vmul.f32 %v3982, 0.01
        %v4047 = vmul.f32 %v3983, 0.01
        %v4048 = vmul.f32 %v3984, 0.01
        %v4049 = vmul.f32 %v3985, 0.01
        %v4050 = vmul.f32 %v3986, 0.01
        %v4051 = vmul.f32 %v3987, 0.01
        %v4052 = vmul.f32 %v3988, 0.01
        %v4053 = vmul.f32 %v3989, 0.01
        %v4054 = vmul.f32 %v3990, 0.01
        %v4055 = vmul.f32 %v3991, 0.01
        %v4056 = vmul.f32 %v3992, 0.01
        %v4057 = vmul.f32 %v3993, 0.01
        %v4058 = vmul.f32 %v3994, 0.01
        %v4059 = vmul.f32 %v3995, 0.01
        %v4060 = vmul.f32 %v3996, 0.01
        %v4061 = vmul.f32 %v3997, 0.01
        %v4062 = vmul.f32 %v3998, 0.01
        %v4063 = vmul.f32 %v3999, 0.01
        %v4064 = vmul.f32 %v4000, 0.01
        %v4065 = vmul.f32 %v4001, 0.01
        %v4066 = vmul.f32 %v4002, 0.01
        %v4067 = vmul.f32 %v4003, 0.01
        %v4068 = vmul.f32 %v4004, 0.01
        %v4069 = vmul.f32 %v4005, 0.01
        %v4070 = vmul.f32 %v4006, 0.01
        %v4071 = vmul.f32 %v4007, 0.01
        %v4072 = vmul.f32 %v4008, 0.01
        %v4073 = vmul.f32 %v4009, 0.01
        %v4074 = vmul.f32 %v4010, 0.01
        %v4075 = vmul.f32 %v4011, 0.01
        %v4076 = vmul.f32 %v4012, 0.01
        %v4077 = vmul.f32 %v4013, 0.01
        %v4078 = vmul.f32 %v4014, 0.01
        %v4079 = vmul.f32 %v4015, 0.01
        %v4080 = vmul.f32 %v4016, 0.01
        %v4081 = vmul.f32 %v4017, 0.01
        %v4082 = vmul.f32 %v4018, 0.01
        %v4083 = vmax.f32 %v3955, %v4019
        %v4084 = vmax.f32 %v3956, %v4020
        %v4085 = vmax.f32 %v3957, %v4021
        %v4086 = vmax.f32 %v3958, %v4022
        %v4087 = vmax.f32 %v3959, %v4023
        %v4088 = vmax.f32 %v3960, %v4024
        %v4089 = vmax.f32 %v3961, %v4025
        %v4090 = vmax.f32 %v3962, %v4026
        %v4091 = vmax.f32 %v3963, %v4027
        %v4092 = vmax.f32 %v3964, %v4028
        %v4093 = vmax.f32 %v3965, %v4029
        %v4094 = vmax.f32 %v3966, %v4030
        %v4095 = vmax.f32 %v3967, %v4031
        %v4096 = vmax.f32 %v3968, %v4032
        %v4097 = vmax.f32 %v3969, %v4033
        %v4098 = vmax.f32 %v3970, %v4034
        %v4099 = vmax.f32 %v3971, %v4035
        %v4100 = vmax.f32 %v3972, %v4036
        %v4101 = vmax.f32 %v3973, %v4037
        %v4102 = vmax.f32 %v3974, %v4038
        %v4103 = vmax.f32 %v3975, %v4039
        %v4104 = vmax.f32 %v3976, %v4040
        %v4105 = vmax.f32 %v3977, %v4041
        %v4106 = vmax.f32 %v3978, %v4042
        %v4107 = vmax.f32 %v3979, %v4043
        %v4108 = vmax.f32 %v3980, %v4044
        %v4109 = vmax.f32 %v3981, %v4045
        %v4110 = vmax.f32 %v3982, %v4046
        %v4111 = vmax.f32 %v3983, %v4047
        %v4112 = vmax.f32 %v3984, %v4048
        %v4113 = vmax.f32 %v3985, %v4049
        %v4114 = vmax.f32 %v3986, %v4050
        %v4115 = vmax.f32 %v3987, %v4051
        %v4116 = vmax.f32 %v3988, %v4052
        %v4117 = vmax.f32 %v3989, %v4053
        %v4118 = vmax.f32 %v3990, %v4054
        %v4119 = vmax.f32 %v3991, %v4055
        %v4120 = vmax.f32 %v3992, %v4056
        %v4121 = vmax.f32 %v3993, %v4057
        %v4122 = vmax.f32 %v3994, %v4058
        %v4123 = vmax.f32 %v3995, %v4059
        %v4124 = vmax.f32 %v3996, %v4060
        %v4125 = vmax.f32 %v3997, %v4061
        %v4126 = vmax.f32 %v3998, %v4062
        %v4127 = vmax.f32 %v3999, %v4063
        %v4128 = vmax.f32 %v4000, %v4064
        %v4129 = vmax.f32 %v4001, %v4065
        %v4130 = vmax.f32 %v4002, %v4066
        %v4131 = vmax.f32 %v4003, %v4067
        %v4132 = vmax.f32 %v4004, %v4068
        %v4133 = vmax.f32 %v4005, %v4069
        %v4134 = vmax.f32 %v4006, %v4070
        %v4135 = vmax.f32 %v4007, %v4071
        %v4136 = vmax.f32 %v4008, %v4072
        %v4137 = vmax.f32 %v4009, %v4073
        %v4138 = vmax.f32 %v4010, %v4074
        %v4139 = vmax.f32 %v4011, %v4075
        %v4140 = vmax.f32 %v4012, %v4076
        %v4141 = vmax.f32 %v4013, %v4077
        %v4142 = vmax.f32 %v4014, %v4078
        %v4143 = vmax.f32 %v4015, %v4079
        %v4144 = vmax.f32 %v4016, %v4080
        %v4145 = vmax.f32 %v4017, %v4081
        %v4146 = vmax.f32 %v4018, %v4082
        %s4147 = scalar_lea.vmem %s5, 768
        %v4148 = vld [vmem:[%s4147] sm:$0xff]
        %v4149 = vld [vmem:[%s4147 + $0x8] sm:$0xff]
        %v4150 = vld [vmem:[%s4147 + $0x10] sm:$0xff]
        %v4151 = vld [vmem:[%s4147 + $0x18] sm:$0xff]
        %v4152 = vld [vmem:[%s4147 + $0x20] sm:$0xff]
        %v4153 = vld [vmem:[%s4147 + $0x28] sm:$0xff]
        %v4154 = vld [vmem:[%s4147 + $0x30] sm:$0xff]
        %v4155 = vld [vmem:[%s4147 + $0x38] sm:$0xff]
        %v4156 = vld [vmem:[%s4147 + $0x40] sm:$0xff]
        %v4157 = vld [vmem:[%s4147 + $0x48] sm:$0xff]
        %v4158 = vld [vmem:[%s4147 + $0x50] sm:$0xff]
        %v4159 = vld [vmem:[%s4147 + $0x58] sm:$0xff]
        %v4160 = vld [vmem:[%s4147 + $0x60] sm:$0xff]
        %v4161 = vld [vmem:[%s4147 + $0x68] sm:$0xff]
        %v4162 = vld [vmem:[%s4147 + $0x70] sm:$0xff]
        %v4163 = vld [vmem:[%s4147 + $0x78] sm:$0xff]
        %v4164 = vld [vmem:[%s4147 + $0x80] sm:$0xff]
        %v4165 = vld [vmem:[%s4147 + $0x88] sm:$0xff]
        %v4166 = vld [vmem:[%s4147 + $0x90] sm:$0xff]
        %v4167 = vld [vmem:[%s4147 + $0x98] sm:$0xff]
        %v4168 = vld [vmem:[%s4147 + $0xa0] sm:$0xff]
        %v4169 = vld [vmem:[%s4147 + $0xa8] sm:$0xff]
        %v4170 = vld [vmem:[%s4147 + $0xb0] sm:$0xff]
        %v4171 = vld [vmem:[%s4147 + $0xb8] sm:$0xff]
        %v4172 = vld [vmem:[%s4147 + $0xc0] sm:$0xff]
        %v4173 = vld [vmem:[%s4147 + $0xc8] sm:$0xff]
        %v4174 = vld [vmem:[%s4147 + $0xd0] sm:$0xff]
        %v4175 = vld [vmem:[%s4147 + $0xd8] sm:$0xff]
        %v4176 = vld [vmem:[%s4147 + $0xe0] sm:$0xff]
        %v4177 = vld [vmem:[%s4147 + $0xe8] sm:$0xff]
        %v4178 = vld [vmem:[%s4147 + $0xf0] sm:$0xff]
        %v4179 = vld [vmem:[%s4147 + $0xf8] sm:$0xff]
        %v4180 = vpack.c.bf16 %v4085, %v4083
        %v4181 = vpack.c.bf16 %v4086, %v4084
        %v4182 = vpack.c.bf16 %v4089, %v4087
        %v4183 = vpack.c.bf16 %v4090, %v4088
        %v4184 = vpack.c.bf16 %v4093, %v4091
        %v4185 = vpack.c.bf16 %v4094, %v4092
        %v4186 = vpack.c.bf16 %v4097, %v4095
        %v4187 = vpack.c.bf16 %v4098, %v4096
        %v4188 = vpack.c.bf16 %v4101, %v4099
        %v4189 = vpack.c.bf16 %v4102, %v4100
        %v4190 = vpack.c.bf16 %v4105, %v4103
        %v4191 = vpack.c.bf16 %v4106, %v4104
        %v4192 = vpack.c.bf16 %v4109, %v4107
        %v4193 = vpack.c.bf16 %v4110, %v4108
        %v4194 = vpack.c.bf16 %v4113, %v4111
        %v4195 = vpack.c.bf16 %v4114, %v4112
        %v4196 = vpack.c.bf16 %v4117, %v4115
        %v4197 = vpack.c.bf16 %v4118, %v4116
        %v4198 = vpack.c.bf16 %v4121, %v4119
        %v4199 = vpack.c.bf16 %v4122, %v4120
        %v4200 = vpack.c.bf16 %v4125, %v4123
        %v4201 = vpack.c.bf16 %v4126, %v4124
        %v4202 = vpack.c.bf16 %v4129, %v4127
        %v4203 = vpack.c.bf16 %v4130, %v4128
        %v4204 = vpack.c.bf16 %v4133, %v4131
        %v4205 = vpack.c.bf16 %v4134, %v4132
        %v4206 = vpack.c.bf16 %v4137, %v4135
        %v4207 = vpack.c.bf16 %v4138, %v4136
        %v4208 = vpack.c.bf16 %v4141, %v4139
        %v4209 = vpack.c.bf16 %v4142, %v4140
        %v4210 = vpack.c.bf16 %v4145, %v4143
        %v4211 = vpack.c.bf16 %v4146, %v4144
        %s4212 = scalar_lea.vmem %s6, 768
        %v4213 = vld [vmem:[%s4212] sm:$0xff]
        %v4214 = vld [vmem:[%s4212 + $0x8] sm:$0xff]
        %v4215 = vld [vmem:[%s4212 + $0x10] sm:$0xff]
        %v4216 = vld [vmem:[%s4212 + $0x18] sm:$0xff]
        %v4217 = vld [vmem:[%s4212 + $0x20] sm:$0xff]
        %v4218 = vld [vmem:[%s4212 + $0x28] sm:$0xff]
        %v4219 = vld [vmem:[%s4212 + $0x30] sm:$0xff]
        %v4220 = vld [vmem:[%s4212 + $0x38] sm:$0xff]
        %v4221 = vld [vmem:[%s4212 + $0x40] sm:$0xff]
        %v4222 = vld [vmem:[%s4212 + $0x48] sm:$0xff]
        %v4223 = vld [vmem:[%s4212 + $0x50] sm:$0xff]
        %v4224 = vld [vmem:[%s4212 + $0x58] sm:$0xff]
        %v4225 = vld [vmem:[%s4212 + $0x60] sm:$0xff]
        %v4226 = vld [vmem:[%s4212 + $0x68] sm:$0xff]
        %v4227 = vld [vmem:[%s4212 + $0x70] sm:$0xff]
        %v4228 = vld [vmem:[%s4212 + $0x78] sm:$0xff]
        %v4229 = vld [vmem:[%s4212 + $0x80] sm:$0xff]
        %v4230 = vld [vmem:[%s4212 + $0x88] sm:$0xff]
        %v4231 = vld [vmem:[%s4212 + $0x90] sm:$0xff]
        %v4232 = vld [vmem:[%s4212 + $0x98] sm:$0xff]
        %v4233 = vld [vmem:[%s4212 + $0xa0] sm:$0xff]
        %v4234 = vld [vmem:[%s4212 + $0xa8] sm:$0xff]
        %v4235 = vld [vmem:[%s4212 + $0xb0] sm:$0xff]
        %v4236 = vld [vmem:[%s4212 + $0xb8] sm:$0xff]
        %v4237 = vld [vmem:[%s4212 + $0xc0] sm:$0xff]
        %v4238 = vld [vmem:[%s4212 + $0xc8] sm:$0xff]
        %v4239 = vld [vmem:[%s4212 + $0xd0] sm:$0xff]
        %v4240 = vld [vmem:[%s4212 + $0xd8] sm:$0xff]
        %v4241 = vld [vmem:[%s4212 + $0xe0] sm:$0xff]
        %v4242 = vld [vmem:[%s4212 + $0xe8] sm:$0xff]
        %v4243 = vld [vmem:[%s4212 + $0xf0] sm:$0xff]
        %v4244 = vld [vmem:[%s4212 + $0xf8] sm:$0xff]
        %4246 = vset.pattern.permute.xlu0 0
        %4247 = vperm.xlu0 %4246, %v4213
        %v4248 = vpop.permute.xlu0 %4247
        %4251 = vset.pattern.permute.xlu0 0
        %4252 = vperm.xlu0 %4251, %v4214
        %v4253 = vpop.permute.xlu0 %4252
        %4256 = vset.pattern.permute.xlu0 0
        %4257 = vperm.xlu0 %4256, %v4215
        %v4258 = vpop.permute.xlu0 %4257
        %4261 = vset.pattern.permute.xlu0 0
        %4262 = vperm.xlu0 %4261, %v4216
        %v4263 = vpop.permute.xlu0 %4262
        %4266 = vset.pattern.permute.xlu0 0
        %4267 = vperm.xlu0 %4266, %v4217
        %v4268 = vpop.permute.xlu0 %4267
        %4271 = vset.pattern.permute.xlu0 0
        %4272 = vperm.xlu0 %4271, %v4218
        %v4273 = vpop.permute.xlu0 %4272
        %4276 = vset.pattern.permute.xlu0 0
        %4277 = vperm.xlu0 %4276, %v4219
        %v4278 = vpop.permute.xlu0 %4277
        %4281 = vset.pattern.permute.xlu0 0
        %4282 = vperm.xlu0 %4281, %v4220
        %v4283 = vpop.permute.xlu0 %4282
        %4286 = vset.pattern.permute.xlu0 0
        %4287 = vperm.xlu0 %4286, %v4221
        %v4288 = vpop.permute.xlu0 %4287
        %4291 = vset.pattern.permute.xlu0 0
        %4292 = vperm.xlu0 %4291, %v4222
        %v4293 = vpop.permute.xlu0 %4292
        %4296 = vset.pattern.permute.xlu0 0
        %4297 = vperm.xlu0 %4296, %v4223
        %v4298 = vpop.permute.xlu0 %4297
        %4301 = vset.pattern.permute.xlu0 0
        %4302 = vperm.xlu0 %4301, %v4224
        %v4303 = vpop.permute.xlu0 %4302
        %4306 = vset.pattern.permute.xlu0 0
        %4307 = vperm.xlu0 %4306, %v4225
        %v4308 = vpop.permute.xlu0 %4307
        %4311 = vset.pattern.permute.xlu0 0
        %4312 = vperm.xlu0 %4311, %v4226
        %v4313 = vpop.permute.xlu0 %4312
        %4316 = vset.pattern.permute.xlu0 0
        %4317 = vperm.xlu0 %4316, %v4227
        %v4318 = vpop.permute.xlu0 %4317
        %4321 = vset.pattern.permute.xlu0 0
        %4322 = vperm.xlu0 %4321, %v4228
        %v4323 = vpop.permute.xlu0 %4322
        %4326 = vset.pattern.permute.xlu0 0
        %4327 = vperm.xlu0 %4326, %v4229
        %v4328 = vpop.permute.xlu0 %4327
        %4331 = vset.pattern.permute.xlu0 0
        %4332 = vperm.xlu0 %4331, %v4230
        %v4333 = vpop.permute.xlu0 %4332
        %4336 = vset.pattern.permute.xlu0 0
        %4337 = vperm.xlu0 %4336, %v4231
        %v4338 = vpop.permute.xlu0 %4337
        %4341 = vset.pattern.permute.xlu0 0
        %4342 = vperm.xlu0 %4341, %v4232
        %v4343 = vpop.permute.xlu0 %4342
        %4346 = vset.pattern.permute.xlu0 0
        %4347 = vperm.xlu0 %4346, %v4233
        %v4348 = vpop.permute.xlu0 %4347
        %4351 = vset.pattern.permute.xlu0 0
        %4352 = vperm.xlu0 %4351, %v4234
        %v4353 = vpop.permute.xlu0 %4352
        %4356 = vset.pattern.permute.xlu0 0
        %4357 = vperm.xlu0 %4356, %v4235
        %v4358 = vpop.permute.xlu0 %4357
        %4361 = vset.pattern.permute.xlu0 0
        %4362 = vperm.xlu0 %4361, %v4236
        %v4363 = vpop.permute.xlu0 %4362
        %4366 = vset.pattern.permute.xlu0 0
        %4367 = vperm.xlu0 %4366, %v4237
        %v4368 = vpop.permute.xlu0 %4367
        %4371 = vset.pattern.permute.xlu0 0
        %4372 = vperm.xlu0 %4371, %v4238
        %v4373 = vpop.permute.xlu0 %4372
        %4376 = vset.pattern.permute.xlu0 0
        %4377 = vperm.xlu0 %4376, %v4239
        %v4378 = vpop.permute.xlu0 %4377
        %4381 = vset.pattern.permute.xlu0 0
        %4382 = vperm.xlu0 %4381, %v4240
        %v4383 = vpop.permute.xlu0 %4382
        %4386 = vset.pattern.permute.xlu0 0
        %4387 = vperm.xlu0 %4386, %v4241
        %v4388 = vpop.permute.xlu0 %4387
        %4391 = vset.pattern.permute.xlu0 0
        %4392 = vperm.xlu0 %4391, %v4242
        %v4393 = vpop.permute.xlu0 %4392
        %4396 = vset.pattern.permute.xlu0 0
        %4397 = vperm.xlu0 %4396, %v4243
        %v4398 = vpop.permute.xlu0 %4397
        %4401 = vset.pattern.permute.xlu0 0
        %4402 = vperm.xlu0 %4401, %v4244
        %v4403 = vpop.permute.xlu0 %4402
        %v4437 = vunpack.c.l.b16 %v4148
        %v4438 = vunpack.c.h.b16 %v4148
        %v4439 = vunpack.c.l.b16 %v4149
        %v4440 = vunpack.c.h.b16 %v4149
        %v4441 = vunpack.c.l.b16 %v4150
        %v4442 = vunpack.c.h.b16 %v4150
        %v4443 = vunpack.c.l.b16 %v4151
        %v4444 = vunpack.c.h.b16 %v4151
        %v4445 = vunpack.c.l.b16 %v4152
        %v4446 = vunpack.c.h.b16 %v4152
        %v4447 = vunpack.c.l.b16 %v4153
        %v4448 = vunpack.c.h.b16 %v4153
        %v4449 = vunpack.c.l.b16 %v4154
        %v4450 = vunpack.c.h.b16 %v4154
        %v4451 = vunpack.c.l.b16 %v4155
        %v4452 = vunpack.c.h.b16 %v4155
        %v4453 = vunpack.c.l.b16 %v4156
        %v4454 = vunpack.c.h.b16 %v4156
        %v4455 = vunpack.c.l.b16 %v4157
        %v4456 = vunpack.c.h.b16 %v4157
        %v4457 = vunpack.c.l.b16 %v4158
        %v4458 = vunpack.c.h.b16 %v4158
        %v4459 = vunpack.c.l.b16 %v4159
        %v4460 = vunpack.c.h.b16 %v4159
        %v4461 = vunpack.c.l.b16 %v4160
        %v4462 = vunpack.c.h.b16 %v4160
        %v4463 = vunpack.c.l.b16 %v4161
        %v4464 = vunpack.c.h.b16 %v4161
        %v4465 = vunpack.c.l.b16 %v4162
        %v4466 = vunpack.c.h.b16 %v4162
        %v4467 = vunpack.c.l.b16 %v4163
        %v4468 = vunpack.c.h.b16 %v4163
        %v4469 = vunpack.c.l.b16 %v4164
        %v4470 = vunpack.c.h.b16 %v4164
        %v4471 = vunpack.c.l.b16 %v4165
        %v4472 = vunpack.c.h.b16 %v4165
        %v4473 = vunpack.c.l.b16 %v4166
        %v4474 = vunpack.c.h.b16 %v4166
        %v4475 = vunpack.c.l.b16 %v4167
        %v4476 = vunpack.c.h.b16 %v4167
        %v4477 = vunpack.c.l.b16 %v4168
        %v4478 = vunpack.c.h.b16 %v4168
        %v4479 = vunpack.c.l.b16 %v4169
        %v4480 = vunpack.c.h.b16 %v4169
        %v4481 = vunpack.c.l.b16 %v4170
        %v4482 = vunpack.c.h.b16 %v4170
        %v4483 = vunpack.c.l.b16 %v4171
        %v4484 = vunpack.c.h.b16 %v4171
        %v4485 = vunpack.c.l.b16 %v4172
        %v4486 = vunpack.c.h.b16 %v4172
        %v4487 = vunpack.c.l.b16 %v4173
        %v4488 = vunpack.c.h.b16 %v4173
        %v4489 = vunpack.c.l.b16 %v4174
        %v4490 = vunpack.c.h.b16 %v4174
        %v4491 = vunpack.c.l.b16 %v4175
        %v4492 = vunpack.c.h.b16 %v4175
        %v4493 = vunpack.c.l.b16 %v4176
        %v4494 = vunpack.c.h.b16 %v4176
        %v4495 = vunpack.c.l.b16 %v4177
        %v4496 = vunpack.c.h.b16 %v4177
        %v4497 = vunpack.c.l.b16 %v4178
        %v4498 = vunpack.c.h.b16 %v4178
        %v4499 = vunpack.c.l.b16 %v4179
        %v4500 = vunpack.c.h.b16 %v4179
        %v4501 = vpack.c.b16 %v4439, %v4437
        %v4502 = vpack.c.b16 %v4440, %v4438
        %v4503 = vpack.c.b16 %v4443, %v4441
        %v4504 = vpack.c.b16 %v4444, %v4442
        %v4505 = vpack.c.b16 %v4447, %v4445
        %v4506 = vpack.c.b16 %v4448, %v4446
        %v4507 = vpack.c.b16 %v4451, %v4449
        %v4508 = vpack.c.b16 %v4452, %v4450
        %v4509 = vpack.c.b16 %v4455, %v4453
        %v4510 = vpack.c.b16 %v4456, %v4454
        %v4511 = vpack.c.b16 %v4459, %v4457
        %v4512 = vpack.c.b16 %v4460, %v4458
        %v4513 = vpack.c.b16 %v4463, %v4461
        %v4514 = vpack.c.b16 %v4464, %v4462
        %v4515 = vpack.c.b16 %v4467, %v4465
        %v4516 = vpack.c.b16 %v4468, %v4466
        %v4517 = vpack.c.b16 %v4471, %v4469
        %v4518 = vpack.c.b16 %v4472, %v4470
        %v4519 = vpack.c.b16 %v4475, %v4473
        %v4520 = vpack.c.b16 %v4476, %v4474
        %v4521 = vpack.c.b16 %v4479, %v4477
        %v4522 = vpack.c.b16 %v4480, %v4478
        %v4523 = vpack.c.b16 %v4483, %v4481
        %v4524 = vpack.c.b16 %v4484, %v4482
        %v4525 = vpack.c.b16 %v4487, %v4485
        %v4526 = vpack.c.b16 %v4488, %v4486
        %v4527 = vpack.c.b16 %v4491, %v4489
        %v4528 = vpack.c.b16 %v4492, %v4490
        %v4529 = vpack.c.b16 %v4495, %v4493
        %v4530 = vpack.c.b16 %v4496, %v4494
        %v4531 = vpack.c.b16 %v4499, %v4497
        %v4532 = vpack.c.b16 %v4500, %v4498
        %4565 = vmatpush.bf16.msra.mxu0 %v4194
        %4566 = vmatpush.bf16.msra.mxu0 %v4192
        %4567 = vmatpush.bf16.msra.mxu0 %v4190
        %4568 = vmatpush.bf16.msra.mxu0 %v4188
        %4569 = vmatpush.bf16.msra.mxu0 %v4186
        %4570 = vmatpush.bf16.msra.mxu0 %v4184
        %4571 = vmatpush.bf16.msra.mxu0 %v4182
        %4572 = vmatpush.bf16.msra.mxu0 %v4180
        %4573 = vmatmul.bf16.gmra.mxu0 %v4501
        %v4574 = vpop.f32.mrf.mxu0
        %v4575 = vadd.f32 %v4248, %v4574
        %v4576 = vpop.f32.mrf.mxu0
        %v4577 = vadd.f32 %v4253, %v4576
        %4578 = vmatmul.bf16.gmra.mxu0 %v4503
        %v4579 = vpop.f32.mrf.mxu0
        %v4580 = vadd.f32 %v4258, %v4579
        %v4581 = vpop.f32.mrf.mxu0
        %v4582 = vadd.f32 %v4263, %v4581
        %4583 = vmatmul.bf16.gmra.mxu0 %v4505
        %v4584 = vpop.f32.mrf.mxu0
        %v4585 = vadd.f32 %v4268, %v4584
        %v4586 = vpop.f32.mrf.mxu0
        %v4587 = vadd.f32 %v4273, %v4586
        %4588 = vmatmul.bf16.gmra.mxu0 %v4507
        %v4589 = vpop.f32.mrf.mxu0
        %v4590 = vadd.f32 %v4278, %v4589
        %v4591 = vpop.f32.mrf.mxu0
        %v4592 = vadd.f32 %v4283, %v4591
        %4593 = vmatmul.bf16.gmra.mxu0 %v4509
        %v4594 = vpop.f32.mrf.mxu0
        %v4595 = vadd.f32 %v4288, %v4594
        %v4596 = vpop.f32.mrf.mxu0
        %v4597 = vadd.f32 %v4293, %v4596
        %4598 = vmatmul.bf16.gmra.mxu0 %v4511
        %v4599 = vpop.f32.mrf.mxu0
        %v4600 = vadd.f32 %v4298, %v4599
        %v4601 = vpop.f32.mrf.mxu0
        %v4602 = vadd.f32 %v4303, %v4601
        %4603 = vmatmul.bf16.gmra.mxu0 %v4513
        %v4604 = vpop.f32.mrf.mxu0
        %v4605 = vadd.f32 %v4308, %v4604
        %v4606 = vpop.f32.mrf.mxu0
        %v4607 = vadd.f32 %v4313, %v4606
        %4608 = vmatmul.bf16.gmra.mxu0 %v4515
        %v4609 = vpop.f32.mrf.mxu0
        %v4610 = vadd.f32 %v4318, %v4609
        %v4611 = vpop.f32.mrf.mxu0
        %v4612 = vadd.f32 %v4323, %v4611
        %4613 = vmatmul.bf16.gmra.mxu0 %v4517
        %v4614 = vpop.f32.mrf.mxu0
        %v4615 = vadd.f32 %v4328, %v4614
        %v4616 = vpop.f32.mrf.mxu0
        %v4617 = vadd.f32 %v4333, %v4616
        %4618 = vmatmul.bf16.gmra.mxu0 %v4519
        %v4619 = vpop.f32.mrf.mxu0
        %v4620 = vadd.f32 %v4338, %v4619
        %v4621 = vpop.f32.mrf.mxu0
        %v4622 = vadd.f32 %v4343, %v4621
        %4623 = vmatmul.bf16.gmra.mxu0 %v4521
        %v4624 = vpop.f32.mrf.mxu0
        %v4625 = vadd.f32 %v4348, %v4624
        %v4626 = vpop.f32.mrf.mxu0
        %v4627 = vadd.f32 %v4353, %v4626
        %4628 = vmatmul.bf16.gmra.mxu0 %v4523
        %v4629 = vpop.f32.mrf.mxu0
        %v4630 = vadd.f32 %v4358, %v4629
        %v4631 = vpop.f32.mrf.mxu0
        %v4632 = vadd.f32 %v4363, %v4631
        %4633 = vmatmul.bf16.gmra.mxu0 %v4525
        %v4634 = vpop.f32.mrf.mxu0
        %v4635 = vadd.f32 %v4368, %v4634
        %v4636 = vpop.f32.mrf.mxu0
        %v4637 = vadd.f32 %v4373, %v4636
        %4638 = vmatmul.bf16.gmra.mxu0 %v4527
        %v4639 = vpop.f32.mrf.mxu0
        %v4640 = vadd.f32 %v4378, %v4639
        %v4641 = vpop.f32.mrf.mxu0
        %v4642 = vadd.f32 %v4383, %v4641
        %4643 = vmatmul.bf16.gmra.mxu0 %v4529
        %v4644 = vpop.f32.mrf.mxu0
        %v4645 = vadd.f32 %v4388, %v4644
        %v4646 = vpop.f32.mrf.mxu0
        %v4647 = vadd.f32 %v4393, %v4646
        %4648 = vmatmul.bf16.gmra.mxu0 %v4531
        %v4649 = vpop.f32.mrf.mxu0
        %v4650 = vadd.f32 %v4398, %v4649
        %v4651 = vpop.f32.mrf.mxu0
        %v4652 = vadd.f32 %v4403, %v4651
        %4653 = vdwg.mxu0
        %4654 = vmatpush.bf16.msra.mxu0 %v4210
        %4655 = vmatpush.bf16.msra.mxu0 %v4208
        %4656 = vmatpush.bf16.msra.mxu0 %v4206
        %4657 = vmatpush.bf16.msra.mxu0 %v4204
        %4658 = vmatpush.bf16.msra.mxu0 %v4202
        %4659 = vmatpush.bf16.msra.mxu0 %v4200
        %4660 = vmatpush.bf16.msra.mxu0 %v4198
        %4661 = vmatpush.bf16.msra.mxu0 %v4196
        %4662 = vmatmul.bf16.gmra.mxu0 %v4502
        %v4663 = vpop.f32.mrf.mxu0
        %v4664 = vadd.f32 %v4575, %v4663
        %v4665 = vpop.f32.mrf.mxu0
        %v4666 = vadd.f32 %v4577, %v4665
        %4667 = vmatmul.bf16.gmra.mxu0 %v4504
        %v4668 = vpop.f32.mrf.mxu0
        %v4669 = vadd.f32 %v4580, %v4668
        %v4670 = vpop.f32.mrf.mxu0
        %v4671 = vadd.f32 %v4582, %v4670
        %4672 = vmatmul.bf16.gmra.mxu0 %v4506
        %v4673 = vpop.f32.mrf.mxu0
        %v4674 = vadd.f32 %v4585, %v4673
        %v4675 = vpop.f32.mrf.mxu0
        %v4676 = vadd.f32 %v4587, %v4675
        %4677 = vmatmul.bf16.gmra.mxu0 %v4508
        %v4678 = vpop.f32.mrf.mxu0
        %v4679 = vadd.f32 %v4590, %v4678
        %v4680 = vpop.f32.mrf.mxu0
        %v4681 = vadd.f32 %v4592, %v4680
        %4682 = vmatmul.bf16.gmra.mxu0 %v4510
        %v4683 = vpop.f32.mrf.mxu0
        %v4684 = vadd.f32 %v4595, %v4683
        %v4685 = vpop.f32.mrf.mxu0
        %v4686 = vadd.f32 %v4597, %v4685
        %4687 = vmatmul.bf16.gmra.mxu0 %v4512
        %v4688 = vpop.f32.mrf.mxu0
        %v4689 = vadd.f32 %v4600, %v4688
        %v4690 = vpop.f32.mrf.mxu0
        %v4691 = vadd.f32 %v4602, %v4690
        %4692 = vmatmul.bf16.gmra.mxu0 %v4514
        %v4693 = vpop.f32.mrf.mxu0
        %v4694 = vadd.f32 %v4605, %v4693
        %v4695 = vpop.f32.mrf.mxu0
        %v4696 = vadd.f32 %v4607, %v4695
        %4697 = vmatmul.bf16.gmra.mxu0 %v4516
        %v4698 = vpop.f32.mrf.mxu0
        %v4699 = vadd.f32 %v4610, %v4698
        %v4700 = vpop.f32.mrf.mxu0
        %v4701 = vadd.f32 %v4612, %v4700
        %4702 = vmatmul.bf16.gmra.mxu0 %v4518
        %v4703 = vpop.f32.mrf.mxu0
        %v4704 = vadd.f32 %v4615, %v4703
        %v4705 = vpop.f32.mrf.mxu0
        %v4706 = vadd.f32 %v4617, %v4705
        %4707 = vmatmul.bf16.gmra.mxu0 %v4520
        %v4708 = vpop.f32.mrf.mxu0
        %v4709 = vadd.f32 %v4620, %v4708
        %v4710 = vpop.f32.mrf.mxu0
        %v4711 = vadd.f32 %v4622, %v4710
        %4712 = vmatmul.bf16.gmra.mxu0 %v4522
        %v4713 = vpop.f32.mrf.mxu0
        %v4714 = vadd.f32 %v4625, %v4713
        %v4715 = vpop.f32.mrf.mxu0
        %v4716 = vadd.f32 %v4627, %v4715
        %4717 = vmatmul.bf16.gmra.mxu0 %v4524
        %v4718 = vpop.f32.mrf.mxu0
        %v4719 = vadd.f32 %v4630, %v4718
        %v4720 = vpop.f32.mrf.mxu0
        %v4721 = vadd.f32 %v4632, %v4720
        %4722 = vmatmul.bf16.gmra.mxu0 %v4526
        %v4723 = vpop.f32.mrf.mxu0
        %v4724 = vadd.f32 %v4635, %v4723
        %v4725 = vpop.f32.mrf.mxu0
        %v4726 = vadd.f32 %v4637, %v4725
        %4727 = vmatmul.bf16.gmra.mxu0 %v4528
        %v4728 = vpop.f32.mrf.mxu0
        %v4729 = vadd.f32 %v4640, %v4728
        %v4730 = vpop.f32.mrf.mxu0
        %v4731 = vadd.f32 %v4642, %v4730
        %4732 = vmatmul.bf16.gmra.mxu0 %v4530
        %v4733 = vpop.f32.mrf.mxu0
        %v4734 = vadd.f32 %v4645, %v4733
        %v4735 = vpop.f32.mrf.mxu0
        %v4736 = vadd.f32 %v4647, %v4735
        %4737 = vmatmul.bf16.gmra.mxu0 %v4532
        %v4738 = vpop.f32.mrf.mxu0
        %v4739 = vadd.f32 %v4650, %v4738
        %v4740 = vpop.f32.mrf.mxu0
        %v4741 = vadd.f32 %v4652, %v4740
        %4742 = vdwg.mxu0
        %4743 = vmatpush.bf16.msra.mxu0 %v4195
        %4744 = vmatpush.bf16.msra.mxu0 %v4193
        %4745 = vmatpush.bf16.msra.mxu0 %v4191
        %4746 = vmatpush.bf16.msra.mxu0 %v4189
        %4747 = vmatpush.bf16.msra.mxu0 %v4187
        %4748 = vmatpush.bf16.msra.mxu0 %v4185
        %4749 = vmatpush.bf16.msra.mxu0 %v4183
        %4750 = vmatpush.bf16.msra.mxu0 %v4181
        %4751 = vmatmul.bf16.gmra.mxu0 %v4501
        %v4752 = vpop.f32.mrf.mxu0
        %v4753 = vadd.f32 %v4248, %v4752
        %v4754 = vpop.f32.mrf.mxu0
        %v4755 = vadd.f32 %v4253, %v4754
        %4756 = vmatmul.bf16.gmra.mxu0 %v4503
        %v4757 = vpop.f32.mrf.mxu0
        %v4758 = vadd.f32 %v4258, %v4757
        %v4759 = vpop.f32.mrf.mxu0
        %v4760 = vadd.f32 %v4263, %v4759
        %4761 = vmatmul.bf16.gmra.mxu0 %v4505
        %v4762 = vpop.f32.mrf.mxu0
        %v4763 = vadd.f32 %v4268, %v4762
        %v4764 = vpop.f32.mrf.mxu0
        %v4765 = vadd.f32 %v4273, %v4764
        %4766 = vmatmul.bf16.gmra.mxu0 %v4507
        %v4767 = vpop.f32.mrf.mxu0
        %v4768 = vadd.f32 %v4278, %v4767
        %v4769 = vpop.f32.mrf.mxu0
        %v4770 = vadd.f32 %v4283, %v4769
        %4771 = vmatmul.bf16.gmra.mxu0 %v4509
        %v4772 = vpop.f32.mrf.mxu0
        %v4773 = vadd.f32 %v4288, %v4772
        %v4774 = vpop.f32.mrf.mxu0
        %v4775 = vadd.f32 %v4293, %v4774
        %4776 = vmatmul.bf16.gmra.mxu0 %v4511
        %v4777 = vpop.f32.mrf.mxu0
        %v4778 = vadd.f32 %v4298, %v4777
        %v4779 = vpop.f32.mrf.mxu0
        %v4780 = vadd.f32 %v4303, %v4779
        %4781 = vmatmul.bf16.gmra.mxu0 %v4513
        %v4782 = vpop.f32.mrf.mxu0
        %v4783 = vadd.f32 %v4308, %v4782
        %v4784 = vpop.f32.mrf.mxu0
        %v4785 = vadd.f32 %v4313, %v4784
        %4786 = vmatmul.bf16.gmra.mxu0 %v4515
        %v4787 = vpop.f32.mrf.mxu0
        %v4788 = vadd.f32 %v4318, %v4787
        %v4789 = vpop.f32.mrf.mxu0
        %v4790 = vadd.f32 %v4323, %v4789
        %4791 = vmatmul.bf16.gmra.mxu0 %v4517
        %v4792 = vpop.f32.mrf.mxu0
        %v4793 = vadd.f32 %v4328, %v4792
        %v4794 = vpop.f32.mrf.mxu0
        %v4795 = vadd.f32 %v4333, %v4794
        %4796 = vmatmul.bf16.gmra.mxu0 %v4519
        %v4797 = vpop.f32.mrf.mxu0
        %v4798 = vadd.f32 %v4338, %v4797
        %v4799 = vpop.f32.mrf.mxu0
        %v4800 = vadd.f32 %v4343, %v4799
        %4801 = vmatmul.bf16.gmra.mxu0 %v4521
        %v4802 = vpop.f32.mrf.mxu0
        %v4803 = vadd.f32 %v4348, %v4802
        %v4804 = vpop.f32.mrf.mxu0
        %v4805 = vadd.f32 %v4353, %v4804
        %4806 = vmatmul.bf16.gmra.mxu0 %v4523
        %v4807 = vpop.f32.mrf.mxu0
        %v4808 = vadd.f32 %v4358, %v4807
        %v4809 = vpop.f32.mrf.mxu0
        %v4810 = vadd.f32 %v4363, %v4809
        %4811 = vmatmul.bf16.gmra.mxu0 %v4525
        %v4812 = vpop.f32.mrf.mxu0
        %v4813 = vadd.f32 %v4368, %v4812
        %v4814 = vpop.f32.mrf.mxu0
        %v4815 = vadd.f32 %v4373, %v4814
        %4816 = vmatmul.bf16.gmra.mxu0 %v4527
        %v4817 = vpop.f32.mrf.mxu0
        %v4818 = vadd.f32 %v4378, %v4817
        %v4819 = vpop.f32.mrf.mxu0
        %v4820 = vadd.f32 %v4383, %v4819
        %4821 = vmatmul.bf16.gmra.mxu0 %v4529
        %v4822 = vpop.f32.mrf.mxu0
        %v4823 = vadd.f32 %v4388, %v4822
        %v4824 = vpop.f32.mrf.mxu0
        %v4825 = vadd.f32 %v4393, %v4824
        %4826 = vmatmul.bf16.gmra.mxu0 %v4531
        %v4827 = vpop.f32.mrf.mxu0
        %v4828 = vadd.f32 %v4398, %v4827
        %v4829 = vpop.f32.mrf.mxu0
        %v4830 = vadd.f32 %v4403, %v4829
        %4831 = vdwg.mxu0
        %4832 = vmatpush.bf16.msra.mxu0 %v4211
        %4833 = vmatpush.bf16.msra.mxu0 %v4209
        %4834 = vmatpush.bf16.msra.mxu0 %v4207
        %4835 = vmatpush.bf16.msra.mxu0 %v4205
        %4836 = vmatpush.bf16.msra.mxu0 %v4203
        %4837 = vmatpush.bf16.msra.mxu0 %v4201
        %4838 = vmatpush.bf16.msra.mxu0 %v4199
        %4839 = vmatpush.bf16.msra.mxu0 %v4197
        %4840 = vmatmul.bf16.gmra.mxu0 %v4502
        %v4841 = vpop.f32.mrf.mxu0
        %v4842 = vadd.f32 %v4753, %v4841
        %v4843 = vpop.f32.mrf.mxu0
        %v4844 = vadd.f32 %v4755, %v4843
        %4845 = vmatmul.bf16.gmra.mxu0 %v4504
        %v4846 = vpop.f32.mrf.mxu0
        %v4847 = vadd.f32 %v4758, %v4846
        %v4848 = vpop.f32.mrf.mxu0
        %v4849 = vadd.f32 %v4760, %v4848
        %4850 = vmatmul.bf16.gmra.mxu0 %v4506
        %v4851 = vpop.f32.mrf.mxu0
        %v4852 = vadd.f32 %v4763, %v4851
        %v4853 = vpop.f32.mrf.mxu0
        %v4854 = vadd.f32 %v4765, %v4853
        %4855 = vmatmul.bf16.gmra.mxu0 %v4508
        %v4856 = vpop.f32.mrf.mxu0
        %v4857 = vadd.f32 %v4768, %v4856
        %v4858 = vpop.f32.mrf.mxu0
        %v4859 = vadd.f32 %v4770, %v4858
        %4860 = vmatmul.bf16.gmra.mxu0 %v4510
        %v4861 = vpop.f32.mrf.mxu0
        %v4862 = vadd.f32 %v4773, %v4861
        %v4863 = vpop.f32.mrf.mxu0
        %v4864 = vadd.f32 %v4775, %v4863
        %4865 = vmatmul.bf16.gmra.mxu0 %v4512
        %v4866 = vpop.f32.mrf.mxu0
        %v4867 = vadd.f32 %v4778, %v4866
        %v4868 = vpop.f32.mrf.mxu0
        %v4869 = vadd.f32 %v4780, %v4868
        %4870 = vmatmul.bf16.gmra.mxu0 %v4514
        %v4871 = vpop.f32.mrf.mxu0
        %v4872 = vadd.f32 %v4783, %v4871
        %v4873 = vpop.f32.mrf.mxu0
        %v4874 = vadd.f32 %v4785, %v4873
        %4875 = vmatmul.bf16.gmra.mxu0 %v4516
        %v4876 = vpop.f32.mrf.mxu0
        %v4877 = vadd.f32 %v4788, %v4876
        %v4878 = vpop.f32.mrf.mxu0
        %v4879 = vadd.f32 %v4790, %v4878
        %4880 = vmatmul.bf16.gmra.mxu0 %v4518
        %v4881 = vpop.f32.mrf.mxu0
        %v4882 = vadd.f32 %v4793, %v4881
        %v4883 = vpop.f32.mrf.mxu0
        %v4884 = vadd.f32 %v4795, %v4883
        %4885 = vmatmul.bf16.gmra.mxu0 %v4520
        %v4886 = vpop.f32.mrf.mxu0
        %v4887 = vadd.f32 %v4798, %v4886
        %v4888 = vpop.f32.mrf.mxu0
        %v4889 = vadd.f32 %v4800, %v4888
        %4890 = vmatmul.bf16.gmra.mxu0 %v4522
        %v4891 = vpop.f32.mrf.mxu0
        %v4892 = vadd.f32 %v4803, %v4891
        %v4893 = vpop.f32.mrf.mxu0
        %v4894 = vadd.f32 %v4805, %v4893
        %4895 = vmatmul.bf16.gmra.mxu0 %v4524
        %v4896 = vpop.f32.mrf.mxu0
        %v4897 = vadd.f32 %v4808, %v4896
        %v4898 = vpop.f32.mrf.mxu0
        %v4899 = vadd.f32 %v4810, %v4898
        %4900 = vmatmul.bf16.gmra.mxu0 %v4526
        %v4901 = vpop.f32.mrf.mxu0
        %v4902 = vadd.f32 %v4813, %v4901
        %v4903 = vpop.f32.mrf.mxu0
        %v4904 = vadd.f32 %v4815, %v4903
        %4905 = vmatmul.bf16.gmra.mxu0 %v4528
        %v4906 = vpop.f32.mrf.mxu0
        %v4907 = vadd.f32 %v4818, %v4906
        %v4908 = vpop.f32.mrf.mxu0
        %v4909 = vadd.f32 %v4820, %v4908
        %4910 = vmatmul.bf16.gmra.mxu0 %v4530
        %v4911 = vpop.f32.mrf.mxu0
        %v4912 = vadd.f32 %v4823, %v4911
        %v4913 = vpop.f32.mrf.mxu0
        %v4914 = vadd.f32 %v4825, %v4913
        %4915 = vmatmul.bf16.gmra.mxu0 %v4532
        %v4916 = vpop.f32.mrf.mxu0
        %v4917 = vadd.f32 %v4828, %v4916
        %v4918 = vpop.f32.mrf.mxu0
        %v4919 = vadd.f32 %v4830, %v4918
        %4920 = vdwg.mxu0
        %v4921 = vadd.f32 %v4083, %v4664
        %v4922 = vadd.f32 %v4084, %v4842
        %v4923 = vadd.f32 %v4085, %v4666
        %v4924 = vadd.f32 %v4086, %v4844
        %v4925 = vadd.f32 %v4087, %v4669
        %v4926 = vadd.f32 %v4088, %v4847
        %v4927 = vadd.f32 %v4089, %v4671
        %v4928 = vadd.f32 %v4090, %v4849
        %v4929 = vadd.f32 %v4091, %v4674
        %v4930 = vadd.f32 %v4092, %v4852
        %v4931 = vadd.f32 %v4093, %v4676
        %v4932 = vadd.f32 %v4094, %v4854
        %v4933 = vadd.f32 %v4095, %v4679
        %v4934 = vadd.f32 %v4096, %v4857
        %v4935 = vadd.f32 %v4097, %v4681
        %v4936 = vadd.f32 %v4098, %v4859
        %v4937 = vadd.f32 %v4099, %v4684
        %v4938 = vadd.f32 %v4100, %v4862
        %v4939 = vadd.f32 %v4101, %v4686
        %v4940 = vadd.f32 %v4102, %v4864
        %v4941 = vadd.f32 %v4103, %v4689
        %v4942 = vadd.f32 %v4104, %v4867
        %v4943 = vadd.f32 %v4105, %v4691
        %v4944 = vadd.f32 %v4106, %v4869
        %v4945 = vadd.f32 %v4107, %v4694
        %v4946 = vadd.f32 %v4108, %v4872
        %v4947 = vadd.f32 %v4109, %v4696
        %v4948 = vadd.f32 %v4110, %v4874
        %v4949 = vadd.f32 %v4111, %v4699
        %v4950 = vadd.f32 %v4112, %v4877
        %v4951 = vadd.f32 %v4113, %v4701
        %v4952 = vadd.f32 %v4114, %v4879
        %v4953 = vadd.f32 %v4115, %v4704
        %v4954 = vadd.f32 %v4116, %v4882
        %v4955 = vadd.f32 %v4117, %v4706
        %v4956 = vadd.f32 %v4118, %v4884
        %v4957 = vadd.f32 %v4119, %v4709
        %v4958 = vadd.f32 %v4120, %v4887
        %v4959 = vadd.f32 %v4121, %v4711
        %v4960 = vadd.f32 %v4122, %v4889
        %v4961 = vadd.f32 %v4123, %v4714
        %v4962 = vadd.f32 %v4124, %v4892
        %v4963 = vadd.f32 %v4125, %v4716
        %v4964 = vadd.f32 %v4126, %v4894
        %v4965 = vadd.f32 %v4127, %v4719
        %v4966 = vadd.f32 %v4128, %v4897
        %v4967 = vadd.f32 %v4129, %v4721
        %v4968 = vadd.f32 %v4130, %v4899
        %v4969 = vadd.f32 %v4131, %v4724
        %v4970 = vadd.f32 %v4132, %v4902
        %v4971 = vadd.f32 %v4133, %v4726
        %v4972 = vadd.f32 %v4134, %v4904
        %v4973 = vadd.f32 %v4135, %v4729
        %v4974 = vadd.f32 %v4136, %v4907
        %v4975 = vadd.f32 %v4137, %v4731
        %v4976 = vadd.f32 %v4138, %v4909
        %v4977 = vadd.f32 %v4139, %v4734
        %v4978 = vadd.f32 %v4140, %v4912
        %v4979 = vadd.f32 %v4141, %v4736
        %v4980 = vadd.f32 %v4142, %v4914
        %v4981 = vadd.f32 %v4143, %v4739
        %v4982 = vadd.f32 %v4144, %v4917
        %v4983 = vadd.f32 %v4145, %v4741
        %v4984 = vadd.f32 %v4146, %v4919
        %v4985 = vmul.f32 %v4921, 0.01
        %v4986 = vmul.f32 %v4922, 0.01
        %v4987 = vmul.f32 %v4923, 0.01
        %v4988 = vmul.f32 %v4924, 0.01
        %v4989 = vmul.f32 %v4925, 0.01
        %v4990 = vmul.f32 %v4926, 0.01
        %v4991 = vmul.f32 %v4927, 0.01
        %v4992 = vmul.f32 %v4928, 0.01
        %v4993 = vmul.f32 %v4929, 0.01
        %v4994 = vmul.f32 %v4930, 0.01
        %v4995 = vmul.f32 %v4931, 0.01
        %v4996 = vmul.f32 %v4932, 0.01
        %v4997 = vmul.f32 %v4933, 0.01
        %v4998 = vmul.f32 %v4934, 0.01
        %v4999 = vmul.f32 %v4935, 0.01
        %v5000 = vmul.f32 %v4936, 0.01
        %v5001 = vmul.f32 %v4937, 0.01
        %v5002 = vmul.f32 %v4938, 0.01
        %v5003 = vmul.f32 %v4939, 0.01
        %v5004 = vmul.f32 %v4940, 0.01
        %v5005 = vmul.f32 %v4941, 0.01
        %v5006 = vmul.f32 %v4942, 0.01
        %v5007 = vmul.f32 %v4943, 0.01
        %v5008 = vmul.f32 %v4944, 0.01
        %v5009 = vmul.f32 %v4945, 0.01
        %v5010 = vmul.f32 %v4946, 0.01
        %v5011 = vmul.f32 %v4947, 0.01
        %v5012 = vmul.f32 %v4948, 0.01
        %v5013 = vmul.f32 %v4949, 0.01
        %v5014 = vmul.f32 %v4950, 0.01
        %v5015 = vmul.f32 %v4951, 0.01
        %v5016 = vmul.f32 %v4952, 0.01
        %v5017 = vmul.f32 %v4953, 0.01
        %v5018 = vmul.f32 %v4954, 0.01
        %v5019 = vmul.f32 %v4955, 0.01
        %v5020 = vmul.f32 %v4956, 0.01
        %v5021 = vmul.f32 %v4957, 0.01
        %v5022 = vmul.f32 %v4958, 0.01
        %v5023 = vmul.f32 %v4959, 0.01
        %v5024 = vmul.f32 %v4960, 0.01
        %v5025 = vmul.f32 %v4961, 0.01
        %v5026 = vmul.f32 %v4962, 0.01
        %v5027 = vmul.f32 %v4963, 0.01
        %v5028 = vmul.f32 %v4964, 0.01
        %v5029 = vmul.f32 %v4965, 0.01
        %v5030 = vmul.f32 %v4966, 0.01
        %v5031 = vmul.f32 %v4967, 0.01
        %v5032 = vmul.f32 %v4968, 0.01
        %v5033 = vmul.f32 %v4969, 0.01
        %v5034 = vmul.f32 %v4970, 0.01
        %v5035 = vmul.f32 %v4971, 0.01
        %v5036 = vmul.f32 %v4972, 0.01
        %v5037 = vmul.f32 %v4973, 0.01
        %v5038 = vmul.f32 %v4974, 0.01
        %v5039 = vmul.f32 %v4975, 0.01
        %v5040 = vmul.f32 %v4976, 0.01
        %v5041 = vmul.f32 %v4977, 0.01
        %v5042 = vmul.f32 %v4978, 0.01
        %v5043 = vmul.f32 %v4979, 0.01
        %v5044 = vmul.f32 %v4980, 0.01
        %v5045 = vmul.f32 %v4981, 0.01
        %v5046 = vmul.f32 %v4982, 0.01
        %v5047 = vmul.f32 %v4983, 0.01
        %v5048 = vmul.f32 %v4984, 0.01
        %v5049 = vmax.f32 %v4921, %v4985
        %v5050 = vmax.f32 %v4922, %v4986
        %v5051 = vmax.f32 %v4923, %v4987
        %v5052 = vmax.f32 %v4924, %v4988
        %v5053 = vmax.f32 %v4925, %v4989
        %v5054 = vmax.f32 %v4926, %v4990
        %v5055 = vmax.f32 %v4927, %v4991
        %v5056 = vmax.f32 %v4928, %v4992
        %v5057 = vmax.f32 %v4929, %v4993
        %v5058 = vmax.f32 %v4930, %v4994
        %v5059 = vmax.f32 %v4931, %v4995
        %v5060 = vmax.f32 %v4932, %v4996
        %v5061 = vmax.f32 %v4933, %v4997
        %v5062 = vmax.f32 %v4934, %v4998
        %v5063 = vmax.f32 %v4935, %v4999
        %v5064 = vmax.f32 %v4936, %v5000
        %v5065 = vmax.f32 %v4937, %v5001
        %v5066 = vmax.f32 %v4938, %v5002
        %v5067 = vmax.f32 %v4939, %v5003
        %v5068 = vmax.f32 %v4940, %v5004
        %v5069 = vmax.f32 %v4941, %v5005
        %v5070 = vmax.f32 %v4942, %v5006
        %v5071 = vmax.f32 %v4943, %v5007
        %v5072 = vmax.f32 %v4944, %v5008
        %v5073 = vmax.f32 %v4945, %v5009
        %v5074 = vmax.f32 %v4946, %v5010
        %v5075 = vmax.f32 %v4947, %v5011
        %v5076 = vmax.f32 %v4948, %v5012
        %v5077 = vmax.f32 %v4949, %v5013
        %v5078 = vmax.f32 %v4950, %v5014
        %v5079 = vmax.f32 %v4951, %v5015
        %v5080 = vmax.f32 %v4952, %v5016
        %v5081 = vmax.f32 %v4953, %v5017
        %v5082 = vmax.f32 %v4954, %v5018
        %v5083 = vmax.f32 %v4955, %v5019
        %v5084 = vmax.f32 %v4956, %v5020
        %v5085 = vmax.f32 %v4957, %v5021
        %v5086 = vmax.f32 %v4958, %v5022
        %v5087 = vmax.f32 %v4959, %v5023
        %v5088 = vmax.f32 %v4960, %v5024
        %v5089 = vmax.f32 %v4961, %v5025
        %v5090 = vmax.f32 %v4962, %v5026
        %v5091 = vmax.f32 %v4963, %v5027
        %v5092 = vmax.f32 %v4964, %v5028
        %v5093 = vmax.f32 %v4965, %v5029
        %v5094 = vmax.f32 %v4966, %v5030
        %v5095 = vmax.f32 %v4967, %v5031
        %v5096 = vmax.f32 %v4968, %v5032
        %v5097 = vmax.f32 %v4969, %v5033
        %v5098 = vmax.f32 %v4970, %v5034
        %v5099 = vmax.f32 %v4971, %v5035
        %v5100 = vmax.f32 %v4972, %v5036
        %v5101 = vmax.f32 %v4973, %v5037
        %v5102 = vmax.f32 %v4974, %v5038
        %v5103 = vmax.f32 %v4975, %v5039
        %v5104 = vmax.f32 %v4976, %v5040
        %v5105 = vmax.f32 %v4977, %v5041
        %v5106 = vmax.f32 %v4978, %v5042
        %v5107 = vmax.f32 %v4979, %v5043
        %v5108 = vmax.f32 %v4980, %v5044
        %v5109 = vmax.f32 %v4981, %v5045
        %v5110 = vmax.f32 %v4982, %v5046
        %v5111 = vmax.f32 %v4983, %v5047
        %v5112 = vmax.f32 %v4984, %v5048
        %v5113 = vadd.f32 %v1187, %v5049
        %v5114 = vadd.f32 %v1188, %v5050
        %v5115 = vadd.f32 %v1189, %v5051
        %v5116 = vadd.f32 %v1190, %v5052
        %v5117 = vadd.f32 %v1191, %v5053
        %v5118 = vadd.f32 %v1192, %v5054
        %v5119 = vadd.f32 %v1193, %v5055
        %v5120 = vadd.f32 %v1194, %v5056
        %v5121 = vadd.f32 %v1195, %v5057
        %v5122 = vadd.f32 %v1196, %v5058
        %v5123 = vadd.f32 %v1197, %v5059
        %v5124 = vadd.f32 %v1198, %v5060
        %v5125 = vadd.f32 %v1199, %v5061
        %v5126 = vadd.f32 %v1200, %v5062
        %v5127 = vadd.f32 %v1201, %v5063
        %v5128 = vadd.f32 %v1202, %v5064
        %v5129 = vadd.f32 %v1203, %v5065
        %v5130 = vadd.f32 %v1204, %v5066
        %v5131 = vadd.f32 %v1205, %v5067
        %v5132 = vadd.f32 %v1206, %v5068
        %v5133 = vadd.f32 %v1207, %v5069
        %v5134 = vadd.f32 %v1208, %v5070
        %v5135 = vadd.f32 %v1209, %v5071
        %v5136 = vadd.f32 %v1210, %v5072
        %v5137 = vadd.f32 %v1211, %v5073
        %v5138 = vadd.f32 %v1212, %v5074
        %v5139 = vadd.f32 %v1213, %v5075
        %v5140 = vadd.f32 %v1214, %v5076
        %v5141 = vadd.f32 %v1215, %v5077
        %v5142 = vadd.f32 %v1216, %v5078
        %v5143 = vadd.f32 %v1217, %v5079
        %v5144 = vadd.f32 %v1218, %v5080
        %v5145 = vadd.f32 %v1219, %v5081
        %v5146 = vadd.f32 %v1220, %v5082
        %v5147 = vadd.f32 %v1221, %v5083
        %v5148 = vadd.f32 %v1222, %v5084
        %v5149 = vadd.f32 %v1223, %v5085
        %v5150 = vadd.f32 %v1224, %v5086
        %v5151 = vadd.f32 %v1225, %v5087
        %v5152 = vadd.f32 %v1226, %v5088
        %v5153 = vadd.f32 %v1227, %v5089
        %v5154 = vadd.f32 %v1228, %v5090
        %v5155 = vadd.f32 %v1229, %v5091
        %v5156 = vadd.f32 %v1230, %v5092
        %v5157 = vadd.f32 %v1231, %v5093
        %v5158 = vadd.f32 %v1232, %v5094
        %v5159 = vadd.f32 %v1233, %v5095
        %v5160 = vadd.f32 %v1234, %v5096
        %v5161 = vadd.f32 %v1235, %v5097
        %v5162 = vadd.f32 %v1236, %v5098
        %v5163 = vadd.f32 %v1237, %v5099
        %v5164 = vadd.f32 %v1238, %v5100
        %v5165 = vadd.f32 %v1239, %v5101
        %v5166 = vadd.f32 %v1240, %v5102
        %v5167 = vadd.f32 %v1241, %v5103
        %v5168 = vadd.f32 %v1242, %v5104
        %v5169 = vadd.f32 %v1243, %v5105
        %v5170 = vadd.f32 %v1244, %v5106
        %v5171 = vadd.f32 %v1245, %v5107
        %v5172 = vadd.f32 %v1246, %v5108
        %v5173 = vadd.f32 %v1247, %v5109
        %v5174 = vadd.f32 %v1248, %v5110
        %v5175 = vadd.f32 %v1249, %v5111
        %v5176 = vadd.f32 %v1250, %v5112
        %v5177 = vld [vmem:[%s7] sm:$0xff]
        %v5178 = vld [vmem:[%s7 + $0x8] sm:$0xff]
        %v5179 = vld [vmem:[%s7 + $0x10] sm:$0xff]
        %v5180 = vld [vmem:[%s7 + $0x18] sm:$0xff]
        %v5181 = vld [vmem:[%s7 + $0x20] sm:$0xff]
        %v5182 = vld [vmem:[%s7 + $0x28] sm:$0xff]
        %v5183 = vld [vmem:[%s7 + $0x30] sm:$0xff]
        %v5184 = vld [vmem:[%s7 + $0x38] sm:$0xff]
        %v5185 = vpack.c.bf16 %v5115, %v5113
        %v5186 = vpack.c.bf16 %v5116, %v5114
        %v5187 = vpack.c.bf16 %v5119, %v5117
        %v5188 = vpack.c.bf16 %v5120, %v5118
        %v5189 = vpack.c.bf16 %v5123, %v5121
        %v5190 = vpack.c.bf16 %v5124, %v5122
        %v5191 = vpack.c.bf16 %v5127, %v5125
        %v5192 = vpack.c.bf16 %v5128, %v5126
        %v5193 = vpack.c.bf16 %v5131, %v5129
        %v5194 = vpack.c.bf16 %v5132, %v5130
        %v5195 = vpack.c.bf16 %v5135, %v5133
        %v5196 = vpack.c.bf16 %v5136, %v5134
        %v5197 = vpack.c.bf16 %v5139, %v5137
        %v5198 = vpack.c.bf16 %v5140, %v5138
        %v5199 = vpack.c.bf16 %v5143, %v5141
        %v5200 = vpack.c.bf16 %v5144, %v5142
        %v5201 = vpack.c.bf16 %v5147, %v5145
        %v5202 = vpack.c.bf16 %v5148, %v5146
        %v5203 = vpack.c.bf16 %v5151, %v5149
        %v5204 = vpack.c.bf16 %v5152, %v5150
        %v5205 = vpack.c.bf16 %v5155, %v5153
        %v5206 = vpack.c.bf16 %v5156, %v5154
        %v5207 = vpack.c.bf16 %v5159, %v5157
        %v5208 = vpack.c.bf16 %v5160, %v5158
        %v5209 = vpack.c.bf16 %v5163, %v5161
        %v5210 = vpack.c.bf16 %v5164, %v5162
        %v5211 = vpack.c.bf16 %v5167, %v5165
        %v5212 = vpack.c.bf16 %v5168, %v5166
        %v5213 = vpack.c.bf16 %v5171, %v5169
        %v5214 = vpack.c.bf16 %v5172, %v5170
        %v5215 = vpack.c.bf16 %v5175, %v5173
        %v5216 = vpack.c.bf16 %v5176, %v5174
        %v5217 = vld [vmem:[%s8] sm:$0xff]
        %v5218 = vld [vmem:[%s8 + $0x8] sm:$0xff]
        %v5219 = vld [vmem:[%s8 + $0x10] sm:$0xff]
        %v5220 = vld [vmem:[%s8 + $0x18] sm:$0xff]
        %v5221 = vld [vmem:[%s8 + $0x20] sm:$0xff]
        %v5222 = vld [vmem:[%s8 + $0x28] sm:$0xff]
        %v5223 = vld [vmem:[%s8 + $0x30] sm:$0xff]
        %v5224 = vld [vmem:[%s8 + $0x38] sm:$0xff]
        %5226 = vset.pattern.permute.xlu0 0
        %5227 = vperm.xlu0 %5226, %v5217
        %v5228 = vpop.permute.xlu0 %5227
        %5231 = vset.pattern.permute.xlu0 0
        %5232 = vperm.xlu0 %5231, %v5218
        %v5233 = vpop.permute.xlu0 %5232
        %5236 = vset.pattern.permute.xlu0 0
        %5237 = vperm.xlu0 %5236, %v5219
        %v5238 = vpop.permute.xlu0 %5237
        %5241 = vset.pattern.permute.xlu0 0
        %5242 = vperm.xlu0 %5241, %v5220
        %v5243 = vpop.permute.xlu0 %5242
        %5246 = vset.pattern.permute.xlu0 0
        %5247 = vperm.xlu0 %5246, %v5221
        %v5248 = vpop.permute.xlu0 %5247
        %5251 = vset.pattern.permute.xlu0 0
        %5252 = vperm.xlu0 %5251, %v5222
        %v5253 = vpop.permute.xlu0 %5252
        %5256 = vset.pattern.permute.xlu0 0
        %5257 = vperm.xlu0 %5256, %v5223
        %v5258 = vpop.permute.xlu0 %5257
        %5261 = vset.pattern.permute.xlu0 0
        %5262 = vperm.xlu0 %5261, %v5224
        %v5263 = vpop.permute.xlu0 %5262
        %v5273 = vunpack.c.l.b16 %v5177
        %v5274 = vunpack.c.h.b16 %v5177
        %v5275 = vunpack.c.l.b16 %v5178
        %v5276 = vunpack.c.h.b16 %v5178
        %v5277 = vunpack.c.l.b16 %v5179
        %v5278 = vunpack.c.h.b16 %v5179
        %v5279 = vunpack.c.l.b16 %v5180
        %v5280 = vunpack.c.h.b16 %v5180
        %v5281 = vunpack.c.l.b16 %v5181
        %v5282 = vunpack.c.h.b16 %v5181
        %v5283 = vunpack.c.l.b16 %v5182
        %v5284 = vunpack.c.h.b16 %v5182
        %v5285 = vunpack.c.l.b16 %v5183
        %v5286 = vunpack.c.h.b16 %v5183
        %v5287 = vunpack.c.l.b16 %v5184
        %v5288 = vunpack.c.h.b16 %v5184
        %v5289 = vpack.c.b16 %v5275, %v5273
        %v5290 = vpack.c.b16 %v5276, %v5274
        %v5291 = vpack.c.b16 %v5279, %v5277
        %v5292 = vpack.c.b16 %v5280, %v5278
        %v5293 = vpack.c.b16 %v5283, %v5281
        %v5294 = vpack.c.b16 %v5284, %v5282
        %v5295 = vpack.c.b16 %v5287, %v5285
        %v5296 = vpack.c.b16 %v5288, %v5286
        %5305 = vmatpush.bf16.msra.mxu0 %v5199
        %5306 = vmatpush.bf16.msra.mxu0 %v5197
        %5307 = vmatpush.bf16.msra.mxu0 %v5195
        %5308 = vmatpush.bf16.msra.mxu0 %v5193
        %5309 = vmatpush.bf16.msra.mxu0 %v5191
        %5310 = vmatpush.bf16.msra.mxu0 %v5189
        %5311 = vmatpush.bf16.msra.mxu0 %v5187
        %5312 = vmatpush.bf16.msra.mxu0 %v5185
        %5313 = vmatmul.bf16.gmra.mxu0 %v5289
        %v5314 = vpop.f32.mrf.mxu0
        %v5315 = vadd.f32 %v5228, %v5314
        %v5316 = vpop.f32.mrf.mxu0
        %v5317 = vadd.f32 %v5233, %v5316
        %5318 = vmatmul.bf16.gmra.mxu0 %v5291
        %v5319 = vpop.f32.mrf.mxu0
        %v5320 = vadd.f32 %v5238, %v5319
        %v5321 = vpop.f32.mrf.mxu0
        %v5322 = vadd.f32 %v5243, %v5321
        %5323 = vmatmul.bf16.gmra.mxu0 %v5293
        %v5324 = vpop.f32.mrf.mxu0
        %v5325 = vadd.f32 %v5248, %v5324
        %v5326 = vpop.f32.mrf.mxu0
        %v5327 = vadd.f32 %v5253, %v5326
        %5328 = vmatmul.bf16.gmra.mxu0 %v5295
        %v5329 = vpop.f32.mrf.mxu0
        %v5330 = vadd.f32 %v5258, %v5329
        %v5331 = vpop.f32.mrf.mxu0
        %v5332 = vadd.f32 %v5263, %v5331
        %5333 = vdwg.mxu0
        %5334 = vmatpush.bf16.msra.mxu0 %v5215
        %5335 = vmatpush.bf16.msra.mxu0 %v5213
        %5336 = vmatpush.bf16.msra.mxu0 %v5211
        %5337 = vmatpush.bf16.msra.mxu0 %v5209
        %5338 = vmatpush.bf16.msra.mxu0 %v5207
        %5339 = vmatpush.bf16.msra.mxu0 %v5205
        %5340 = vmatpush.bf16.msra.mxu0 %v5203
        %5341 = vmatpush.bf16.msra.mxu0 %v5201
        %5342 = vmatmul.bf16.gmra.mxu0 %v5290
        %v5343 = vpop.f32.mrf.mxu0
        %v5344 = vadd.f32 %v5315, %v5343
        %v5345 = vpop.f32.mrf.mxu0
        %v5346 = vadd.f32 %v5317, %v5345
        %5347 = vmatmul.bf16.gmra.mxu0 %v5292
        %v5348 = vpop.f32.mrf.mxu0
        %v5349 = vadd.f32 %v5320, %v5348
        %v5350 = vpop.f32.mrf.mxu0
        %v5351 = vadd.f32 %v5322, %v5350
        %5352 = vmatmul.bf16.gmra.mxu0 %v5294
        %v5353 = vpop.f32.mrf.mxu0
        %v5354 = vadd.f32 %v5325, %v5353
        %v5355 = vpop.f32.mrf.mxu0
        %v5356 = vadd.f32 %v5327, %v5355
        %5357 = vmatmul.bf16.gmra.mxu0 %v5296
        %v5358 = vpop.f32.mrf.mxu0
        %v5359 = vadd.f32 %v5330, %v5358
        %v5360 = vpop.f32.mrf.mxu0
        %v5361 = vadd.f32 %v5332, %v5360
        %5362 = vdwg.mxu0
        %5363 = vmatpush.bf16.msra.mxu0 %v5200
        %5364 = vmatpush.bf16.msra.mxu0 %v5198
        %5365 = vmatpush.bf16.msra.mxu0 %v5196
        %5366 = vmatpush.bf16.msra.mxu0 %v5194
        %5367 = vmatpush.bf16.msra.mxu0 %v5192
        %5368 = vmatpush.bf16.msra.mxu0 %v5190
        %5369 = vmatpush.bf16.msra.mxu0 %v5188
        %5370 = vmatpush.bf16.msra.mxu0 %v5186
        %5371 = vmatmul.bf16.gmra.mxu0 %v5289
        %v5372 = vpop.f32.mrf.mxu0
        %v5373 = vadd.f32 %v5228, %v5372
        %v5374 = vpop.f32.mrf.mxu0
        %v5375 = vadd.f32 %v5233, %v5374
        %5376 = vmatmul.bf16.gmra.mxu0 %v5291
        %v5377 = vpop.f32.mrf.mxu0
        %v5378 = vadd.f32 %v5238, %v5377
        %v5379 = vpop.f32.mrf.mxu0
        %v5380 = vadd.f32 %v5243, %v5379
        %5381 = vmatmul.bf16.gmra.mxu0 %v5293
        %v5382 = vpop.f32.mrf.mxu0
        %v5383 = vadd.f32 %v5248, %v5382
        %v5384 = vpop.f32.mrf.mxu0
        %v5385 = vadd.f32 %v5253, %v5384
        %5386 = vmatmul.bf16.gmra.mxu0 %v5295
        %v5387 = vpop.f32.mrf.mxu0
        %v5388 = vadd.f32 %v5258, %v5387
        %v5389 = vpop.f32.mrf.mxu0
        %v5390 = vadd.f32 %v5263, %v5389
        %5391 = vdwg.mxu0
        %5392 = vmatpush.bf16.msra.mxu0 %v5216
        %5393 = vmatpush.bf16.msra.mxu0 %v5214
        %5394 = vmatpush.bf16.msra.mxu0 %v5212
        %5395 = vmatpush.bf16.msra.mxu0 %v5210
        %5396 = vmatpush.bf16.msra.mxu0 %v5208
        %5397 = vmatpush.bf16.msra.mxu0 %v5206
        %5398 = vmatpush.bf16.msra.mxu0 %v5204
        %5399 = vmatpush.bf16.msra.mxu0 %v5202
        %5400 = vmatmul.bf16.gmra.mxu0 %v5290
        %v5401 = vpop.f32.mrf.mxu0
        %v5402 = vadd.f32 %v5373, %v5401
        %v5403 = vpop.f32.mrf.mxu0
        %v5404 = vadd.f32 %v5375, %v5403
        %5405 = vmatmul.bf16.gmra.mxu0 %v5292
        %v5406 = vpop.f32.mrf.mxu0
        %v5407 = vadd.f32 %v5378, %v5406
        %v5408 = vpop.f32.mrf.mxu0
        %v5409 = vadd.f32 %v5380, %v5408
        %5410 = vmatmul.bf16.gmra.mxu0 %v5294
        %v5411 = vpop.f32.mrf.mxu0
        %v5412 = vadd.f32 %v5383, %v5411
        %v5413 = vpop.f32.mrf.mxu0
        %v5414 = vadd.f32 %v5385, %v5413
        %5415 = vmatmul.bf16.gmra.mxu0 %v5296
        %v5416 = vpop.f32.mrf.mxu0
        %v5417 = vadd.f32 %v5388, %v5416
        %v5418 = vpop.f32.mrf.mxu0
        %v5419 = vadd.f32 %v5390, %v5418
        %5420 = vdwg.mxu0
        %v5421 = vmul.f32 %v5344, 0.01
        %v5422 = vmul.f32 %v5402, 0.01
        %v5423 = vmul.f32 %v5346, 0.01
        %v5424 = vmul.f32 %v5404, 0.01
        %v5425 = vmul.f32 %v5349, 0.01
        %v5426 = vmul.f32 %v5407, 0.01
        %v5427 = vmul.f32 %v5351, 0.01
        %v5428 = vmul.f32 %v5409, 0.01
        %v5429 = vmul.f32 %v5354, 0.01
        %v5430 = vmul.f32 %v5412, 0.01
        %v5431 = vmul.f32 %v5356, 0.01
        %v5432 = vmul.f32 %v5414, 0.01
        %v5433 = vmul.f32 %v5359, 0.01
        %v5434 = vmul.f32 %v5417, 0.01
        %v5435 = vmul.f32 %v5361, 0.01
        %v5436 = vmul.f32 %v5419, 0.01
        %v5437 = vmax.f32 %v5344, %v5421
        %v5438 = vmax.f32 %v5402, %v5422
        %v5439 = vmax.f32 %v5346, %v5423
        %v5440 = vmax.f32 %v5404, %v5424
        %v5441 = vmax.f32 %v5349, %v5425
        %v5442 = vmax.f32 %v5407, %v5426
        %v5443 = vmax.f32 %v5351, %v5427
        %v5444 = vmax.f32 %v5409, %v5428
        %v5445 = vmax.f32 %v5354, %v5429
        %v5446 = vmax.f32 %v5412, %v5430
        %v5447 = vmax.f32 %v5356, %v5431
        %v5448 = vmax.f32 %v5414, %v5432
        %v5449 = vmax.f32 %v5359, %v5433
        %v5450 = vmax.f32 %v5417, %v5434
        %v5451 = vmax.f32 %v5361, %v5435
        %v5452 = vmax.f32 %v5419, %v5436
        %v5453 = vld [vmem:[%s9] sm:$0xff]
        %v5454 = vld [vmem:[%s9 + $0x8] sm:$0xff]
        %v5455 = vld [vmem:[%s9 + $0x10] sm:$0xff]
        %v5456 = vld [vmem:[%s9 + $0x18] sm:$0xff]
        %v5457 = vld [vmem:[%s9 + $0x20] sm:$0xff]
        %v5458 = vld [vmem:[%s9 + $0x28] sm:$0xff]
        %v5459 = vld [vmem:[%s9 + $0x30] sm:$0xff]
        %v5460 = vld [vmem:[%s9 + $0x38] sm:$0xff]
        %5462 = vset.pattern.permute.xlu0 0
        %5463 = vperm.xlu0 %5462, %v5453
        %v5464 = vpop.permute.xlu0 %5463
        %5467 = vset.pattern.permute.xlu0 0
        %5468 = vperm.xlu0 %5467, %v5454
        %v5469 = vpop.permute.xlu0 %5468
        %5472 = vset.pattern.permute.xlu0 0
        %5473 = vperm.xlu0 %5472, %v5455
        %v5474 = vpop.permute.xlu0 %5473
        %5477 = vset.pattern.permute.xlu0 0
        %5478 = vperm.xlu0 %5477, %v5456
        %v5479 = vpop.permute.xlu0 %5478
        %5482 = vset.pattern.permute.xlu0 0
        %5483 = vperm.xlu0 %5482, %v5457
        %v5484 = vpop.permute.xlu0 %5483
        %5487 = vset.pattern.permute.xlu0 0
        %5488 = vperm.xlu0 %5487, %v5458
        %v5489 = vpop.permute.xlu0 %5488
        %5492 = vset.pattern.permute.xlu0 0
        %5493 = vperm.xlu0 %5492, %v5459
        %v5494 = vpop.permute.xlu0 %5493
        %5497 = vset.pattern.permute.xlu0 0
        %5498 = vperm.xlu0 %5497, %v5460
        %v5499 = vpop.permute.xlu0 %5498
        %v5501 = vmul.f32 %v5437, %v5464
        %v5502 = vmul.f32 %v5438, %v5464
        %v5503 = vmul.f32 %v5439, %v5469
        %v5504 = vmul.f32 %v5440, %v5469
        %v5505 = vmul.f32 %v5441, %v5474
        %v5506 = vmul.f32 %v5442, %v5474
        %v5507 = vmul.f32 %v5443, %v5479
        %v5508 = vmul.f32 %v5444, %v5479
        %v5509 = vmul.f32 %v5445, %v5484
        %v5510 = vmul.f32 %v5446, %v5484
        %v5511 = vmul.f32 %v5447, %v5489
        %v5512 = vmul.f32 %v5448, %v5489
        %v5513 = vmul.f32 %v5449, %v5494
        %v5514 = vmul.f32 %v5450, %v5494
        %v5515 = vmul.f32 %v5451, %v5499
        %v5516 = vmul.f32 %v5452, %v5499
        %v5517 = vadd.f32 %v5501, %v5503
        %v5518 = vadd.f32 %v5517, %v5505
        %v5519 = vadd.f32 %v5518, %v5507
        %v5520 = vadd.f32 %v5519, %v5509
        %v5521 = vadd.f32 %v5520, %v5511
        %v5522 = vadd.f32 %v5521, %v5513
        %v5523 = vadd.f32 %v5522, %v5515
        %v5524 = vrot.slane %v5523, 4
        %v5525 = vadd.f32 %v5523, %v5524
        %v5526 = vrot.slane %v5525, 2
        %v5527 = vadd.f32 %v5525, %v5526
        %v5528 = vrot.slane %v5527, 1
        %v5529 = vadd.f32 %v5527, %v5528
        %v5530 = vadd.f32 %v5502, %v5504
        %v5531 = vadd.f32 %v5530, %v5506
        %v5532 = vadd.f32 %v5531, %v5508
        %v5533 = vadd.f32 %v5532, %v5510
        %v5534 = vadd.f32 %v5533, %v5512
        %v5535 = vadd.f32 %v5534, %v5514
        %v5536 = vadd.f32 %v5535, %v5516
        %v5537 = vrot.slane %v5536, 4
        %v5538 = vadd.f32 %v5536, %v5537
        %v5539 = vrot.slane %v5538, 2
        %v5540 = vadd.f32 %v5538, %v5539
        %v5541 = vrot.slane %v5540, 1
        %v5542 = vadd.f32 %v5540, %v5541
        %v5543 = vld [vmem:[#allocation2] sm:$0x1]
        %5545 = vset.pattern.permute.xlu0 0
        %5546 = vperm.xlu0 %5545, %v5543
        %v5547 = vpop.permute.xlu0 %5546
        %v5549 = vperm.slane %v5547, 0
        %v5550 = vadd.f32 %v5529, %v5549
        %v5551 = vadd.f32 %v5542, %v5549
        %v5552 = vmul.f32 %v5550, 0.01
        %v5553 = vmul.f32 %v5551, 0.01
        %v5554 = vmax.f32 %v5550, %v5552
        %v5555 = vmax.f32 %v5551, %v5553
        %v5558 = vrot.slane %v5555, 7
        %vm5559 = vcmask 1040384
        %v5560 = vsel %vm5559, %v5554, %v5558
        %v5562 = vlaneseq
        %vm5563 = vcmp.ge.s32.totalorder %v5562, 0
        %vm5564 = vcmp.lt.s32.totalorder %v5562, 256
        %vm5565 = vmand %vm5563, %vm5564
        %5566 = vst.msk [vmem:[%s382] sm:$0x3] %vm5565, %v5560
        %s5567 = sand.u32 %s271, 1
        %s5568 = scalar_lea.sflag [#allocation4], %s5567
        %s5569 = sand.u32 %s271, 1
        %s5570 = smul.addr %s5569, 2
        %s5571 = scalar_lea.vmem [#allocation3], %s5570
        // Predicated region
        $region65: #{tpu_custom_call.1} parent=63 // pred_check
          %p5572 = pneg %p281
        $region66: #{tpu_custom_call.1} parent=63 // pred_check_branch
          %5574 = sbr.rel (%p5572) target = $region68
        $region67: #{tpu_custom_call.1} parent=63 // pred_region
          %s5575 = smul.u32 2, %s27
          %5577 = vsyncadd %s5568, 0
          %s5578 = scalar_lea.hbm %s11, %s5575
          %s5580 = sshll.u32 %s5571, 4
          %s5581 = int_to_ptr.vmem [resolvable:$true] %s5580
          %s5582 = sshll.u32 %s5578, 4
          %s5583 = int_to_ptr.hbm [resolvable:$true] %s5582
          %5585 = dma.vmem_to_hbm [thread:$0]  %s5581, 32, %s5583, %s5568
        $region68: #{tpu_custom_call.1} parent=63 // pred_fallthru
          _
      $region64: #{tpu_custom_call.1} parent=5 // pred_fallthru
        _
      %p5586 = scmp.le.s32.totalorder 2, %s22
      // Predicated region
      $region69: #{tpu_custom_call.1} parent=5 // pred_check
        %p5587 = pneg %p5586
      $region70: #{tpu_custom_call.1} parent=5 // pred_check_branch
        %5589 = sbr.rel (%p5587) target = $region72
      $region71: #{tpu_custom_call.1} parent=5 // pred_region
        %s5590 = ssub.s32 %s22, 2
        // Predicated region
        $region73: #{tpu_custom_call.1} parent=71 // pred_check
          %p5591 = pneg %p287
        $region74: #{tpu_custom_call.1} parent=71 // pred_check_branch
          %5593 = sbr.rel (%p5591) target = $region76
        $region75: #{tpu_custom_call.1} parent=71 // pred_region
          %s5594 = sand.u32 %s272, 1
          %s5595 = scalar_lea.sflag [#allocation4], %s5594
          %s5596 = sand.u32 %s272, 1
          %s5597 = smul.addr %s5596, 2
          %s5598 = scalar_lea.vmem [#allocation3], %s5597
          %5600 = dma.done %s5595, 32
        $region76: #{tpu_custom_call.1} parent=71 // pred_fallthru
          _
      $region72: #{tpu_custom_call.1} parent=5 // pred_fallthru
        _
    $region6: #{tpu_custom_call.1} parent=1 // loop_footer
      %s26 = sadd.s32 1, %s22
    $region7: #{tpu_custom_call.1} parent=1 // loop_footer_branch
      %21 = sbr.rel target = $region3
    $region8: #{tpu_custom_call.1} parent=1 // loop_exit
      _
    %5601 = vsyncpa [#allocation4], 1
    %s5602 = scalar_lea.sflag [#allocation4], 1
    %5603 = vsyncpa %s5602, 1

</llo_original>
